<compile_context>
chip_gen: v5e
topology: v5e:2x2
jax: 0.10.0
libtpu: 0.0.40
codegen_flags: <defaults>
</compile_context>

<pallas_src>
import jax
import jax.numpy as jnp
from jax import lax
from jax.experimental import pallas as pl
from jax.experimental.pallas import tpu as pltpu

# Use a single fused im2col matmul while 9*C_in fits comfortably in one K block;
# above this, fall back to per-tap dots (K blocked at C_in per tap).
_IM2COL_MAX_K = 512


def _conv3x3_bn_relu(xpad, w_ref, scale, bias, H, W):
    """3x3 conv (halo already in `xpad`) + folded BN scale/bias + ReLU.

    xpad:   (H+2, W+2, C_in) f32 value
    w_ref:  (9*C_in, C_out) bf16 ref, rows ordered (ky, kx, ci) to match the taps below
    scale, bias: (C_out,) f32
    returns (H, W, C_out) f32
    """
    cin = xpad.shape[-1]
    cout = w_ref.shape[-1]
    taps = [xpad[ky:ky + H, kx:kx + W, :] for ky in range(3) for kx in range(3)]
    if w_ref.shape[0] <= _IM2COL_MAX_K:
        # im2col: one MXU matmul with K = 9*C_in instead of 9 matmuls with K = C_in.
        patches = jnp.concatenate(taps, axis=-1)            # (H, W, 9*C_in) f32
        acc = jnp.dot(patches.astype(w_ref.dtype), w_ref[...],
                      preferred_element_type=jnp.float32)    # (H, W, C_out) f32 acc
    else:
        # Large-channel fallback: K blocked per tap.
        acc = jnp.zeros((H, W, cout), jnp.float32)
        for t, tap in enumerate(taps):
            acc = acc + jnp.dot(tap.astype(w_ref.dtype),
                                w_ref[t * cin:(t + 1) * cin, :],
                                preferred_element_type=jnp.float32)
    # Folded BatchNorm (+ conv bias) and ReLU, in f32 (works on all TPU generations).
    return jnp.maximum(acc * scale + bias, 0.0)


def _zero_halo(ref):
    """Zero only the 1-pixel border of a padded (H+2, W+2, C) scratch."""
    Hp, Wp, C = ref.shape
    dt = ref.dtype
    ref[0:1, :, :] = jnp.zeros((1, Wp, C), dt)
    ref[Hp - 1:Hp, :, :] = jnp.zeros((1, Wp, C), dt)
    ref[:, 0:1, :] = jnp.zeros((Hp, 1, C), dt)
    ref[:, Wp - 1:Wp, :] = jnp.zeros((Hp, 1, C), dt)


def _double_conv_kernel(x_ref, w1_ref, s1_ref, b1_ref, w2_ref, s2_ref, b2_ref,
                        o_ref, xpad_ref, mid_ref):
    # x_ref:   (1, H, W, Cin)  unpadded bf16 input tile (one image)
    # w1_ref:  (9*Cin,  Cmid)  bf16 im2col weights; w2_ref: (9*Cmid, Cout)
    # s*_ref:  (1, C) folded BN scale; b*_ref: (1, C) folded BN+conv bias (f32)
    # o_ref:   (1, H, W, Cout) f32
    # xpad_ref:(H+2, W+2, Cin) f32 VMEM scratch (halo-padded input)
    # mid_ref: (H+2, W+2, Cmid) f32 VMEM scratch (halo-padded intermediate)
    _, H, W, _ = x_ref.shape

    # Zero only the halo borders (interior is fully overwritten each grid step).
    # Done per step (it is tiny) so correctness does not depend on which core ran
    # grid index 0 when the batch axis is sharded across TensorCores.
    _zero_halo(xpad_ref)
    _zero_halo(mid_ref)

    # Padded input: interior <- this image's tile (bf16 in HBM, expanded to f32 here).
    xpad_ref[1:1 + H, 1:1 + W, :] = x_ref[0].astype(xpad_ref.dtype)

    # conv1 + BN + ReLU (bf16 MXU operands, f32 accumulation / elementwise).
    y1 = _conv3x3_bn_relu(xpad_ref[...], w1_ref, s1_ref[0], b1_ref[0], H, W)
    mid_ref[1:1 + H, 1:1 + W, :] = y1

    # conv2 + BN + ReLU.
    y2 = _conv3x3_bn_relu(mid_ref[...], w2_ref, s2_ref[0], b2_ref[0], H, W)
    o_ref[0] = y2.astype(o_ref.dtype)


def _fold_bn(conv_bias, gamma, beta, running_mean, running_var, eps):
    scale = gamma / jnp.sqrt(running_var + eps)
    bias = (conv_bias - running_mean) * scale + beta
    return scale, bias


@jax.jit
def double_conv(x_nchw, w1_oihw, cb1, g1, be1, rm1, rv1,
                w2_oihw, cb2, g2, be2, rm2, rv2):
    """PyTorch-equivalent DoubleConv forward. x_nchw: (N, Cin, H, W) -> (N, Cout, H, W)."""
    eps = 1e-5
    N, Cin, H, W = x_nchw.shape
    Cmid = w1_oihw.shape[0]
    Cout = w2_oihw.shape[0]

    # Fold conv bias + inference-mode BatchNorm into per-channel scale/bias.
    s1, b1 = _fold_bn(cb1, g1, be1, rm1, rv1, eps)
    s2, b2 = _fold_bn(cb2, g2, be2, rm2, rv2, eps)

    # NCHW -> NHWC (channels-last => channels dense on the lane axis), bf16 to halve
    # the input DMA bytes.
    # TODO(synk): keep the surrounding model in NHWC to drop these two transpose passes.
    x_nhwc = jnp.transpose(x_nchw, (0, 2, 3, 1)).astype(jnp.bfloat16)

    # OIHW -> HWIO -> im2col layout (9*Cin, Cout); row order (ky, kx, ci) matches the
    # kernel's tap concatenation. bf16 for the MXU.
    w1 = jnp.transpose(w1_oihw, (2, 3, 1, 0)).reshape(9 * Cin, Cmid).astype(jnp.bfloat16)
    w2 = jnp.transpose(w2_oihw, (2, 3, 1, 0)).reshape(9 * Cmid, Cout).astype(jnp.bfloat16)

    s1 = s1.reshape(1, Cmid).astype(jnp.float32)
    b1 = b1.reshape(1, Cmid).astype(jnp.float32)
    s2 = s2.reshape(1, Cout).astype(jnp.float32)
    b2 = b2.reshape(1, Cout).astype(jnp.float32)

    out_nhwc = pl.pallas_call(
        _double_conv_kernel,
        out_shape=jax.ShapeDtypeStruct((N, H, W, Cout), jnp.float32),
        grid_spec=pltpu.PrefetchScalarGridSpec(
            num_scalar_prefetch=0,
            grid=(N,),
            in_specs=[
                pl.BlockSpec((1, H, W, Cin), lambda n: (n, 0, 0, 0)),   # unpadded input
                pl.BlockSpec((9 * Cin, Cmid), lambda n: (0, 0)),        # conv1 weights
                pl.BlockSpec((1, Cmid), lambda n: (0, 0)),              # BN1 scale
                pl.BlockSpec((1, Cmid), lambda n: (0, 0)),              # BN1 bias
                pl.BlockSpec((9 * Cmid, Cout), lambda n: (0, 0)),       # conv2 weights
                pl.BlockSpec((1, Cout), lambda n: (0, 0)),              # BN2 scale
                pl.BlockSpec((1, Cout), lambda n: (0, 0)),              # BN2 bias
            ],
            out_specs=pl.BlockSpec((1, H, W, Cout), lambda n: (n, 0, 0, 0)),
            scratch_shapes=[
                pltpu.VMEM((H + 2, W + 2, Cin), jnp.float32),   # padded input
                pltpu.VMEM((H + 2, W + 2, Cmid), jnp.float32),  # padded intermediate
            ],
        ),
        compiler_params=pltpu.CompilerParams(
            dimension_semantics=("parallel",),
            vmem_limit_bytes=48 * 1024 * 1024,
        ),
    )(x_nhwc, w1, s1, b1, w2, s2, b2)

    return jnp.transpose(out_nhwc, (0, 3, 1, 2))


def _reference(x, w1_oihw, cb1, g1, be1, rm1, rv1,
               w2_oihw, cb2, g2, be2, rm2, rv2, eps=1e-5):
    """Pure-JAX f32 reference (inference-mode BN), NCHW in/out, OIHW weights."""
    def conv_bn_relu(x, w, cb, g, be, m, v):
        y = lax.conv_general_dilated(
            x, w, window_strides=(1, 1), padding=((1, 1), (1, 1)),
            dimension_numbers=("NCHW", "OIHW", "NCHW"))
        y = y + cb[None, :, None, None]
        y = (y - m[None, :, None, None]) / jnp.sqrt(v[None, :, None, None] + eps)
        y = y * g[None, :, None, None] + be[None, :, None, None]
        return jnp.maximum(y, 0.0)

    y = conv_bn_relu(x, w1_oihw, cb1, g1, be1, rm1, rv1)
    return conv_bn_relu(y, w2_oihw, cb2, g2, be2, rm2, rv2)


if __name__ == "__main__":
    N, Cin, Cout, H, W = 2, 4, 8, 16, 16
    key = jax.random.PRNGKey(0)
    ks = jax.random.split(key, 13)

    # PyTorch-style OIHW conv weights; deterministic init.
    w1 = jax.random.normal(ks[0], (Cout, Cin, 3, 3), jnp.float32) * 0.1
    cb1 = jax.random.normal(ks[1], (Cout,), jnp.float32) * 0.1
    w2 = jax.random.normal(ks[2], (Cout, Cout, 3, 3), jnp.float32) * 0.1
    cb2 = jax.random.normal(ks[3], (Cout,), jnp.float32) * 0.1

    # BatchNorm parameters (inference mode).
    g1 = 1.0 + 0.1 * jax.random.normal(ks[4], (Cout,), jnp.float32)
    be1 = 0.1 * jax.random.normal(ks[5], (Cout,), jnp.float32)
    rm1 = 0.1 * jax.random.normal(ks[6], (Cout,), jnp.float32)
    rv1 = 1.0 + 0.1 * jax.random.uniform(ks[7], (Cout,), jnp.float32)
    g2 = 1.0 + 0.1 * jax.random.normal(ks[8], (Cout,), jnp.float32)
    be2 = 0.1 * jax.random.normal(ks[9], (Cout,), jnp.float32)
    rm2 = 0.1 * jax.random.normal(ks[10], (Cout,), jnp.float32)
    rv2 = 1.0 + 0.1 * jax.random.uniform(ks[11], (Cout,), jnp.float32)

    x = jax.random.normal(ks[12], (N, Cin, H, W), jnp.float32)

    out = double_conv(x, w1, cb1, g1, be1, rm1, rv1, w2, cb2, g2, be2, rm2, rv2)
    out = jax.block_until_ready(out)

    ref = _reference(x, w1, cb1, g1, be1, rm1, rv1, w2, cb2, g2, be2, rm2, rv2)
    assert out.shape == (N, Cout, H, W)
    max_err = float(jnp.max(jnp.abs(out - ref)))
    # bf16 matmul operands (f32 accumulation) loosen agreement with the f32 reference.
    assert jnp.allclose(out, ref, atol=5e-2, rtol=5e-2), max_err

    print("KERNEL_OK")
</pallas_src>

<mosaic_0001>
module attributes {stable_mosaic.version = 11 : i64} {
  func.func @_double_conv_kernel(%arg0: i32, %arg1: memref<1x16x16x4xbf16, #tpu.memory_space<vmem>>, %arg2: memref<36x8xbf16, #tpu.memory_space<vmem>>, %arg3: memref<1x8xf32, #tpu.memory_space<vmem>>, %arg4: memref<1x8xf32, #tpu.memory_space<vmem>>, %arg5: memref<72x8xbf16, #tpu.memory_space<vmem>>, %arg6: memref<1x8xf32, #tpu.memory_space<vmem>>, %arg7: memref<1x8xf32, #tpu.memory_space<vmem>>, %arg8: memref<1x16x16x8xf32, #tpu.memory_space<vmem>>, %arg9: memref<18x18x4xf32, #tpu.memory_space<vmem>>, %arg10: memref<18x18x8xf32, #tpu.memory_space<vmem>>) attributes {dimension_semantics = [#tpu.dimension_semantics<parallel>], iteration_bounds = array<i64: 2>, scalar_prefetch = 0 : i64, scratch_operands = 2 : i64, tpu.core_type = #tpu.core_type<tc>, window_params = [{transform_indices = @transform_0, window_bounds = array<i64: 1, 16, 16, 4>}, {pipeline_mode = #tpu.pipeline_mode<synchronous>, transform_indices = @transform_1, window_bounds = array<i64: 36, 8>}, {pipeline_mode = #tpu.pipeline_mode<synchronous>, transform_indices = @transform_2, window_bounds = array<i64: 1, 8>}, {pipeline_mode = #tpu.pipeline_mode<synchronous>, transform_indices = @transform_3, window_bounds = array<i64: 1, 8>}, {pipeline_mode = #tpu.pipeline_mode<synchronous>, transform_indices = @transform_4, window_bounds = array<i64: 72, 8>}, {pipeline_mode = #tpu.pipeline_mode<synchronous>, transform_indices = @transform_5, window_bounds = array<i64: 1, 8>}, {pipeline_mode = #tpu.pipeline_mode<synchronous>, transform_indices = @transform_6, window_bounds = array<i64: 1, 8>}, {transform_indices = @transform_7, window_bounds = array<i64: 1, 16, 16, 8>}]} {
    %cst = arith.constant 0.000000e+00 : f32
    %0 = vector.broadcast %cst : f32 to vector<1x18x4xf32>
    %c0 = arith.constant 0 : index
    %c0_0 = arith.constant 0 : index
    %c0_1 = arith.constant 0 : index
    %1 = vector.load %arg9[%c0, %c0_0, %c0_1] : memref<18x18x4xf32, #tpu.memory_space<vmem>>, vector<1x18x4xf32>
    tpu.vector_store %arg9[%c0, %c0_0, %c0_1], %0 {strides = array<i32>} : memref<18x18x4xf32, #tpu.memory_space<vmem>>, vector<1x18x4xf32>,
    %cst_2 = arith.constant 0.000000e+00 : f32
    %2 = vector.broadcast %cst_2 : f32 to vector<1x18x4xf32>
    %c17 = arith.constant 17 : index
    %c0_3 = arith.constant 0 : index
    %c0_4 = arith.constant 0 : index
    %3 = vector.load %arg9[%c17, %c0_3, %c0_4] : memref<18x18x4xf32, #tpu.memory_space<vmem>>, vector<1x18x4xf32>
    tpu.vector_store %arg9[%c17, %c0_3, %c0_4], %2 {strides = array<i32>} : memref<18x18x4xf32, #tpu.memory_space<vmem>>, vector<1x18x4xf32>,
    %cst_5 = arith.constant 0.000000e+00 : f32
    %4 = vector.broadcast %cst_5 : f32 to vector<18x1x4xf32>
    %c0_6 = arith.constant 0 : index
    %c0_7 = arith.constant 0 : index
    %c0_8 = arith.constant 0 : index
    %5 = vector.load %arg9[%c0_6, %c0_7, %c0_8] : memref<18x18x4xf32, #tpu.memory_space<vmem>>, vector<18x1x4xf32>
    tpu.vector_store %arg9[%c0_6, %c0_7, %c0_8], %4 {strides = array<i32>} : memref<18x18x4xf32, #tpu.memory_space<vmem>>, vector<18x1x4xf32>,
    %cst_9 = arith.constant 0.000000e+00 : f32
    %6 = vector.broadcast %cst_9 : f32 to vector<18x1x4xf32>
    %c0_10 = arith.constant 0 : index
    %c17_11 = arith.constant 17 : index
    %c0_12 = arith.constant 0 : index
    %7 = vector.load %arg9[%c0_10, %c17_11, %c0_12] : memref<18x18x4xf32, #tpu.memory_space<vmem>>, vector<18x1x4xf32>
    tpu.vector_store %arg9[%c0_10, %c17_11, %c0_12], %6 {strides = array<i32>} : memref<18x18x4xf32, #tpu.memory_space<vmem>>, vector<18x1x4xf32>,
    %cst_13 = arith.constant 0.000000e+00 : f32
    %8 = vector.broadcast %cst_13 : f32 to vector<1x18x8xf32>
    %c0_14 = arith.constant 0 : index
    %c0_15 = arith.constant 0 : index
    %c0_16 = arith.constant 0 : index
    %9 = vector.load %arg10[%c0_14, %c0_15, %c0_16] : memref<18x18x8xf32, #tpu.memory_space<vmem>>, vector<1x18x8xf32>
    tpu.vector_store %arg10[%c0_14, %c0_15, %c0_16], %8 {strides = array<i32>} : memref<18x18x8xf32, #tpu.memory_space<vmem>>, vector<1x18x8xf32>,
    %cst_17 = arith.constant 0.000000e+00 : f32
    %10 = vector.broadcast %cst_17 : f32 to vector<1x18x8xf32>
    %c17_18 = arith.constant 17 : index
    %c0_19 = arith.constant 0 : index
    %c0_20 = arith.constant 0 : index
    %11 = vector.load %arg10[%c17_18, %c0_19, %c0_20] : memref<18x18x8xf32, #tpu.memory_space<vmem>>, vector<1x18x8xf32>
    tpu.vector_store %arg10[%c17_18, %c0_19, %c0_20], %10 {strides = array<i32>} : memref<18x18x8xf32, #tpu.memory_space<vmem>>, vector<1x18x8xf32>,
    %cst_21 = arith.constant 0.000000e+00 : f32
    %12 = vector.broadcast %cst_21 : f32 to vector<18x1x8xf32>
    %c0_22 = arith.constant 0 : index
    %c0_23 = arith.constant 0 : index
    %c0_24 = arith.constant 0 : index
    %13 = vector.load %arg10[%c0_22, %c0_23, %c0_24] : memref<18x18x8xf32, #tpu.memory_space<vmem>>, vector<18x1x8xf32>
    tpu.vector_store %arg10[%c0_22, %c0_23, %c0_24], %12 {strides = array<i32>} : memref<18x18x8xf32, #tpu.memory_space<vmem>>, vector<18x1x8xf32>,
    %cst_25 = arith.constant 0.000000e+00 : f32
    %14 = vector.broadcast %cst_25 : f32 to vector<18x1x8xf32>
    %c0_26 = arith.constant 0 : index
    %c17_27 = arith.constant 17 : index
    %c0_28 = arith.constant 0 : index
    %15 = vector.load %arg10[%c0_26, %c17_27, %c0_28] : memref<18x18x8xf32, #tpu.memory_space<vmem>>, vector<18x1x8xf32>
    tpu.vector_store %arg10[%c0_26, %c17_27, %c0_28], %14 {strides = array<i32>} : memref<18x18x8xf32, #tpu.memory_space<vmem>>, vector<18x1x8xf32>,
    %c0_29 = arith.constant 0 : index
    %c0_30 = arith.constant 0 : index
    %c0_31 = arith.constant 0 : index
    %c0_32 = arith.constant 0 : index
    %16 = vector.load %arg1[%c0_29, %c0_30, %c0_31, %c0_32] : memref<1x16x16x4xbf16, #tpu.memory_space<vmem>>, vector<1x16x16x4xbf16>
    %17 = vector.shape_cast %16 : vector<1x16x16x4xbf16> to vector<16x16x4xbf16>
    %18 = arith.extf %17 : vector<16x16x4xbf16> to vector<16x16x4xf32>
    %c1 = arith.constant 1 : index
    %c1_33 = arith.constant 1 : index
    %c0_34 = arith.constant 0 : index
    %19 = vector.load %arg9[%c1, %c1_33, %c0_34] : memref<18x18x4xf32, #tpu.memory_space<vmem>>, vector<16x16x4xf32>
    tpu.vector_store %arg9[%c1, %c1_33, %c0_34], %18 {strides = array<i32>} : memref<18x18x4xf32, #tpu.memory_space<vmem>>, vector<16x16x4xf32>,
    %c0_35 = arith.constant 0 : index
    %c0_36 = arith.constant 0 : index
    %c0_37 = arith.constant 0 : index
    %20 = vector.load %arg9[%c0_35, %c0_36, %c0_37] : memref<18x18x4xf32, #tpu.memory_space<vmem>>, vector<18x18x4xf32>
    %c0_38 = arith.constant 0 : index
    %c0_39 = arith.constant 0 : index
    %21 = vector.load %arg3[%c0_38, %c0_39] : memref<1x8xf32, #tpu.memory_space<vmem>>, vector<1x8xf32>
    %22 = vector.shape_cast %21 : vector<1x8xf32> to vector<8xf32>
    %c0_40 = arith.constant 0 : index
    %c0_41 = arith.constant 0 : index
    %23 = vector.load %arg4[%c0_40, %c0_41] : memref<1x8xf32, #tpu.memory_space<vmem>>, vector<1x8xf32>
    %24 = vector.shape_cast %23 : vector<1x8xf32> to vector<8xf32>
    %25 = vector.extract_strided_slice %20 {offsets = [0, 0, 0], sizes = [16, 16, 4], strides = [1, 1, 1]} : vector<18x18x4xf32> to vector<16x16x4xf32>
    %26 = vector.extract_strided_slice %20 {offsets = [0, 1, 0], sizes = [16, 16, 4], strides = [1, 1, 1]} : vector<18x18x4xf32> to vector<16x16x4xf32>
    %27 = vector.extract_strided_slice %20 {offsets = [0, 2, 0], sizes = [16, 16, 4], strides = [1, 1, 1]} : vector<18x18x4xf32> to vector<16x16x4xf32>
    %28 = vector.extract_strided_slice %20 {offsets = [1, 0, 0], sizes = [16, 16, 4], strides = [1, 1, 1]} : vector<18x18x4xf32> to vector<16x16x4xf32>
    %29 = vector.extract_strided_slice %20 {offsets = [1, 1, 0], sizes = [16, 16, 4], strides = [1, 1, 1]} : vector<18x18x4xf32> to vector<16x16x4xf32>
    %30 = vector.extract_strided_slice %20 {offsets = [1, 2, 0], sizes = [16, 16, 4], strides = [1, 1, 1]} : vector<18x18x4xf32> to vector<16x16x4xf32>
    %31 = vector.extract_strided_slice %20 {offsets = [2, 0, 0], sizes = [16, 16, 4], strides = [1, 1, 1]} : vector<18x18x4xf32> to vector<16x16x4xf32>
    %32 = vector.extract_strided_slice %20 {offsets = [2, 1, 0], sizes = [16, 16, 4], strides = [1, 1, 1]} : vector<18x18x4xf32> to vector<16x16x4xf32>
    %33 = vector.extract_strided_slice %20 {offsets = [2, 2, 0], sizes = [16, 16, 4], strides = [1, 1, 1]} : vector<18x18x4xf32> to vector<16x16x4xf32>
    %34 = tpu.concatenate %25, %26, %27, %28, %29, %30, %31, %32, %33 in 2 : vector<16x16x4xf32>, vector<16x16x4xf32>, vector<16x16x4xf32>, vector<16x16x4xf32>, vector<16x16x4xf32>, vector<16x16x4xf32>, vector<16x16x4xf32>, vector<16x16x4xf32>, vector<16x16x4xf32> -> vector<16x16x36xf32>
    %35 = arith.truncf %34 : vector<16x16x36xf32> to vector<16x16x36xbf16>
    %c0_42 = arith.constant 0 : index
    %c0_43 = arith.constant 0 : index
    %36 = vector.load %arg2[%c0_42, %c0_43] : memref<36x8xbf16, #tpu.memory_space<vmem>>, vector<36x8xbf16>
    %cst_44 = arith.constant dense<0.000000e+00> : vector<16x16x8xf32>
    %37 = tpu.matmul %35, %36, %cst_44 {dimension_numbers = #tpu.dot_dimension_numbers<[2], [0], [0, 1], [1], [0, 0, 0, 1, 1, 1], [], []>} : vector<16x16x36xbf16>, vector<36x8xbf16>, vector<16x16x8xf32> -> vector<16x16x8xf32>
    %38 = vector.shape_cast %22 : vector<8xf32> to vector<1x1x8xf32>
    %39 = vector.broadcast %38 : vector<1x1x8xf32> to vector<16x16x8xf32>
    %40 = arith.mulf %37, %39 : vector<16x16x8xf32>
    %41 = vector.shape_cast %24 : vector<8xf32> to vector<1x1x8xf32>
    %42 = vector.broadcast %41 : vector<1x1x8xf32> to vector<16x16x8xf32>
    %43 = arith.addf %40, %42 : vector<16x16x8xf32>
    %cst_45 = arith.constant 0.000000e+00 : f32
    %44 = vector.broadcast %cst_45 : f32 to vector<16x16x8xf32>
    %45 = arith.maximumf %43, %44 : vector<16x16x8xf32>
    %c1_46 = arith.constant 1 : index
    %c1_47 = arith.constant 1 : index
    %c0_48 = arith.constant 0 : index
    %46 = vector.load %arg10[%c1_46, %c1_47, %c0_48] : memref<18x18x8xf32, #tpu.memory_space<vmem>>, vector<16x16x8xf32>
    tpu.vector_store %arg10[%c1_46, %c1_47, %c0_48], %45 {strides = array<i32>} : memref<18x18x8xf32, #tpu.memory_space<vmem>>, vector<16x16x8xf32>,
    %c0_49 = arith.constant 0 : index
    %c0_50 = arith.constant 0 : index
    %c0_51 = arith.constant 0 : index
    %47 = vector.load %arg10[%c0_49, %c0_50, %c0_51] : memref<18x18x8xf32, #tpu.memory_space<vmem>>, vector<18x18x8xf32>
    %c0_52 = arith.constant 0 : index
    %c0_53 = arith.constant 0 : index
    %48 = vector.load %arg6[%c0_52, %c0_53] : memref<1x8xf32, #tpu.memory_space<vmem>>, vector<1x8xf32>
    %49 = vector.shape_cast %48 : vector<1x8xf32> to vector<8xf32>
    %c0_54 = arith.constant 0 : index
    %c0_55 = arith.constant 0 : index
    %50 = vector.load %arg7[%c0_54, %c0_55] : memref<1x8xf32, #tpu.memory_space<vmem>>, vector<1x8xf32>
    %51 = vector.shape_cast %50 : vector<1x8xf32> to vector<8xf32>
    %52 = vector.extract_strided_slice %47 {offsets = [0, 0, 0], sizes = [16, 16, 8], strides = [1, 1, 1]} : vector<18x18x8xf32> to vector<16x16x8xf32>
    %53 = vector.extract_strided_slice %47 {offsets = [0, 1, 0], sizes = [16, 16, 8], strides = [1, 1, 1]} : vector<18x18x8xf32> to vector<16x16x8xf32>
    %54 = vector.extract_strided_slice %47 {offsets = [0, 2, 0], sizes = [16, 16, 8], strides = [1, 1, 1]} : vector<18x18x8xf32> to vector<16x16x8xf32>
    %55 = vector.extract_strided_slice %47 {offsets = [1, 0, 0], sizes = [16, 16, 8], strides = [1, 1, 1]} : vector<18x18x8xf32> to vector<16x16x8xf32>
    %56 = vector.extract_strided_slice %47 {offsets = [1, 1, 0], sizes = [16, 16, 8], strides = [1, 1, 1]} : vector<18x18x8xf32> to vector<16x16x8xf32>
    %57 = vector.extract_strided_slice %47 {offsets = [1, 2, 0], sizes = [16, 16, 8], strides = [1, 1, 1]} : vector<18x18x8xf32> to vector<16x16x8xf32>
    %58 = vector.extract_strided_slice %47 {offsets = [2, 0, 0], sizes = [16, 16, 8], strides = [1, 1, 1]} : vector<18x18x8xf32> to vector<16x16x8xf32>
    %59 = vector.extract_strided_slice %47 {offsets = [2, 1, 0], sizes = [16, 16, 8], strides = [1, 1, 1]} : vector<18x18x8xf32> to vector<16x16x8xf32>
    %60 = vector.extract_strided_slice %47 {offsets = [2, 2, 0], sizes = [16, 16, 8], strides = [1, 1, 1]} : vector<18x18x8xf32> to vector<16x16x8xf32>
    %61 = tpu.concatenate %52, %53, %54, %55, %56, %57, %58, %59, %60 in 2 : vector<16x16x8xf32>, vector<16x16x8xf32>, vector<16x16x8xf32>, vector<16x16x8xf32>, vector<16x16x8xf32>, vector<16x16x8xf32>, vector<16x16x8xf32>, vector<16x16x8xf32>, vector<16x16x8xf32> -> vector<16x16x72xf32>
    %62 = arith.truncf %61 : vector<16x16x72xf32> to vector<16x16x72xbf16>
    %c0_56 = arith.constant 0 : index
    %c0_57 = arith.constant 0 : index
    %63 = vector.load %arg5[%c0_56, %c0_57] : memref<72x8xbf16, #tpu.memory_space<vmem>>, vector<72x8xbf16>
    %cst_58 = arith.constant dense<0.000000e+00> : vector<16x16x8xf32>
    %64 = tpu.matmul %62, %63, %cst_58 {dimension_numbers = #tpu.dot_dimension_numbers<[2], [0], [0, 1], [1], [0, 0, 0, 1, 1, 1], [], []>} : vector<16x16x72xbf16>, vector<72x8xbf16>, vector<16x16x8xf32> -> vector<16x16x8xf32>
    %65 = vector.shape_cast %49 : vector<8xf32> to vector<1x1x8xf32>
    %66 = vector.broadcast %65 : vector<1x1x8xf32> to vector<16x16x8xf32>
    %67 = arith.mulf %64, %66 : vector<16x16x8xf32>
    %68 = vector.shape_cast %51 : vector<8xf32> to vector<1x1x8xf32>
    %69 = vector.broadcast %68 : vector<1x1x8xf32> to vector<16x16x8xf32>
    %70 = arith.addf %67, %69 : vector<16x16x8xf32>
    %cst_59 = arith.constant 0.000000e+00 : f32
    %71 = vector.broadcast %cst_59 : f32 to vector<16x16x8xf32>
    %72 = arith.maximumf %70, %71 : vector<16x16x8xf32>
    %c0_60 = arith.constant 0 : index
    %c0_61 = arith.constant 0 : index
    %c0_62 = arith.constant 0 : index
    %c0_63 = arith.constant 0 : index
    %73 = vector.load %arg8[%c0_60, %c0_61, %c0_62, %c0_63] : memref<1x16x16x8xf32, #tpu.memory_space<vmem>>, vector<1x16x16x8xf32>
    %74 = vector.shape_cast %73 : vector<1x16x16x8xf32> to vector<16x16x8xf32>
    %75 = vector.shape_cast %72 : vector<16x16x8xf32> to vector<1x16x16x8xf32>
    tpu.vector_store %arg8[%c0_60, %c0_61, %c0_62, %c0_63], %75 {strides = array<i32>} : memref<1x16x16x8xf32, #tpu.memory_space<vmem>>, vector<1x16x16x8xf32>,
    return
  }
  func.func @transform_0(%arg0: i32) -> (i32, i32, i32, i32) {
    %c0_i32 = arith.constant 0 : i32
    %c0_i32_0 = arith.constant 0 : i32
    %c0_i32_1 = arith.constant 0 : i32
    %c0_i32_2 = arith.constant 0 : i32
    return %arg0, %c0_i32, %c0_i32_0, %c0_i32_1 : i32, i32, i32, i32
  }
  func.func @transform_1(%arg0: i32) -> (i32, i32) {
    %c0_i32 = arith.constant 0 : i32
    %c0_i32_0 = arith.constant 0 : i32
    %c0_i32_1 = arith.constant 0 : i32
    return %c0_i32, %c0_i32_0 : i32, i32
  }
  func.func @transform_2(%arg0: i32) -> (i32, i32) {
    %c0_i32 = arith.constant 0 : i32
    %c0_i32_0 = arith.constant 0 : i32
    %c0_i32_1 = arith.constant 0 : i32
    return %c0_i32, %c0_i32_0 : i32, i32
  }
  func.func @transform_3(%arg0: i32) -> (i32, i32) {
    %c0_i32 = arith.constant 0 : i32
    %c0_i32_0 = arith.constant 0 : i32
    %c0_i32_1 = arith.constant 0 : i32
    return %c0_i32, %c0_i32_0 : i32, i32
  }
  func.func @transform_4(%arg0: i32) -> (i32, i32) {
    %c0_i32 = arith.constant 0 : i32
    %c0_i32_0 = arith.constant 0 : i32
    %c0_i32_1 = arith.constant 0 : i32
    return %c0_i32, %c0_i32_0 : i32, i32
  }
  func.func @transform_5(%arg0: i32) -> (i32, i32) {
    %c0_i32 = arith.constant 0 : i32
    %c0_i32_0 = arith.constant 0 : i32
    %c0_i32_1 = arith.constant 0 : i32
    return %c0_i32, %c0_i32_0 : i32, i32
  }
  func.func @transform_6(%arg0: i32) -> (i32, i32) {
    %c0_i32 = arith.constant 0 : i32
    %c0_i32_0 = arith.constant 0 : i32
    %c0_i32_1 = arith.constant 0 : i32
    return %c0_i32, %c0_i32_0 : i32, i32
  }
  func.func @transform_7(%arg0: i32) -> (i32, i32, i32, i32) {
    %c0_i32 = arith.constant 0 : i32
    %c0_i32_0 = arith.constant 0 : i32
    %c0_i32_1 = arith.constant 0 : i32
    %c0_i32_2 = arith.constant 0 : i32
    return %arg0, %c0_i32, %c0_i32_0, %c0_i32_1 : i32, i32, i32, i32
  }
}

</mosaic_0001>

<llo_original>
// kernel: double_conv.1
$region0: #{double_conv.1}
  #allocation0 [shape = 'u32[]', space=smem, size = 0x4, offset = 0x4, fixed_abs, tag = 'smem constant byte address 0x4 - core index']
  #allocation1 [shape = 'u32[72,128]{1,0:T(1,128)}', space=vmem, size = 0x9000, scoped, tag = 'internal scratch']
  #allocation2 [shape = 'f32[18,18,4]{2,1,0:T(8,128)}', space=vmem, size = 0x36000, scoped, tag = 'scratch operand']
  #allocation3 [shape = 'f32[18,18,8]{2,1,0:T(8,128)}', space=vmem, size = 0x36000, scoped, tag = 'scratch operand']
  %s0 = inlined_call_operand.vmem [shape: bf16[2,16,16,4], index: 0, kind: input, shape index: {}]
  %s1 = inlined_call_operand.vmem [shape: bf16[36,8], index: 1, kind: input, shape index: {}]
  %s2 = inlined_call_operand.vmem [shape: f32[1,8], index: 2, kind: input, shape index: {}]
  %s3 = inlined_call_operand.vmem [shape: f32[1,8], index: 3, kind: input, shape index: {}]
  %s4 = inlined_call_operand.vmem [shape: bf16[72,8], index: 4, kind: input, shape index: {}]
  %s5 = inlined_call_operand.vmem [shape: f32[1,8], index: 5, kind: input, shape index: {}]
  %s6 = inlined_call_operand.vmem [shape: f32[1,8], index: 6, kind: input, shape index: {}]
  %s7 = inlined_call_operand.vmem [shape: f32[2,16,16,8], index: 7, kind: output, shape index: {}]
  %s8 = sld [smem:[#allocation0]]
  $region61: #{double_conv.1} parent=0
    _
  %s10 = ssub.s32 1, %s8
  %s11 = scalar_select 0, %s10, %s8
  loop: start=0, step=1, limit=4
  $region2: #{double_conv.1} parent=0 // loop_pre_header
    _
  $region3: #{double_conv.1} parent=0 // loop_header
    %s13 = sphi 0, %s17
    %p14 = scmp.ge.s32.totalorder %s13, 4
    %s23 = sphi 0, %s25
    %s26 = sphi 0, %s23
    %s27 = sphi 0, %s26
    %s43 = sphi 0, %s27
    %s47 = sphi 0, %s47
    %s49 = sphi 0, %s47
    %s50 = sphi 0, %s49
    %s64 = sphi 0, %s50
    %s68 = sphi 0, %s68
    %s70 = sphi 0, %s68
    %s71 = sphi 0, %s70
    %s85 = sphi 0, %s71
    %s89 = sphi 0, %s89
    %s91 = sphi 0, %s89
    %s92 = sphi 0, %s91
    %s106 = sphi 0, %s92
    %s110 = sphi 0, %s110
    %s112 = sphi 0, %s110
    %s113 = sphi 0, %s112
    %s127 = sphi 0, %s113
    %s131 = sphi 0, %s131
    %s133 = sphi 0, %s131
    %s134 = sphi 0, %s133
    %s148 = sphi 0, %s134
    %s152 = sphi 0, %s152
    %s154 = sphi 0, %s152
    %s155 = sphi 0, %s154
    %s169 = sphi 0, %s155
    %s175 = sphi 0, %s177
    %s178 = sphi 0, %s175
    %s179 = sphi 0, %s178
    %s195 = sphi 0, %s179
  $region4: #{double_conv.1} parent=0 // loop_header_branch
    %16 = sbr.rel (%p14) target = $region8
  $region5: #{double_conv.1} parent=0 // loop_body
    %s18 = ssub.s32 %s13, 1
    %s19 = ssub.s32 %s13, 2
    %s20 = sadd.s32 %s13, 1
    %s21 = ssub.s32 %s13, %s20
    %p22 = scmp.eq.s32.totalorder %s21, 0
    %s24 = sadd.s32 %s23, 1
    %s25 = scalar_select %p22, %s23, %s24
    %p28 = pneg %p22
    %p29 = scmp.eq.s32.totalorder %s13, 1
    %p30 = por %p28, %p29
    %p31 = scmp.ne.s32.totalorder %s23, %s26
    %p32 = scmp.eq.s32.totalorder %s13, 0
    %p33 = por %p31, %p32
    %p34 = scmp.ne.s32.totalorder %s23, %s26
    %p35 = scmp.eq.s32.totalorder %s18, 1
    %p36 = por %p34, %p35
    %p37 = scmp.ne.s32.totalorder %s26, %s27
    %p38 = scmp.eq.s32.totalorder %s18, 0
    %p39 = por %p37, %p38
    %p40 = scmp.ne.s32.totalorder %s26, %s27
    %p41 = scmp.eq.s32.totalorder %s19, 1
    %p42 = por %p40, %p41
    %p44 = scmp.ne.s32.totalorder %s27, %s43
    %p45 = scmp.eq.s32.totalorder %s19, 0
    %p46 = por %p44, %p45
    %s48 = sadd.s32 %s47, 1
    %p51 = scmp.eq.s32.totalorder %s13, 1
    %p52 = scmp.ne.s32.totalorder %s47, %s49
    %p53 = scmp.eq.s32.totalorder %s13, 0
    %p54 = por %p52, %p53
    %p55 = scmp.ne.s32.totalorder %s47, %s49
    %p56 = scmp.eq.s32.totalorder %s18, 1
    %p57 = por %p55, %p56
    %p58 = scmp.ne.s32.totalorder %s49, %s50
    %p59 = scmp.eq.s32.totalorder %s18, 0
    %p60 = por %p58, %p59
    %p61 = scmp.ne.s32.totalorder %s49, %s50
    %p62 = scmp.eq.s32.totalorder %s19, 1
    %p63 = por %p61, %p62
    %p65 = scmp.ne.s32.totalorder %s50, %s64
    %p66 = scmp.eq.s32.totalorder %s19, 0
    %p67 = por %p65, %p66
    %s69 = sadd.s32 %s68, 1
    %p72 = scmp.eq.s32.totalorder %s13, 1
    %p73 = scmp.ne.s32.totalorder %s68, %s70
    %p74 = scmp.eq.s32.totalorder %s13, 0
    %p75 = por %p73, %p74
    %p76 = scmp.ne.s32.totalorder %s68, %s70
    %p77 = scmp.eq.s32.totalorder %s18, 1
    %p78 = por %p76, %p77
    %p79 = scmp.ne.s32.totalorder %s70, %s71
    %p80 = scmp.eq.s32.totalorder %s18, 0
    %p81 = por %p79, %p80
    %p82 = scmp.ne.s32.totalorder %s70, %s71
    %p83 = scmp.eq.s32.totalorder %s19, 1
    %p84 = por %p82, %p83
    %p86 = scmp.ne.s32.totalorder %s71, %s85
    %p87 = scmp.eq.s32.totalorder %s19, 0
    %p88 = por %p86, %p87
    %s90 = sadd.s32 %s89, 1
    %p93 = scmp.eq.s32.totalorder %s13, 1
    %p94 = scmp.ne.s32.totalorder %s89, %s91
    %p95 = scmp.eq.s32.totalorder %s13, 0
    %p96 = por %p94, %p95
    %p97 = scmp.ne.s32.totalorder %s89, %s91
    %p98 = scmp.eq.s32.totalorder %s18, 1
    %p99 = por %p97, %p98
    %p100 = scmp.ne.s32.totalorder %s91, %s92
    %p101 = scmp.eq.s32.totalorder %s18, 0
    %p102 = por %p100, %p101
    %p103 = scmp.ne.s32.totalorder %s91, %s92
    %p104 = scmp.eq.s32.totalorder %s19, 1
    %p105 = por %p103, %p104
    %p107 = scmp.ne.s32.totalorder %s92, %s106
    %p108 = scmp.eq.s32.totalorder %s19, 0
    %p109 = por %p107, %p108
    %s111 = sadd.s32 %s110, 1
    %p114 = scmp.eq.s32.totalorder %s13, 1
    %p115 = scmp.ne.s32.totalorder %s110, %s112
    %p116 = scmp.eq.s32.totalorder %s13, 0
    %p117 = por %p115, %p116
    %p118 = scmp.ne.s32.totalorder %s110, %s112
    %p119 = scmp.eq.s32.totalorder %s18, 1
    %p120 = por %p118, %p119
    %p121 = scmp.ne.s32.totalorder %s112, %s113
    %p122 = scmp.eq.s32.totalorder %s18, 0
    %p123 = por %p121, %p122
    %p124 = scmp.ne.s32.totalorder %s112, %s113
    %p125 = scmp.eq.s32.totalorder %s19, 1
    %p126 = por %p124, %p125
    %p128 = scmp.ne.s32.totalorder %s113, %s127
    %p129 = scmp.eq.s32.totalorder %s19, 0
    %p130 = por %p128, %p129
    %s132 = sadd.s32 %s131, 1
    %p135 = scmp.eq.s32.totalorder %s13, 1
    %p136 = scmp.ne.s32.totalorder %s131, %s133
    %p137 = scmp.eq.s32.totalorder %s13, 0
    %p138 = por %p136, %p137
    %p139 = scmp.ne.s32.totalorder %s131, %s133
    %p140 = scmp.eq.s32.totalorder %s18, 1
    %p141 = por %p139, %p140
    %p142 = scmp.ne.s32.totalorder %s133, %s134
    %p143 = scmp.eq.s32.totalorder %s18, 0
    %p144 = por %p142, %p143
    %p145 = scmp.ne.s32.totalorder %s133, %s134
    %p146 = scmp.eq.s32.totalorder %s19, 1
    %p147 = por %p145, %p146
    %p149 = scmp.ne.s32.totalorder %s134, %s148
    %p150 = scmp.eq.s32.totalorder %s19, 0
    %p151 = por %p149, %p150
    %s153 = sadd.s32 %s152, 1
    %p156 = scmp.eq.s32.totalorder %s13, 1
    %p157 = scmp.ne.s32.totalorder %s152, %s154
    %p158 = scmp.eq.s32.totalorder %s13, 0
    %p159 = por %p157, %p158
    %p160 = scmp.ne.s32.totalorder %s152, %s154
    %p161 = scmp.eq.s32.totalorder %s18, 1
    %p162 = por %p160, %p161
    %p163 = scmp.ne.s32.totalorder %s154, %s155
    %p164 = scmp.eq.s32.totalorder %s18, 0
    %p165 = por %p163, %p164
    %p166 = scmp.ne.s32.totalorder %s154, %s155
    %p167 = scmp.eq.s32.totalorder %s19, 1
    %p168 = por %p166, %p167
    %p170 = scmp.ne.s32.totalorder %s155, %s169
    %p171 = scmp.eq.s32.totalorder %s19, 0
    %p172 = por %p170, %p171
    %s173 = ssub.s32 %s13, %s20
    %p174 = scmp.eq.s32.totalorder %s173, 0
    %s176 = sadd.s32 %s175, 1
    %s177 = scalar_select %p174, %s175, %s176
    %p180 = pneg %p174
    %p181 = scmp.eq.s32.totalorder %s13, 1
    %p182 = por %p180, %p181
    %p183 = scmp.ne.s32.totalorder %s175, %s178
    %p184 = scmp.eq.s32.totalorder %s13, 0
    %p185 = por %p183, %p184
    %p186 = scmp.ne.s32.totalorder %s175, %s178
    %p187 = scmp.eq.s32.totalorder %s18, 1
    %p188 = por %p186, %p187
    %p189 = scmp.ne.s32.totalorder %s178, %s179
    %p190 = scmp.eq.s32.totalorder %s18, 0
    %p191 = por %p189, %p190
    %p192 = scmp.ne.s32.totalorder %s178, %s179
    %p193 = scmp.eq.s32.totalorder %s19, 1
    %p194 = por %p192, %p193
    %p196 = scmp.ne.s32.totalorder %s179, %s195
    %p197 = scmp.eq.s32.totalorder %s19, 0
    %p198 = por %p196, %p197
    %p199 = scmp.le.s32.totalorder 1, %s13
    %p200 = scmp.lt.s32.totalorder %s13, 3
    %p201 = pnand %p199, %p200
    %p202 = pneg %p201
    // Predicated region
    $region9: #{double_conv.1} parent=5 // pred_check
      _
    $region10: #{double_conv.1} parent=5 // pred_check_branch
      %204 = sbr.rel (%p201) target = $region12
    $region11: #{double_conv.1} parent=5 // pred_region
      %s205 = ssub.s32 %s13, 1
      // Predicated region
      $region13: #{double_conv.1} parent=11 // pred_check
        %p206 = pneg %p60
      $region14: #{double_conv.1} parent=11 // pred_check_branch
        %208 = sbr.rel (%p206) target = $region16
      $region15: #{double_conv.1} parent=11 // pred_region
        _
      $region16: #{double_conv.1} parent=11 // pred_fallthru
        _
      // Predicated region
      $region17: #{double_conv.1} parent=11 // pred_check
        %p209 = pneg %p81
      $region18: #{double_conv.1} parent=11 // pred_check_branch
        %211 = sbr.rel (%p209) target = $region20
      $region19: #{double_conv.1} parent=11 // pred_region
        _
      $region20: #{double_conv.1} parent=11 // pred_fallthru
        _
      // Predicated region
      $region21: #{double_conv.1} parent=11 // pred_check
        %p212 = pneg %p102
      $region22: #{double_conv.1} parent=11 // pred_check_branch
        %214 = sbr.rel (%p212) target = $region24
      $region23: #{double_conv.1} parent=11 // pred_region
        _
      $region24: #{double_conv.1} parent=11 // pred_fallthru
        _
      // Predicated region
      $region25: #{double_conv.1} parent=11 // pred_check
        %p215 = pneg %p123
      $region26: #{double_conv.1} parent=11 // pred_check_branch
        %217 = sbr.rel (%p215) target = $region28
      $region27: #{double_conv.1} parent=11 // pred_region
        _
      $region28: #{double_conv.1} parent=11 // pred_fallthru
        _
      // Predicated region
      $region29: #{double_conv.1} parent=11 // pred_check
        %p218 = pneg %p144
      $region30: #{double_conv.1} parent=11 // pred_check_branch
        %220 = sbr.rel (%p218) target = $region32
      $region31: #{double_conv.1} parent=11 // pred_region
        _
      $region32: #{double_conv.1} parent=11 // pred_fallthru
        _
      // Predicated region
      $region33: #{double_conv.1} parent=11 // pred_check
        %p221 = pneg %p165
      $region34: #{double_conv.1} parent=11 // pred_check_branch
        %223 = sbr.rel (%p221) target = $region36
      $region35: #{double_conv.1} parent=11 // pred_region
        _
      $region36: #{double_conv.1} parent=11 // pred_fallthru
        _
    $region12: #{double_conv.1} parent=5 // pred_fallthru
      _
    %p224 = scmp.lt.s32.totalorder %s13, 2
    // Predicated region
    $region37: #{double_conv.1} parent=5 // pred_check
      %p225 = pneg %p224
    $region38: #{double_conv.1} parent=5 // pred_check_branch
      %227 = sbr.rel (%p225) target = $region40
    $region39: #{double_conv.1} parent=5 // pred_region
      // Predicated region
      $region41: #{double_conv.1} parent=39 // pred_check
        %p228 = pneg %p33
      $region42: #{double_conv.1} parent=39 // pred_check_branch
        %230 = sbr.rel (%p228) target = $region44
      $region43: #{double_conv.1} parent=39 // pred_region
        %p231 = scmp.lt.s32.totalorder %s13, 1
        %s232 = scalar_select %p231, %s13, 1
        %s233 = smul.addr %s232, 32
        %s234 = smul.addr %s233, 4
        %s235 = scalar_lea.vmem %s0, %s234
      $region44: #{double_conv.1} parent=39 // pred_fallthru
        _
    $region40: #{double_conv.1} parent=5 // pred_fallthru
      _
    %p236 = scmp.le.s32.totalorder 1, %s13
    %p237 = scmp.lt.s32.totalorder %s13, 3
    %p238 = pnand %p236, %p237
    %p239 = pneg %p238
    // Predicated region
    $region45: #{double_conv.1} parent=5 // pred_check
      _
    $region46: #{double_conv.1} parent=5 // pred_check_branch
      %241 = sbr.rel (%p238) target = $region48
    $region47: #{double_conv.1} parent=5 // pred_region
      %s242 = ssub.s32 %s13, 1
      %p243 = scmp.lt.s32.totalorder %s18, 1
      %s244 = scalar_select %p243, %s18, 1
      %s245 = smul.addr %s244, 32
      %s246 = smul.addr %s245, 4
      %s247 = scalar_lea.vmem %s0, %s246
      %p248 = pneg %p39
      %p249 = pneg %p36
      %p250 = pneg %p60
      %p251 = pneg %p57
      %p252 = pneg %p81
      %p253 = pneg %p78
      %p254 = pneg %p102
      %p255 = pneg %p99
      %p256 = pneg %p123
      %p257 = pneg %p120
      %p258 = pneg %p144
      %p259 = pneg %p141
      %p260 = pneg %p165
      %p261 = pneg %p162
      %p262 = pneg %p191
      %p263 = pneg %p188
      %p264 = scmp.lt.s32.totalorder %s18, 1
      %s265 = scalar_select %p264, %s18, 1
      %s266 = smul.addr %s265, 32
      %s267 = smul.addr %s266, 8
      %s268 = scalar_lea.vmem %s7, %s267
      %p269 = scmp.lt.s32.totalorder %s18, 1
      %s270 = scalar_select %p269, %s18, 1
      %s271 = smul.addr %s270, 32
      %s272 = smul.addr %s271, 4
      %s273 = scalar_lea.vmem %s0, %s272
      %p274 = scmp.lt.s32.totalorder %s18, 1
      %s275 = scalar_select %p274, %s18, 1
      %s276 = smul.addr %s275, 32
      %s277 = smul.addr %s276, 8
      %s278 = scalar_lea.vmem %s7, %s277
      %vm280 = vcmask 31744
      %281 = vst.msk [vmem:[#allocation2] sm:$0xff] %vm280, 0.0
      %282 = vst.msk [vmem:[#allocation2 + $0x8] sm:$0xff] %vm280, 0.0
      %vm283 = vcmask 25600
      %284 = vst.msk [vmem:[#allocation2 + $0x10] sm:$0x3] %vm283, 0.0
      %s285 = scalar_lea.vmem [#allocation2], 408
      %286 = vst.msk [vmem:[%s285] sm:$0xff] %vm280, 0.0
      %287 = vst.msk [vmem:[%s285 + $0x8] sm:$0xff] %vm280, 0.0
      %288 = vst.msk [vmem:[%s285 + $0x10] sm:$0x3] %vm283, 0.0
      %vm289 = vcmask 24576
      %290 = vst.msk [vmem:[#allocation2] sm:$0x1] %vm289, 0.0
      %291 = vst.msk [vmem:[#allocation2 + $0x18] sm:$0x1] %vm289, 0.0
      %292 = vst.msk [vmem:[#allocation2 + $0x30] sm:$0x1] %vm289, 0.0
      %293 = vst.msk [vmem:[#allocation2 + $0x48] sm:$0x1] %vm289, 0.0
      %294 = vst.msk [vmem:[#allocation2 + $0x60] sm:$0x1] %vm289, 0.0
      %295 = vst.msk [vmem:[#allocation2 + $0x78] sm:$0x1] %vm289, 0.0
      %296 = vst.msk [vmem:[#allocation2 + $0x90] sm:$0x1] %vm289, 0.0
      %297 = vst.msk [vmem:[#allocation2 + $0xa8] sm:$0x1] %vm289, 0.0
      %298 = vst.msk [vmem:[#allocation2 + $0xc0] sm:$0x1] %vm289, 0.0
      %299 = vst.msk [vmem:[#allocation2 + $0xd8] sm:$0x1] %vm289, 0.0
      %300 = vst.msk [vmem:[#allocation2 + $0xf0] sm:$0x1] %vm289, 0.0
      %301 = vst.msk [vmem:[#allocation2 + $0x108] sm:$0x1] %vm289, 0.0
      %302 = vst.msk [vmem:[#allocation2 + $0x120] sm:$0x1] %vm289, 0.0
      %303 = vst.msk [vmem:[#allocation2 + $0x138] sm:$0x1] %vm289, 0.0
      %304 = vst.msk [vmem:[#allocation2 + $0x150] sm:$0x1] %vm289, 0.0
      %305 = vst.msk [vmem:[#allocation2 + $0x168] sm:$0x1] %vm289, 0.0
      %306 = vst.msk [vmem:[#allocation2 + $0x180] sm:$0x1] %vm289, 0.0
      %307 = vst.msk [vmem:[#allocation2 + $0x198] sm:$0x1] %vm289, 0.0
      %308 = vst.msk [vmem:[#allocation2 + $0x11] sm:$0x1] %vm289, 0.0
      %309 = vst.msk [vmem:[#allocation2 + $0x29] sm:$0x1] %vm289, 0.0
      %310 = vst.msk [vmem:[#allocation2 + $0x41] sm:$0x1] %vm289, 0.0
      %311 = vst.msk [vmem:[#allocation2 + $0x59] sm:$0x1] %vm289, 0.0
      %312 = vst.msk [vmem:[#allocation2 + $0x71] sm:$0x1] %vm289, 0.0
      %313 = vst.msk [vmem:[#allocation2 + $0x89] sm:$0x1] %vm289, 0.0
      %314 = vst.msk [vmem:[#allocation2 + $0xa1] sm:$0x1] %vm289, 0.0
      %315 = vst.msk [vmem:[#allocation2 + $0xb9] sm:$0x1] %vm289, 0.0
      %316 = vst.msk [vmem:[#allocation2 + $0xd1] sm:$0x1] %vm289, 0.0
      %317 = vst.msk [vmem:[#allocation2 + $0xe9] sm:$0x1] %vm289, 0.0
      %318 = vst.msk [vmem:[#allocation2 + $0x101] sm:$0x1] %vm289, 0.0
      %319 = vst.msk [vmem:[#allocation2 + $0x119] sm:$0x1] %vm289, 0.0
      %320 = vst.msk [vmem:[#allocation2 + $0x131] sm:$0x1] %vm289, 0.0
      %321 = vst.msk [vmem:[#allocation2 + $0x149] sm:$0x1] %vm289, 0.0
      %322 = vst.msk [vmem:[#allocation2 + $0x161] sm:$0x1] %vm289, 0.0
      %323 = vst.msk [vmem:[#allocation2 + $0x179] sm:$0x1] %vm289, 0.0
      %324 = vst.msk [vmem:[#allocation2 + $0x191] sm:$0x1] %vm289, 0.0
      %325 = vst.msk [vmem:[#allocation2 + $0x1a9] sm:$0x1] %vm289, 0.0
      %vm326 = vcmask 64512
      %327 = vst.msk [vmem:[#allocation3] sm:$0xff] %vm326, 0.0
      %328 = vst.msk [vmem:[#allocation3 + $0x8] sm:$0xff] %vm326, 0.0
      %vm329 = vcmask 58368
      %330 = vst.msk [vmem:[#allocation3 + $0x10] sm:$0x3] %vm329, 0.0
      %s331 = scalar_lea.vmem [#allocation3], 408
      %332 = vst.msk [vmem:[%s331] sm:$0xff] %vm326, 0.0
      %333 = vst.msk [vmem:[%s331 + $0x8] sm:$0xff] %vm326, 0.0
      %334 = vst.msk [vmem:[%s331 + $0x10] sm:$0x3] %vm329, 0.0
      %vm335 = vcmask 57344
      %336 = vst.msk [vmem:[#allocation3] sm:$0x1] %vm335, 0.0
      %337 = vst.msk [vmem:[#allocation3 + $0x18] sm:$0x1] %vm335, 0.0
      %338 = vst.msk [vmem:[#allocation3 + $0x30] sm:$0x1] %vm335, 0.0
      %339 = vst.msk [vmem:[#allocation3 + $0x48] sm:$0x1] %vm335, 0.0
      %340 = vst.msk [vmem:[#allocation3 + $0x60] sm:$0x1] %vm335, 0.0
      %341 = vst.msk [vmem:[#allocation3 + $0x78] sm:$0x1] %vm335, 0.0
      %342 = vst.msk [vmem:[#allocation3 + $0x90] sm:$0x1] %vm335, 0.0
      %343 = vst.msk [vmem:[#allocation3 + $0xa8] sm:$0x1] %vm335, 0.0
      %344 = vst.msk [vmem:[#allocation3 + $0xc0] sm:$0x1] %vm335, 0.0
      %345 = vst.msk [vmem:[#allocation3 + $0xd8] sm:$0x1] %vm335, 0.0
      %346 = vst.msk [vmem:[#allocation3 + $0xf0] sm:$0x1] %vm335, 0.0
      %347 = vst.msk [vmem:[#allocation3 + $0x108] sm:$0x1] %vm335, 0.0
      %348 = vst.msk [vmem:[#allocation3 + $0x120] sm:$0x1] %vm335, 0.0
      %349 = vst.msk [vmem:[#allocation3 + $0x138] sm:$0x1] %vm335, 0.0
      %350 = vst.msk [vmem:[#allocation3 + $0x150] sm:$0x1] %vm335, 0.0
      %351 = vst.msk [vmem:[#allocation3 + $0x168] sm:$0x1] %vm335, 0.0
      %352 = vst.msk [vmem:[#allocation3 + $0x180] sm:$0x1] %vm335, 0.0
      %353 = vst.msk [vmem:[#allocation3 + $0x198] sm:$0x1] %vm335, 0.0
      %354 = vst.msk [vmem:[#allocation3 + $0x11] sm:$0x1] %vm335, 0.0
      %355 = vst.msk [vmem:[#allocation3 + $0x29] sm:$0x1] %vm335, 0.0
      %356 = vst.msk [vmem:[#allocation3 + $0x41] sm:$0x1] %vm335, 0.0
      %357 = vst.msk [vmem:[#allocation3 + $0x59] sm:$0x1] %vm335, 0.0
      %358 = vst.msk [vmem:[#allocation3 + $0x71] sm:$0x1] %vm335, 0.0
      %359 = vst.msk [vmem:[#allocation3 + $0x89] sm:$0x1] %vm335, 0.0
      %360 = vst.msk [vmem:[#allocation3 + $0xa1] sm:$0x1] %vm335, 0.0
      %361 = vst.msk [vmem:[#allocation3 + $0xb9] sm:$0x1] %vm335, 0.0
      %362 = vst.msk [vmem:[#allocation3 + $0xd1] sm:$0x1] %vm335, 0.0
      %363 = vst.msk [vmem:[#allocation3 + $0xe9] sm:$0x1] %vm335, 0.0
      %364 = vst.msk [vmem:[#allocation3 + $0x101] sm:$0x1] %vm335, 0.0
      %365 = vst.msk [vmem:[#allocation3 + $0x119] sm:$0x1] %vm335, 0.0
      %366 = vst.msk [vmem:[#allocation3 + $0x131] sm:$0x1] %vm335, 0.0
      %367 = vst.msk [vmem:[#allocation3 + $0x149] sm:$0x1] %vm335, 0.0
      %368 = vst.msk [vmem:[#allocation3 + $0x161] sm:$0x1] %vm335, 0.0
      %369 = vst.msk [vmem:[#allocation3 + $0x179] sm:$0x1] %vm335, 0.0
      %370 = vst.msk [vmem:[#allocation3 + $0x191] sm:$0x1] %vm335, 0.0
      %371 = vst.msk [vmem:[#allocation3 + $0x1a9] sm:$0x1] %vm335, 0.0
      %v372 = vld [vmem:[%s273] sm:$0xf]
      %v373 = vld [vmem:[%s273 + $0x4] sm:$0xf]
      %v374 = vld [vmem:[%s273 + $0x8] sm:$0xf]
      %v375 = vld [vmem:[%s273 + $0xc] sm:$0xf]
      %v376 = vld [vmem:[%s273 + $0x10] sm:$0xf]
      %v377 = vld [vmem:[%s273 + $0x14] sm:$0xf]
      %v378 = vld [vmem:[%s273 + $0x18] sm:$0xf]
      %v379 = vld [vmem:[%s273 + $0x1c] sm:$0xf]
      %v380 = vld [vmem:[%s273 + $0x20] sm:$0xf]
      %v381 = vld [vmem:[%s273 + $0x24] sm:$0xf]
      %v382 = vld [vmem:[%s273 + $0x28] sm:$0xf]
      %v383 = vld [vmem:[%s273 + $0x2c] sm:$0xf]
      %v384 = vld [vmem:[%s273 + $0x30] sm:$0xf]
      %v385 = vld [vmem:[%s273 + $0x34] sm:$0xf]
      %v386 = vld [vmem:[%s273 + $0x38] sm:$0xf]
      %v387 = vld [vmem:[%s273 + $0x3c] sm:$0xf]
      %v388 = vld [vmem:[%s273 + $0x40] sm:$0xf]
      %v389 = vld [vmem:[%s273 + $0x44] sm:$0xf]
      %v390 = vld [vmem:[%s273 + $0x48] sm:$0xf]
      %v391 = vld [vmem:[%s273 + $0x4c] sm:$0xf]
      %v392 = vld [vmem:[%s273 + $0x50] sm:$0xf]
      %v393 = vld [vmem:[%s273 + $0x54] sm:$0xf]
      %v394 = vld [vmem:[%s273 + $0x58] sm:$0xf]
      %v395 = vld [vmem:[%s273 + $0x5c] sm:$0xf]
      %v396 = vld [vmem:[%s273 + $0x60] sm:$0xf]
      %v397 = vld [vmem:[%s273 + $0x64] sm:$0xf]
      %v398 = vld [vmem:[%s273 + $0x68] sm:$0xf]
      %v399 = vld [vmem:[%s273 + $0x6c] sm:$0xf]
      %v400 = vld [vmem:[%s273 + $0x70] sm:$0xf]
      %v401 = vld [vmem:[%s273 + $0x74] sm:$0xf]
      %v402 = vld [vmem:[%s273 + $0x78] sm:$0xf]
      %v403 = vld [vmem:[%s273 + $0x7c] sm:$0xf]
      %v404 = vunpack.c.l.bf16 %v372
      %v405 = vunpack.c.l.bf16 %v373
      %v406 = vunpack.c.l.bf16 %v374
      %v407 = vunpack.c.l.bf16 %v375
      %v408 = vunpack.c.l.bf16 %v376
      %v409 = vunpack.c.l.bf16 %v377
      %v410 = vunpack.c.l.bf16 %v378
      %v411 = vunpack.c.l.bf16 %v379
      %v412 = vunpack.c.l.bf16 %v380
      %v413 = vunpack.c.l.bf16 %v381
      %v414 = vunpack.c.l.bf16 %v382
      %v415 = vunpack.c.l.bf16 %v383
      %v416 = vunpack.c.l.bf16 %v384
      %v417 = vunpack.c.l.bf16 %v385
      %v418 = vunpack.c.l.bf16 %v386
      %v419 = vunpack.c.l.bf16 %v387
      %v420 = vunpack.c.l.bf16 %v388
      %v421 = vunpack.c.l.bf16 %v389
      %v422 = vunpack.c.l.bf16 %v390
      %v423 = vunpack.c.l.bf16 %v391
      %v424 = vunpack.c.l.bf16 %v392
      %v425 = vunpack.c.l.bf16 %v393
      %v426 = vunpack.c.l.bf16 %v394
      %v427 = vunpack.c.l.bf16 %v395
      %v428 = vunpack.c.l.bf16 %v396
      %v429 = vunpack.c.l.bf16 %v397
      %v430 = vunpack.c.l.bf16 %v398
      %v431 = vunpack.c.l.bf16 %v399
      %v432 = vunpack.c.l.bf16 %v400
      %v433 = vunpack.c.l.bf16 %v401
      %v434 = vunpack.c.l.bf16 %v402
      %v435 = vunpack.c.l.bf16 %v403
      %s436 = scalar_lea.vmem [#allocation2], 24
      %437 = vst.msk [vmem:[%s436 + $0x1] sm:$0xff] %vm280, %v404
      %438 = vst.msk [vmem:[%s436 + $0x9] sm:$0xff] %vm280, %v405
      %439 = vst.msk [vmem:[%s436 + $0x19] sm:$0xff] %vm280, %v406
      %440 = vst.msk [vmem:[%s436 + $0x21] sm:$0xff] %vm280, %v407
      %441 = vst.msk [vmem:[%s436 + $0x31] sm:$0xff] %vm280, %v408
      %442 = vst.msk [vmem:[%s436 + $0x39] sm:$0xff] %vm280, %v409
      %443 = vst.msk [vmem:[%s436 + $0x49] sm:$0xff] %vm280, %v410
      %444 = vst.msk [vmem:[%s436 + $0x51] sm:$0xff] %vm280, %v411
      %445 = vst.msk [vmem:[%s436 + $0x61] sm:$0xff] %vm280, %v412
      %446 = vst.msk [vmem:[%s436 + $0x69] sm:$0xff] %vm280, %v413
      %447 = vst.msk [vmem:[%s436 + $0x79] sm:$0xff] %vm280, %v414
      %448 = vst.msk [vmem:[%s436 + $0x81] sm:$0xff] %vm280, %v415
      %449 = vst.msk [vmem:[%s436 + $0x91] sm:$0xff] %vm280, %v416
      %450 = vst.msk [vmem:[%s436 + $0x99] sm:$0xff] %vm280, %v417
      %451 = vst.msk [vmem:[%s436 + $0xa9] sm:$0xff] %vm280, %v418
      %452 = vst.msk [vmem:[%s436 + $0xb1] sm:$0xff] %vm280, %v419
      %453 = vst.msk [vmem:[%s436 + $0xc1] sm:$0xff] %vm280, %v420
      %454 = vst.msk [vmem:[%s436 + $0xc9] sm:$0xff] %vm280, %v421
      %455 = vst.msk [vmem:[%s436 + $0xd9] sm:$0xff] %vm280, %v422
      %456 = vst.msk [vmem:[%s436 + $0xe1] sm:$0xff] %vm280, %v423
      %457 = vst.msk [vmem:[%s436 + $0xf1] sm:$0xff] %vm280, %v424
      %458 = vst.msk [vmem:[%s436 + $0xf9] sm:$0xff] %vm280, %v425
      %459 = vst.msk [vmem:[%s436 + $0x109] sm:$0xff] %vm280, %v426
      %460 = vst.msk [vmem:[%s436 + $0x111] sm:$0xff] %vm280, %v427
      %461 = vst.msk [vmem:[%s436 + $0x121] sm:$0xff] %vm280, %v428
      %462 = vst.msk [vmem:[%s436 + $0x129] sm:$0xff] %vm280, %v429
      %463 = vst.msk [vmem:[%s436 + $0x139] sm:$0xff] %vm280, %v430
      %464 = vst.msk [vmem:[%s436 + $0x141] sm:$0xff] %vm280, %v431
      %465 = vst.msk [vmem:[%s436 + $0x151] sm:$0xff] %vm280, %v432
      %466 = vst.msk [vmem:[%s436 + $0x159] sm:$0xff] %vm280, %v433
      %467 = vst.msk [vmem:[%s436 + $0x169] sm:$0xff] %vm280, %v434
      %468 = vst.msk [vmem:[%s436 + $0x171] sm:$0xff] %vm280, %v435
      %v469 = vld [vmem:[#allocation2] sm:$0xff]
      %v470 = vld [vmem:[#allocation2 + $0x8] sm:$0xff]
      %v471 = vld [vmem:[#allocation2 + $0x10] sm:$0x3]
      %v472 = vld [vmem:[#allocation2 + $0x18] sm:$0xff]
      %v473 = vld [vmem:[#allocation2 + $0x20] sm:$0xff]
      %v474 = vld [vmem:[#allocation2 + $0x28] sm:$0x3]
      %v475 = vld [vmem:[#allocation2 + $0x30] sm:$0xff]
      %v476 = vld [vmem:[#allocation2 + $0x38] sm:$0xff]
      %v477 = vld [vmem:[#allocation2 + $0x40] sm:$0x3]
      %v478 = vld [vmem:[#allocation2 + $0x48] sm:$0xff]
      %v479 = vld [vmem:[#allocation2 + $0x50] sm:$0xff]
      %v480 = vld [vmem:[#allocation2 + $0x58] sm:$0x3]
      %v481 = vld [vmem:[#allocation2 + $0x60] sm:$0xff]
      %v482 = vld [vmem:[#allocation2 + $0x68] sm:$0xff]
      %v483 = vld [vmem:[#allocation2 + $0x70] sm:$0x3]
      %v484 = vld [vmem:[#allocation2 + $0x78] sm:$0xff]
      %v485 = vld [vmem:[#allocation2 + $0x80] sm:$0xff]
      %v486 = vld [vmem:[#allocation2 + $0x88] sm:$0x3]
      %v487 = vld [vmem:[#allocation2 + $0x90] sm:$0xff]
      %v488 = vld [vmem:[#allocation2 + $0x98] sm:$0xff]
      %v489 = vld [vmem:[#allocation2 + $0xa0] sm:$0x3]
      %v490 = vld [vmem:[#allocation2 + $0xa8] sm:$0xff]
      %v491 = vld [vmem:[#allocation2 + $0xb0] sm:$0xff]
      %v492 = vld [vmem:[#allocation2 + $0xb8] sm:$0x3]
      %v493 = vld [vmem:[#allocation2 + $0xc0] sm:$0xff]
      %v494 = vld [vmem:[#allocation2 + $0xc8] sm:$0xff]
      %v495 = vld [vmem:[#allocation2 + $0xd0] sm:$0x3]
      %v496 = vld [vmem:[#allocation2 + $0xd8] sm:$0xff]
      %v497 = vld [vmem:[#allocation2 + $0xe0] sm:$0xff]
      %v498 = vld [vmem:[#allocation2 + $0xe8] sm:$0x3]
      %v499 = vld [vmem:[#allocation2 + $0xf0] sm:$0xff]
      %v500 = vld [vmem:[#allocation2 + $0xf8] sm:$0xff]
      %v501 = vld [vmem:[#allocation2 + $0x100] sm:$0x3]
      %v502 = vld [vmem:[#allocation2 + $0x108] sm:$0xff]
      %v503 = vld [vmem:[#allocation2 + $0x110] sm:$0xff]
      %v504 = vld [vmem:[#allocation2 + $0x118] sm:$0x3]
      %v505 = vld [vmem:[#allocation2 + $0x120] sm:$0xff]
      %v506 = vld [vmem:[#allocation2 + $0x128] sm:$0xff]
      %v507 = vld [vmem:[#allocation2 + $0x130] sm:$0x3]
      %v508 = vld [vmem:[#allocation2 + $0x138] sm:$0xff]
      %v509 = vld [vmem:[#allocation2 + $0x140] sm:$0xff]
      %v510 = vld [vmem:[#allocation2 + $0x148] sm:$0x3]
      %v511 = vld [vmem:[#allocation2 + $0x150] sm:$0xff]
      %v512 = vld [vmem:[#allocation2 + $0x158] sm:$0xff]
      %v513 = vld [vmem:[#allocation2 + $0x160] sm:$0x3]
      %v514 = vld [vmem:[#allocation2 + $0x168] sm:$0xff]
      %v515 = vld [vmem:[#allocation2 + $0x170] sm:$0xff]
      %v516 = vld [vmem:[#allocation2 + $0x178] sm:$0x3]
      %v517 = vld [vmem:[#allocation2 + $0x180] sm:$0xff]
      %v518 = vld [vmem:[#allocation2 + $0x188] sm:$0xff]
      %v519 = vld [vmem:[#allocation2 + $0x190] sm:$0x3]
      %v520 = vld [vmem:[#allocation2 + $0x198] sm:$0xff]
      %v521 = vld [vmem:[#allocation2 + $0x1a0] sm:$0xff]
      %v522 = vld [vmem:[#allocation2 + $0x1a8] sm:$0x3]
      %v523 = vld [vmem:[%s2] sm:$0x1]
      %v524 = vld [vmem:[%s3] sm:$0x1]
      %vm573 = vcmask 1046528
      %v574 = vrot.slane %v469, 1
      %v575 = vrot.slane %v470, 1
      %v576 = vsel %vm573, %v574, %v575
      %v577 = vrot.slane %v471, 1
      %v578 = vsel %vm573, %v575, %v577
      %v579 = vrot.slane %v472, 1
      %v580 = vrot.slane %v473, 1
      %v581 = vsel %vm573, %v579, %v580
      %v582 = vrot.slane %v474, 1
      %v583 = vsel %vm573, %v580, %v582
      %v584 = vrot.slane %v475, 1
      %v585 = vrot.slane %v476, 1
      %v586 = vsel %vm573, %v584, %v585
      %v587 = vrot.slane %v477, 1
      %v588 = vsel %vm573, %v585, %v587
      %v589 = vrot.slane %v478, 1
      %v590 = vrot.slane %v479, 1
      %v591 = vsel %vm573, %v589, %v590
      %v592 = vrot.slane %v480, 1
      %v593 = vsel %vm573, %v590, %v592
      %v594 = vrot.slane %v481, 1
      %v595 = vrot.slane %v482, 1
      %v596 = vsel %vm573, %v594, %v595
      %v597 = vrot.slane %v483, 1
      %v598 = vsel %vm573, %v595, %v597
      %v599 = vrot.slane %v484, 1
      %v600 = vrot.slane %v485, 1
      %v601 = vsel %vm573, %v599, %v600
      %v602 = vrot.slane %v486, 1
      %v603 = vsel %vm573, %v600, %v602
      %v604 = vrot.slane %v487, 1
      %v605 = vrot.slane %v488, 1
      %v606 = vsel %vm573, %v604, %v605
      %v607 = vrot.slane %v489, 1
      %v608 = vsel %vm573, %v605, %v607
      %v609 = vrot.slane %v490, 1
      %v610 = vrot.slane %v491, 1
      %v611 = vsel %vm573, %v609, %v610
      %v612 = vrot.slane %v492, 1
      %v613 = vsel %vm573, %v610, %v612
      %v614 = vrot.slane %v493, 1
      %v615 = vrot.slane %v494, 1
      %v616 = vsel %vm573, %v614, %v615
      %v617 = vrot.slane %v495, 1
      %v618 = vsel %vm573, %v615, %v617
      %v619 = vrot.slane %v496, 1
      %v620 = vrot.slane %v497, 1
      %v621 = vsel %vm573, %v619, %v620
      %v622 = vrot.slane %v498, 1
      %v623 = vsel %vm573, %v620, %v622
      %v624 = vrot.slane %v499, 1
      %v625 = vrot.slane %v500, 1
      %v626 = vsel %vm573, %v624, %v625
      %v627 = vrot.slane %v501, 1
      %v628 = vsel %vm573, %v625, %v627
      %v629 = vrot.slane %v502, 1
      %v630 = vrot.slane %v503, 1
      %v631 = vsel %vm573, %v629, %v630
      %v632 = vrot.slane %v504, 1
      %v633 = vsel %vm573, %v630, %v632
      %v634 = vrot.slane %v505, 1
      %v635 = vrot.slane %v506, 1
      %v636 = vsel %vm573, %v634, %v635
      %v637 = vrot.slane %v507, 1
      %v638 = vsel %vm573, %v635, %v637
      %v639 = vrot.slane %v508, 1
      %v640 = vrot.slane %v509, 1
      %v641 = vsel %vm573, %v639, %v640
      %v642 = vrot.slane %v510, 1
      %v643 = vsel %vm573, %v640, %v642
      %v644 = vrot.slane %v511, 1
      %v645 = vrot.slane %v512, 1
      %v646 = vsel %vm573, %v644, %v645
      %v647 = vrot.slane %v513, 1
      %v648 = vsel %vm573, %v645, %v647
      %v649 = vrot.slane %v514, 1
      %v650 = vrot.slane %v515, 1
      %v651 = vsel %vm573, %v649, %v650
      %v652 = vrot.slane %v516, 1
      %v653 = vsel %vm573, %v650, %v652
      %654 = vrot.lane.b32.xlu0 %v576, 4
      %v655 = vpop.permute.xlu0 %654
      %656 = vrot.lane.b32.xlu0 %v578, 4
      %v657 = vpop.permute.xlu0 %656
      %658 = vrot.lane.b32.xlu0 %v581, 4
      %v659 = vpop.permute.xlu0 %658
      %660 = vrot.lane.b32.xlu0 %v583, 4
      %v661 = vpop.permute.xlu0 %660
      %662 = vrot.lane.b32.xlu0 %v586, 4
      %v663 = vpop.permute.xlu0 %662
      %664 = vrot.lane.b32.xlu0 %v588, 4
      %v665 = vpop.permute.xlu0 %664
      %666 = vrot.lane.b32.xlu0 %v591, 4
      %v667 = vpop.permute.xlu0 %666
      %668 = vrot.lane.b32.xlu0 %v593, 4
      %v669 = vpop.permute.xlu0 %668
      %670 = vrot.lane.b32.xlu0 %v596, 4
      %v671 = vpop.permute.xlu0 %670
      %672 = vrot.lane.b32.xlu0 %v598, 4
      %v673 = vpop.permute.xlu0 %672
      %674 = vrot.lane.b32.xlu0 %v601, 4
      %v675 = vpop.permute.xlu0 %674
      %676 = vrot.lane.b32.xlu0 %v603, 4
      %v677 = vpop.permute.xlu0 %676
      %678 = vrot.lane.b32.xlu0 %v606, 4
      %v679 = vpop.permute.xlu0 %678
      %680 = vrot.lane.b32.xlu0 %v608, 4
      %v681 = vpop.permute.xlu0 %680
      %682 = vrot.lane.b32.xlu0 %v611, 4
      %v683 = vpop.permute.xlu0 %682
      %684 = vrot.lane.b32.xlu0 %v613, 4
      %v685 = vpop.permute.xlu0 %684
      %686 = vrot.lane.b32.xlu0 %v616, 4
      %v687 = vpop.permute.xlu0 %686
      %688 = vrot.lane.b32.xlu0 %v618, 4
      %v689 = vpop.permute.xlu0 %688
      %690 = vrot.lane.b32.xlu0 %v621, 4
      %v691 = vpop.permute.xlu0 %690
      %692 = vrot.lane.b32.xlu0 %v623, 4
      %v693 = vpop.permute.xlu0 %692
      %694 = vrot.lane.b32.xlu0 %v626, 4
      %v695 = vpop.permute.xlu0 %694
      %696 = vrot.lane.b32.xlu0 %v628, 4
      %v697 = vpop.permute.xlu0 %696
      %698 = vrot.lane.b32.xlu0 %v631, 4
      %v699 = vpop.permute.xlu0 %698
      %700 = vrot.lane.b32.xlu0 %v633, 4
      %v701 = vpop.permute.xlu0 %700
      %702 = vrot.lane.b32.xlu0 %v636, 4
      %v703 = vpop.permute.xlu0 %702
      %704 = vrot.lane.b32.xlu0 %v638, 4
      %v705 = vpop.permute.xlu0 %704
      %706 = vrot.lane.b32.xlu0 %v641, 4
      %v707 = vpop.permute.xlu0 %706
      %708 = vrot.lane.b32.xlu0 %v643, 4
      %v709 = vpop.permute.xlu0 %708
      %710 = vrot.lane.b32.xlu0 %v646, 4
      %v711 = vpop.permute.xlu0 %710
      %712 = vrot.lane.b32.xlu0 %v648, 4
      %v713 = vpop.permute.xlu0 %712
      %714 = vrot.lane.b32.xlu0 %v651, 4
      %v715 = vpop.permute.xlu0 %714
      %716 = vrot.lane.b32.xlu0 %v653, 4
      %v717 = vpop.permute.xlu0 %716
      %vm750 = vcmask 1045504
      %v751 = vrot.slane %v469, 2
      %v752 = vrot.slane %v470, 2
      %v753 = vsel %vm750, %v751, %v752
      %v754 = vrot.slane %v471, 2
      %v755 = vsel %vm750, %v752, %v754
      %v756 = vrot.slane %v472, 2
      %v757 = vrot.slane %v473, 2
      %v758 = vsel %vm750, %v756, %v757
      %v759 = vrot.slane %v474, 2
      %v760 = vsel %vm750, %v757, %v759
      %v761 = vrot.slane %v475, 2
      %v762 = vrot.slane %v476, 2
      %v763 = vsel %vm750, %v761, %v762
      %v764 = vrot.slane %v477, 2
      %v765 = vsel %vm750, %v762, %v764
      %v766 = vrot.slane %v478, 2
      %v767 = vrot.slane %v479, 2
      %v768 = vsel %vm750, %v766, %v767
      %v769 = vrot.slane %v480, 2
      %v770 = vsel %vm750, %v767, %v769
      %v771 = vrot.slane %v481, 2
      %v772 = vrot.slane %v482, 2
      %v773 = vsel %vm750, %v771, %v772
      %v774 = vrot.slane %v483, 2
      %v775 = vsel %vm750, %v772, %v774
      %v776 = vrot.slane %v484, 2
      %v777 = vrot.slane %v485, 2
      %v778 = vsel %vm750, %v776, %v777
      %v779 = vrot.slane %v486, 2
      %v780 = vsel %vm750, %v777, %v779
      %v781 = vrot.slane %v487, 2
      %v782 = vrot.slane %v488, 2
      %v783 = vsel %vm750, %v781, %v782
      %v784 = vrot.slane %v489, 2
      %v785 = vsel %vm750, %v782, %v784
      %v786 = vrot.slane %v490, 2
      %v787 = vrot.slane %v491, 2
      %v788 = vsel %vm750, %v786, %v787
      %v789 = vrot.slane %v492, 2
      %v790 = vsel %vm750, %v787, %v789
      %v791 = vrot.slane %v493, 2
      %v792 = vrot.slane %v494, 2
      %v793 = vsel %vm750, %v791, %v792
      %v794 = vrot.slane %v495, 2
      %v795 = vsel %vm750, %v792, %v794
      %v796 = vrot.slane %v496, 2
      %v797 = vrot.slane %v497, 2
      %v798 = vsel %vm750, %v796, %v797
      %v799 = vrot.slane %v498, 2
      %v800 = vsel %vm750, %v797, %v799
      %v801 = vrot.slane %v499, 2
      %v802 = vrot.slane %v500, 2
      %v803 = vsel %vm750, %v801, %v802
      %v804 = vrot.slane %v501, 2
      %v805 = vsel %vm750, %v802, %v804
      %v806 = vrot.slane %v502, 2
      %v807 = vrot.slane %v503, 2
      %v808 = vsel %vm750, %v806, %v807
      %v809 = vrot.slane %v504, 2
      %v810 = vsel %vm750, %v807, %v809
      %v811 = vrot.slane %v505, 2
      %v812 = vrot.slane %v506, 2
      %v813 = vsel %vm750, %v811, %v812
      %v814 = vrot.slane %v507, 2
      %v815 = vsel %vm750, %v812, %v814
      %v816 = vrot.slane %v508, 2
      %v817 = vrot.slane %v509, 2
      %v818 = vsel %vm750, %v816, %v817
      %v819 = vrot.slane %v510, 2
      %v820 = vsel %vm750, %v817, %v819
      %v821 = vrot.slane %v511, 2
      %v822 = vrot.slane %v512, 2
      %v823 = vsel %vm750, %v821, %v822
      %v824 = vrot.slane %v513, 2
      %v825 = vsel %vm750, %v822, %v824
      %v826 = vrot.slane %v514, 2
      %v827 = vrot.slane %v515, 2
      %v828 = vsel %vm750, %v826, %v827
      %v829 = vrot.slane %v516, 2
      %v830 = vsel %vm750, %v827, %v829
      %831 = vrot.lane.b32.xlu0 %v753, 8
      %v832 = vpop.permute.xlu0 %831
      %833 = vrot.lane.b32.xlu0 %v755, 8
      %v834 = vpop.permute.xlu0 %833
      %835 = vrot.lane.b32.xlu0 %v758, 8
      %v836 = vpop.permute.xlu0 %835
      %837 = vrot.lane.b32.xlu0 %v760, 8
      %v838 = vpop.permute.xlu0 %837
      %839 = vrot.lane.b32.xlu0 %v763, 8
      %v840 = vpop.permute.xlu0 %839
      %841 = vrot.lane.b32.xlu0 %v765, 8
      %v842 = vpop.permute.xlu0 %841
      %843 = vrot.lane.b32.xlu0 %v768, 8
      %v844 = vpop.permute.xlu0 %843
      %845 = vrot.lane.b32.xlu0 %v770, 8
      %v846 = vpop.permute.xlu0 %845
      %847 = vrot.lane.b32.xlu0 %v773, 8
      %v848 = vpop.permute.xlu0 %847
      %849 = vrot.lane.b32.xlu0 %v775, 8
      %v850 = vpop.permute.xlu0 %849
      %851 = vrot.lane.b32.xlu0 %v778, 8
      %v852 = vpop.permute.xlu0 %851
      %853 = vrot.lane.b32.xlu0 %v780, 8
      %v854 = vpop.permute.xlu0 %853
      %855 = vrot.lane.b32.xlu0 %v783, 8
      %v856 = vpop.permute.xlu0 %855
      %857 = vrot.lane.b32.xlu0 %v785, 8
      %v858 = vpop.permute.xlu0 %857
      %859 = vrot.lane.b32.xlu0 %v788, 8
      %v860 = vpop.permute.xlu0 %859
      %861 = vrot.lane.b32.xlu0 %v790, 8
      %v862 = vpop.permute.xlu0 %861
      %863 = vrot.lane.b32.xlu0 %v793, 8
      %v864 = vpop.permute.xlu0 %863
      %865 = vrot.lane.b32.xlu0 %v795, 8
      %v866 = vpop.permute.xlu0 %865
      %867 = vrot.lane.b32.xlu0 %v798, 8
      %v868 = vpop.permute.xlu0 %867
      %869 = vrot.lane.b32.xlu0 %v800, 8
      %v870 = vpop.permute.xlu0 %869
      %871 = vrot.lane.b32.xlu0 %v803, 8
      %v872 = vpop.permute.xlu0 %871
      %873 = vrot.lane.b32.xlu0 %v805, 8
      %v874 = vpop.permute.xlu0 %873
      %875 = vrot.lane.b32.xlu0 %v808, 8
      %v876 = vpop.permute.xlu0 %875
      %877 = vrot.lane.b32.xlu0 %v810, 8
      %v878 = vpop.permute.xlu0 %877
      %879 = vrot.lane.b32.xlu0 %v813, 8
      %v880 = vpop.permute.xlu0 %879
      %881 = vrot.lane.b32.xlu0 %v815, 8
      %v882 = vpop.permute.xlu0 %881
      %883 = vrot.lane.b32.xlu0 %v818, 8
      %v884 = vpop.permute.xlu0 %883
      %885 = vrot.lane.b32.xlu0 %v820, 8
      %v886 = vpop.permute.xlu0 %885
      %887 = vrot.lane.b32.xlu0 %v823, 8
      %v888 = vpop.permute.xlu0 %887
      %889 = vrot.lane.b32.xlu0 %v825, 8
      %v890 = vpop.permute.xlu0 %889
      %891 = vrot.lane.b32.xlu0 %v828, 8
      %v892 = vpop.permute.xlu0 %891
      %893 = vrot.lane.b32.xlu0 %v830, 8
      %v894 = vpop.permute.xlu0 %893
      %929 = vrot.lane.b32.xlu0 %v472, 12
      %v930 = vpop.permute.xlu0 %929
      %931 = vrot.lane.b32.xlu0 %v473, 12
      %v932 = vpop.permute.xlu0 %931
      %933 = vrot.lane.b32.xlu0 %v475, 12
      %v934 = vpop.permute.xlu0 %933
      %935 = vrot.lane.b32.xlu0 %v476, 12
      %v936 = vpop.permute.xlu0 %935
      %937 = vrot.lane.b32.xlu0 %v478, 12
      %v938 = vpop.permute.xlu0 %937
      %939 = vrot.lane.b32.xlu0 %v479, 12
      %v940 = vpop.permute.xlu0 %939
      %941 = vrot.lane.b32.xlu0 %v481, 12
      %v942 = vpop.permute.xlu0 %941
      %943 = vrot.lane.b32.xlu0 %v482, 12
      %v944 = vpop.permute.xlu0 %943
      %945 = vrot.lane.b32.xlu0 %v484, 12
      %v946 = vpop.permute.xlu0 %945
      %947 = vrot.lane.b32.xlu0 %v485, 12
      %v948 = vpop.permute.xlu0 %947
      %949 = vrot.lane.b32.xlu0 %v487, 12
      %v950 = vpop.permute.xlu0 %949
      %951 = vrot.lane.b32.xlu0 %v488, 12
      %v952 = vpop.permute.xlu0 %951
      %953 = vrot.lane.b32.xlu0 %v490, 12
      %v954 = vpop.permute.xlu0 %953
      %955 = vrot.lane.b32.xlu0 %v491, 12
      %v956 = vpop.permute.xlu0 %955
      %957 = vrot.lane.b32.xlu0 %v493, 12
      %v958 = vpop.permute.xlu0 %957
      %959 = vrot.lane.b32.xlu0 %v494, 12
      %v960 = vpop.permute.xlu0 %959
      %961 = vrot.lane.b32.xlu0 %v496, 12
      %v962 = vpop.permute.xlu0 %961
      %963 = vrot.lane.b32.xlu0 %v497, 12
      %v964 = vpop.permute.xlu0 %963
      %965 = vrot.lane.b32.xlu0 %v499, 12
      %v966 = vpop.permute.xlu0 %965
      %967 = vrot.lane.b32.xlu0 %v500, 12
      %v968 = vpop.permute.xlu0 %967
      %969 = vrot.lane.b32.xlu0 %v502, 12
      %v970 = vpop.permute.xlu0 %969
      %971 = vrot.lane.b32.xlu0 %v503, 12
      %v972 = vpop.permute.xlu0 %971
      %973 = vrot.lane.b32.xlu0 %v505, 12
      %v974 = vpop.permute.xlu0 %973
      %975 = vrot.lane.b32.xlu0 %v506, 12
      %v976 = vpop.permute.xlu0 %975
      %977 = vrot.lane.b32.xlu0 %v508, 12
      %v978 = vpop.permute.xlu0 %977
      %979 = vrot.lane.b32.xlu0 %v509, 12
      %v980 = vpop.permute.xlu0 %979
      %981 = vrot.lane.b32.xlu0 %v511, 12
      %v982 = vpop.permute.xlu0 %981
      %983 = vrot.lane.b32.xlu0 %v512, 12
      %v984 = vpop.permute.xlu0 %983
      %985 = vrot.lane.b32.xlu0 %v514, 12
      %v986 = vpop.permute.xlu0 %985
      %987 = vrot.lane.b32.xlu0 %v515, 12
      %v988 = vpop.permute.xlu0 %987
      %989 = vrot.lane.b32.xlu0 %v517, 12
      %v990 = vpop.permute.xlu0 %989
      %991 = vrot.lane.b32.xlu0 %v518, 12
      %v992 = vpop.permute.xlu0 %991
      %v1026 = vrot.slane %v517, 1
      %v1027 = vrot.slane %v518, 1
      %v1028 = vsel %vm573, %v1026, %v1027
      %v1029 = vrot.slane %v519, 1
      %v1030 = vsel %vm573, %v1027, %v1029
      %1031 = vrot.lane.b32.xlu0 %v581, 16
      %v1032 = vpop.permute.xlu0 %1031
      %1033 = vrot.lane.b32.xlu0 %v583, 16
      %v1034 = vpop.permute.xlu0 %1033
      %1035 = vrot.lane.b32.xlu0 %v586, 16
      %v1036 = vpop.permute.xlu0 %1035
      %1037 = vrot.lane.b32.xlu0 %v588, 16
      %v1038 = vpop.permute.xlu0 %1037
      %1039 = vrot.lane.b32.xlu0 %v591, 16
      %v1040 = vpop.permute.xlu0 %1039
      %1041 = vrot.lane.b32.xlu0 %v593, 16
      %v1042 = vpop.permute.xlu0 %1041
      %1043 = vrot.lane.b32.xlu0 %v596, 16
      %v1044 = vpop.permute.xlu0 %1043
      %1045 = vrot.lane.b32.xlu0 %v598, 16
      %v1046 = vpop.permute.xlu0 %1045
      %1047 = vrot.lane.b32.xlu0 %v601, 16
      %v1048 = vpop.permute.xlu0 %1047
      %1049 = vrot.lane.b32.xlu0 %v603, 16
      %v1050 = vpop.permute.xlu0 %1049
      %1051 = vrot.lane.b32.xlu0 %v606, 16
      %v1052 = vpop.permute.xlu0 %1051
      %1053 = vrot.lane.b32.xlu0 %v608, 16
      %v1054 = vpop.permute.xlu0 %1053
      %1055 = vrot.lane.b32.xlu0 %v611, 16
      %v1056 = vpop.permute.xlu0 %1055
      %1057 = vrot.lane.b32.xlu0 %v613, 16
      %v1058 = vpop.permute.xlu0 %1057
      %1059 = vrot.lane.b32.xlu0 %v616, 16
      %v1060 = vpop.permute.xlu0 %1059
      %1061 = vrot.lane.b32.xlu0 %v618, 16
      %v1062 = vpop.permute.xlu0 %1061
      %1063 = vrot.lane.b32.xlu0 %v621, 16
      %v1064 = vpop.permute.xlu0 %1063
      %1065 = vrot.lane.b32.xlu0 %v623, 16
      %v1066 = vpop.permute.xlu0 %1065
      %1067 = vrot.lane.b32.xlu0 %v626, 16
      %v1068 = vpop.permute.xlu0 %1067
      %1069 = vrot.lane.b32.xlu0 %v628, 16
      %v1070 = vpop.permute.xlu0 %1069
      %1071 = vrot.lane.b32.xlu0 %v631, 16
      %v1072 = vpop.permute.xlu0 %1071
      %1073 = vrot.lane.b32.xlu0 %v633, 16
      %v1074 = vpop.permute.xlu0 %1073
      %1075 = vrot.lane.b32.xlu0 %v636, 16
      %v1076 = vpop.permute.xlu0 %1075
      %1077 = vrot.lane.b32.xlu0 %v638, 16
      %v1078 = vpop.permute.xlu0 %1077
      %1079 = vrot.lane.b32.xlu0 %v641, 16
      %v1080 = vpop.permute.xlu0 %1079
      %1081 = vrot.lane.b32.xlu0 %v643, 16
      %v1082 = vpop.permute.xlu0 %1081
      %1083 = vrot.lane.b32.xlu0 %v646, 16
      %v1084 = vpop.permute.xlu0 %1083
      %1085 = vrot.lane.b32.xlu0 %v648, 16
      %v1086 = vpop.permute.xlu0 %1085
      %1087 = vrot.lane.b32.xlu0 %v651, 16
      %v1088 = vpop.permute.xlu0 %1087
      %1089 = vrot.lane.b32.xlu0 %v653, 16
      %v1090 = vpop.permute.xlu0 %1089
      %1091 = vrot.lane.b32.xlu0 %v1028, 16
      %v1092 = vpop.permute.xlu0 %1091
      %1093 = vrot.lane.b32.xlu0 %v1030, 16
      %v1094 = vpop.permute.xlu0 %1093
      %v1127 = vrot.slane %v517, 2
      %v1128 = vrot.slane %v518, 2
      %v1129 = vsel %vm750, %v1127, %v1128
      %v1130 = vrot.slane %v519, 2
      %v1131 = vsel %vm750, %v1128, %v1130
      %1132 = vrot.lane.b32.xlu0 %v758, 20
      %v1133 = vpop.permute.xlu0 %1132
      %1134 = vrot.lane.b32.xlu0 %v760, 20
      %v1135 = vpop.permute.xlu0 %1134
      %1136 = vrot.lane.b32.xlu0 %v763, 20
      %v1137 = vpop.permute.xlu0 %1136
      %1138 = vrot.lane.b32.xlu0 %v765, 20
      %v1139 = vpop.permute.xlu0 %1138
      %1140 = vrot.lane.b32.xlu0 %v768, 20
      %v1141 = vpop.permute.xlu0 %1140
      %1142 = vrot.lane.b32.xlu0 %v770, 20
      %v1143 = vpop.permute.xlu0 %1142
      %1144 = vrot.lane.b32.xlu0 %v773, 20
      %v1145 = vpop.permute.xlu0 %1144
      %1146 = vrot.lane.b32.xlu0 %v775, 20
      %v1147 = vpop.permute.xlu0 %1146
      %1148 = vrot.lane.b32.xlu0 %v778, 20
      %v1149 = vpop.permute.xlu0 %1148
      %1150 = vrot.lane.b32.xlu0 %v780, 20
      %v1151 = vpop.permute.xlu0 %1150
      %1152 = vrot.lane.b32.xlu0 %v783, 20
      %v1153 = vpop.permute.xlu0 %1152
      %1154 = vrot.lane.b32.xlu0 %v785, 20
      %v1155 = vpop.permute.xlu0 %1154
      %1156 = vrot.lane.b32.xlu0 %v788, 20
      %v1157 = vpop.permute.xlu0 %1156
      %1158 = vrot.lane.b32.xlu0 %v790, 20
      %v1159 = vpop.permute.xlu0 %1158
      %1160 = vrot.lane.b32.xlu0 %v793, 20
      %v1161 = vpop.permute.xlu0 %1160
      %1162 = vrot.lane.b32.xlu0 %v795, 20
      %v1163 = vpop.permute.xlu0 %1162
      %1164 = vrot.lane.b32.xlu0 %v798, 20
      %v1165 = vpop.permute.xlu0 %1164
      %1166 = vrot.lane.b32.xlu0 %v800, 20
      %v1167 = vpop.permute.xlu0 %1166
      %1168 = vrot.lane.b32.xlu0 %v803, 20
      %v1169 = vpop.permute.xlu0 %1168
      %1170 = vrot.lane.b32.xlu0 %v805, 20
      %v1171 = vpop.permute.xlu0 %1170
      %1172 = vrot.lane.b32.xlu0 %v808, 20
      %v1173 = vpop.permute.xlu0 %1172
      %1174 = vrot.lane.b32.xlu0 %v810, 20
      %v1175 = vpop.permute.xlu0 %1174
      %1176 = vrot.lane.b32.xlu0 %v813, 20
      %v1177 = vpop.permute.xlu0 %1176
      %1178 = vrot.lane.b32.xlu0 %v815, 20
      %v1179 = vpop.permute.xlu0 %1178
      %1180 = vrot.lane.b32.xlu0 %v818, 20
      %v1181 = vpop.permute.xlu0 %1180
      %1182 = vrot.lane.b32.xlu0 %v820, 20
      %v1183 = vpop.permute.xlu0 %1182
      %1184 = vrot.lane.b32.xlu0 %v823, 20
      %v1185 = vpop.permute.xlu0 %1184
      %1186 = vrot.lane.b32.xlu0 %v825, 20
      %v1187 = vpop.permute.xlu0 %1186
      %1188 = vrot.lane.b32.xlu0 %v828, 20
      %v1189 = vpop.permute.xlu0 %1188
      %1190 = vrot.lane.b32.xlu0 %v830, 20
      %v1191 = vpop.permute.xlu0 %1190
      %1192 = vrot.lane.b32.xlu0 %v1129, 20
      %v1193 = vpop.permute.xlu0 %1192
      %1194 = vrot.lane.b32.xlu0 %v1131, 20
      %v1195 = vpop.permute.xlu0 %1194
      %1230 = vrot.lane.b32.xlu0 %v475, 24
      %v1231 = vpop.permute.xlu0 %1230
      %1232 = vrot.lane.b32.xlu0 %v476, 24
      %v1233 = vpop.permute.xlu0 %1232
      %1234 = vrot.lane.b32.xlu0 %v478, 24
      %v1235 = vpop.permute.xlu0 %1234
      %1236 = vrot.lane.b32.xlu0 %v479, 24
      %v1237 = vpop.permute.xlu0 %1236
      %1238 = vrot.lane.b32.xlu0 %v481, 24
      %v1239 = vpop.permute.xlu0 %1238
      %1240 = vrot.lane.b32.xlu0 %v482, 24
      %v1241 = vpop.permute.xlu0 %1240
      %1242 = vrot.lane.b32.xlu0 %v484, 24
      %v1243 = vpop.permute.xlu0 %1242
      %1244 = vrot.lane.b32.xlu0 %v485, 24
      %v1245 = vpop.permute.xlu0 %1244
      %1246 = vrot.lane.b32.xlu0 %v487, 24
      %v1247 = vpop.permute.xlu0 %1246
      %1248 = vrot.lane.b32.xlu0 %v488, 24
      %v1249 = vpop.permute.xlu0 %1248
      %1250 = vrot.lane.b32.xlu0 %v490, 24
      %v1251 = vpop.permute.xlu0 %1250
      %1252 = vrot.lane.b32.xlu0 %v491, 24
      %v1253 = vpop.permute.xlu0 %1252
      %1254 = vrot.lane.b32.xlu0 %v493, 24
      %v1255 = vpop.permute.xlu0 %1254
      %1256 = vrot.lane.b32.xlu0 %v494, 24
      %v1257 = vpop.permute.xlu0 %1256
      %1258 = vrot.lane.b32.xlu0 %v496, 24
      %v1259 = vpop.permute.xlu0 %1258
      %1260 = vrot.lane.b32.xlu0 %v497, 24
      %v1261 = vpop.permute.xlu0 %1260
      %1262 = vrot.lane.b32.xlu0 %v499, 24
      %v1263 = vpop.permute.xlu0 %1262
      %1264 = vrot.lane.b32.xlu0 %v500, 24
      %v1265 = vpop.permute.xlu0 %1264
      %1266 = vrot.lane.b32.xlu0 %v502, 24
      %v1267 = vpop.permute.xlu0 %1266
      %1268 = vrot.lane.b32.xlu0 %v503, 24
      %v1269 = vpop.permute.xlu0 %1268
      %1270 = vrot.lane.b32.xlu0 %v505, 24
      %v1271 = vpop.permute.xlu0 %1270
      %1272 = vrot.lane.b32.xlu0 %v506, 24
      %v1273 = vpop.permute.xlu0 %1272
      %1274 = vrot.lane.b32.xlu0 %v508, 24
      %v1275 = vpop.permute.xlu0 %1274
      %1276 = vrot.lane.b32.xlu0 %v509, 24
      %v1277 = vpop.permute.xlu0 %1276
      %1278 = vrot.lane.b32.xlu0 %v511, 24
      %v1279 = vpop.permute.xlu0 %1278
      %1280 = vrot.lane.b32.xlu0 %v512, 24
      %v1281 = vpop.permute.xlu0 %1280
      %1282 = vrot.lane.b32.xlu0 %v514, 24
      %v1283 = vpop.permute.xlu0 %1282
      %1284 = vrot.lane.b32.xlu0 %v515, 24
      %v1285 = vpop.permute.xlu0 %1284
      %1286 = vrot.lane.b32.xlu0 %v517, 24
      %v1287 = vpop.permute.xlu0 %1286
      %1288 = vrot.lane.b32.xlu0 %v518, 24
      %v1289 = vpop.permute.xlu0 %1288
      %1290 = vrot.lane.b32.xlu0 %v520, 24
      %v1291 = vpop.permute.xlu0 %1290
      %1292 = vrot.lane.b32.xlu0 %v521, 24
      %v1293 = vpop.permute.xlu0 %1292
      %v1327 = vrot.slane %v520, 1
      %v1328 = vrot.slane %v521, 1
      %v1329 = vsel %vm573, %v1327, %v1328
      %v1330 = vrot.slane %v522, 1
      %v1331 = vsel %vm573, %v1328, %v1330
      %1332 = vrot.lane.b32.xlu0 %v586, 28
      %v1333 = vpop.permute.xlu0 %1332
      %1334 = vrot.lane.b32.xlu0 %v588, 28
      %v1335 = vpop.permute.xlu0 %1334
      %1336 = vrot.lane.b32.xlu0 %v591, 28
      %v1337 = vpop.permute.xlu0 %1336
      %1338 = vrot.lane.b32.xlu0 %v593, 28
      %v1339 = vpop.permute.xlu0 %1338
      %1340 = vrot.lane.b32.xlu0 %v596, 28
      %v1341 = vpop.permute.xlu0 %1340
      %1342 = vrot.lane.b32.xlu0 %v598, 28
      %v1343 = vpop.permute.xlu0 %1342
      %1344 = vrot.lane.b32.xlu0 %v601, 28
      %v1345 = vpop.permute.xlu0 %1344
      %1346 = vrot.lane.b32.xlu0 %v603, 28
      %v1347 = vpop.permute.xlu0 %1346
      %1348 = vrot.lane.b32.xlu0 %v606, 28
      %v1349 = vpop.permute.xlu0 %1348
      %1350 = vrot.lane.b32.xlu0 %v608, 28
      %v1351 = vpop.permute.xlu0 %1350
      %1352 = vrot.lane.b32.xlu0 %v611, 28
      %v1353 = vpop.permute.xlu0 %1352
      %1354 = vrot.lane.b32.xlu0 %v613, 28
      %v1355 = vpop.permute.xlu0 %1354
      %1356 = vrot.lane.b32.xlu0 %v616, 28
      %v1357 = vpop.permute.xlu0 %1356
      %1358 = vrot.lane.b32.xlu0 %v618, 28
      %v1359 = vpop.permute.xlu0 %1358
      %1360 = vrot.lane.b32.xlu0 %v621, 28
      %v1361 = vpop.permute.xlu0 %1360
      %1362 = vrot.lane.b32.xlu0 %v623, 28
      %v1363 = vpop.permute.xlu0 %1362
      %1364 = vrot.lane.b32.xlu0 %v626, 28
      %v1365 = vpop.permute.xlu0 %1364
      %1366 = vrot.lane.b32.xlu0 %v628, 28
      %v1367 = vpop.permute.xlu0 %1366
      %1368 = vrot.lane.b32.xlu0 %v631, 28
      %v1369 = vpop.permute.xlu0 %1368
      %1370 = vrot.lane.b32.xlu0 %v633, 28
      %v1371 = vpop.permute.xlu0 %1370
      %1372 = vrot.lane.b32.xlu0 %v636, 28
      %v1373 = vpop.permute.xlu0 %1372
      %1374 = vrot.lane.b32.xlu0 %v638, 28
      %v1375 = vpop.permute.xlu0 %1374
      %1376 = vrot.lane.b32.xlu0 %v641, 28
      %v1377 = vpop.permute.xlu0 %1376
      %1378 = vrot.lane.b32.xlu0 %v643, 28
      %v1379 = vpop.permute.xlu0 %1378
      %1380 = vrot.lane.b32.xlu0 %v646, 28
      %v1381 = vpop.permute.xlu0 %1380
      %1382 = vrot.lane.b32.xlu0 %v648, 28
      %v1383 = vpop.permute.xlu0 %1382
      %1384 = vrot.lane.b32.xlu0 %v651, 28
      %v1385 = vpop.permute.xlu0 %1384
      %1386 = vrot.lane.b32.xlu0 %v653, 28
      %v1387 = vpop.permute.xlu0 %1386
      %1388 = vrot.lane.b32.xlu0 %v1028, 28
      %v1389 = vpop.permute.xlu0 %1388
      %1390 = vrot.lane.b32.xlu0 %v1030, 28
      %v1391 = vpop.permute.xlu0 %1390
      %1392 = vrot.lane.b32.xlu0 %v1329, 28
      %v1393 = vpop.permute.xlu0 %1392
      %1394 = vrot.lane.b32.xlu0 %v1331, 28
      %v1395 = vpop.permute.xlu0 %1394
      %v1428 = vrot.slane %v520, 2
      %v1429 = vrot.slane %v521, 2
      %v1430 = vsel %vm750, %v1428, %v1429
      %v1431 = vrot.slane %v522, 2
      %v1432 = vsel %vm750, %v1429, %v1431
      %1433 = vrot.lane.b32.xlu0 %v763, 32
      %v1434 = vpop.permute.xlu0 %1433
      %1435 = vrot.lane.b32.xlu0 %v765, 32
      %v1436 = vpop.permute.xlu0 %1435
      %1437 = vrot.lane.b32.xlu0 %v768, 32
      %v1438 = vpop.permute.xlu0 %1437
      %1439 = vrot.lane.b32.xlu0 %v770, 32
      %v1440 = vpop.permute.xlu0 %1439
      %1441 = vrot.lane.b32.xlu0 %v773, 32
      %v1442 = vpop.permute.xlu0 %1441
      %1443 = vrot.lane.b32.xlu0 %v775, 32
      %v1444 = vpop.permute.xlu0 %1443
      %1445 = vrot.lane.b32.xlu0 %v778, 32
      %v1446 = vpop.permute.xlu0 %1445
      %1447 = vrot.lane.b32.xlu0 %v780, 32
      %v1448 = vpop.permute.xlu0 %1447
      %1449 = vrot.lane.b32.xlu0 %v783, 32
      %v1450 = vpop.permute.xlu0 %1449
      %1451 = vrot.lane.b32.xlu0 %v785, 32
      %v1452 = vpop.permute.xlu0 %1451
      %1453 = vrot.lane.b32.xlu0 %v788, 32
      %v1454 = vpop.permute.xlu0 %1453
      %1455 = vrot.lane.b32.xlu0 %v790, 32
      %v1456 = vpop.permute.xlu0 %1455
      %1457 = vrot.lane.b32.xlu0 %v793, 32
      %v1458 = vpop.permute.xlu0 %1457
      %1459 = vrot.lane.b32.xlu0 %v795, 32
      %v1460 = vpop.permute.xlu0 %1459
      %1461 = vrot.lane.b32.xlu0 %v798, 32
      %v1462 = vpop.permute.xlu0 %1461
      %1463 = vrot.lane.b32.xlu0 %v800, 32
      %v1464 = vpop.permute.xlu0 %1463
      %1465 = vrot.lane.b32.xlu0 %v803, 32
      %v1466 = vpop.permute.xlu0 %1465
      %1467 = vrot.lane.b32.xlu0 %v805, 32
      %v1468 = vpop.permute.xlu0 %1467
      %1469 = vrot.lane.b32.xlu0 %v808, 32
      %v1470 = vpop.permute.xlu0 %1469
      %1471 = vrot.lane.b32.xlu0 %v810, 32
      %v1472 = vpop.permute.xlu0 %1471
      %1473 = vrot.lane.b32.xlu0 %v813, 32
      %v1474 = vpop.permute.xlu0 %1473
      %1475 = vrot.lane.b32.xlu0 %v815, 32
      %v1476 = vpop.permute.xlu0 %1475
      %1477 = vrot.lane.b32.xlu0 %v818, 32
      %v1478 = vpop.permute.xlu0 %1477
      %1479 = vrot.lane.b32.xlu0 %v820, 32
      %v1480 = vpop.permute.xlu0 %1479
      %1481 = vrot.lane.b32.xlu0 %v823, 32
      %v1482 = vpop.permute.xlu0 %1481
      %1483 = vrot.lane.b32.xlu0 %v825, 32
      %v1484 = vpop.permute.xlu0 %1483
      %1485 = vrot.lane.b32.xlu0 %v828, 32
      %v1486 = vpop.permute.xlu0 %1485
      %1487 = vrot.lane.b32.xlu0 %v830, 32
      %v1488 = vpop.permute.xlu0 %1487
      %1489 = vrot.lane.b32.xlu0 %v1129, 32
      %v1490 = vpop.permute.xlu0 %1489
      %1491 = vrot.lane.b32.xlu0 %v1131, 32
      %v1492 = vpop.permute.xlu0 %1491
      %1493 = vrot.lane.b32.xlu0 %v1430, 32
      %v1494 = vpop.permute.xlu0 %1493
      %1495 = vrot.lane.b32.xlu0 %v1432, 32
      %v1496 = vpop.permute.xlu0 %1495
      %v1529 = vsel %vm280, %v469, %v655
      %v1530 = vsel %vm280, %v470, %v657
      %v1531 = vsel %vm280, %v472, %v659
      %v1532 = vsel %vm280, %v473, %v661
      %v1533 = vsel %vm280, %v475, %v663
      %v1534 = vsel %vm280, %v476, %v665
      %v1535 = vsel %vm280, %v478, %v667
      %v1536 = vsel %vm280, %v479, %v669
      %v1537 = vsel %vm280, %v481, %v671
      %v1538 = vsel %vm280, %v482, %v673
      %v1539 = vsel %vm280, %v484, %v675
      %v1540 = vsel %vm280, %v485, %v677
      %v1541 = vsel %vm280, %v487, %v679
      %v1542 = vsel %vm280, %v488, %v681
      %v1543 = vsel %vm280, %v490, %v683
      %v1544 = vsel %vm280, %v491, %v685
      %v1545 = vsel %vm280, %v493, %v687
      %v1546 = vsel %vm280, %v494, %v689
      %v1547 = vsel %vm280, %v496, %v691
      %v1548 = vsel %vm280, %v497, %v693
      %v1549 = vsel %vm280, %v499, %v695
      %v1550 = vsel %vm280, %v500, %v697
      %v1551 = vsel %vm280, %v502, %v699
      %v1552 = vsel %vm280, %v503, %v701
      %v1553 = vsel %vm280, %v505, %v703
      %v1554 = vsel %vm280, %v506, %v705
      %v1555 = vsel %vm280, %v508, %v707
      %v1556 = vsel %vm280, %v509, %v709
      %v1557 = vsel %vm280, %v511, %v711
      %v1558 = vsel %vm280, %v512, %v713
      %v1559 = vsel %vm280, %v514, %v715
      %v1560 = vsel %vm280, %v515, %v717
      %v1561 = vsel %vm326, %v1529, %v832
      %v1562 = vsel %vm326, %v1530, %v834
      %v1563 = vsel %vm326, %v1531, %v836
      %v1564 = vsel %vm326, %v1532, %v838
      %v1565 = vsel %vm326, %v1533, %v840
      %v1566 = vsel %vm326, %v1534, %v842
      %v1567 = vsel %vm326, %v1535, %v844
      %v1568 = vsel %vm326, %v1536, %v846
      %v1569 = vsel %vm326, %v1537, %v848
      %v1570 = vsel %vm326, %v1538, %v850
      %v1571 = vsel %vm326, %v1539, %v852
      %v1572 = vsel %vm326, %v1540, %v854
      %v1573 = vsel %vm326, %v1541, %v856
      %v1574 = vsel %vm326, %v1542, %v858
      %v1575 = vsel %vm326, %v1543, %v860
      %v1576 = vsel %vm326, %v1544, %v862
      %v1577 = vsel %vm326, %v1545, %v864
      %v1578 = vsel %vm326, %v1546, %v866
      %v1579 = vsel %vm326, %v1547, %v868
      %v1580 = vsel %vm326, %v1548, %v870
      %v1581 = vsel %vm326, %v1549, %v872
      %v1582 = vsel %vm326, %v1550, %v874
      %v1583 = vsel %vm326, %v1551, %v876
      %v1584 = vsel %vm326, %v1552, %v878
      %v1585 = vsel %vm326, %v1553, %v880
      %v1586 = vsel %vm326, %v1554, %v882
      %v1587 = vsel %vm326, %v1555, %v884
      %v1588 = vsel %vm326, %v1556, %v886
      %v1589 = vsel %vm326, %v1557, %v888
      %v1590 = vsel %vm326, %v1558, %v890
      %v1591 = vsel %vm326, %v1559, %v892
      %v1592 = vsel %vm326, %v1560, %v894
      %vm1593 = vcmask 97280
      %v1594 = vsel %vm1593, %v1561, %v930
      %v1595 = vsel %vm1593, %v1562, %v932
      %v1596 = vsel %vm1593, %v1563, %v934
      %v1597 = vsel %vm1593, %v1564, %v936
      %v1598 = vsel %vm1593, %v1565, %v938
      %v1599 = vsel %vm1593, %v1566, %v940
      %v1600 = vsel %vm1593, %v1567, %v942
      %v1601 = vsel %vm1593, %v1568, %v944
      %v1602 = vsel %vm1593, %v1569, %v946
      %v1603 = vsel %vm1593, %v1570, %v948
      %v1604 = vsel %vm1593, %v1571, %v950
      %v1605 = vsel %vm1593, %v1572, %v952
      %v1606 = vsel %vm1593, %v1573, %v954
      %v1607 = vsel %vm1593, %v1574, %v956
      %v1608 = vsel %vm1593, %v1575, %v958
      %v1609 = vsel %vm1593, %v1576, %v960
      %v1610 = vsel %vm1593, %v1577, %v962
      %v1611 = vsel %vm1593, %v1578, %v964
      %v1612 = vsel %vm1593, %v1579, %v966
      %v1613 = vsel %vm1593, %v1580, %v968
      %v1614 = vsel %vm1593, %v1581, %v970
      %v1615 = vsel %vm1593, %v1582, %v972
      %v1616 = vsel %vm1593, %v1583, %v974
      %v1617 = vsel %vm1593, %v1584, %v976
      %v1618 = vsel %vm1593, %v1585, %v978
      %v1619 = vsel %vm1593, %v1586, %v980
      %v1620 = vsel %vm1593, %v1587, %v982
      %v1621 = vsel %vm1593, %v1588, %v984
      %v1622 = vsel %vm1593, %v1589, %v986
      %v1623 = vsel %vm1593, %v1590, %v988
      %v1624 = vsel %vm1593, %v1591, %v990
      %v1625 = vsel %vm1593, %v1592, %v992
      %vm1626 = vcmask 130048
      %v1627 = vsel %vm1626, %v1594, %v1032
      %v1628 = vsel %vm1626, %v1595, %v1034
      %v1629 = vsel %vm1626, %v1596, %v1036
      %v1630 = vsel %vm1626, %v1597, %v1038
      %v1631 = vsel %vm1626, %v1598, %v1040
      %v1632 = vsel %vm1626, %v1599, %v1042
      %v1633 = vsel %vm1626, %v1600, %v1044
      %v1634 = vsel %vm1626, %v1601, %v1046
      %v1635 = vsel %vm1626, %v1602, %v1048
      %v1636 = vsel %vm1626, %v1603, %v1050
      %v1637 = vsel %vm1626, %v1604, %v1052
      %v1638 = vsel %vm1626, %v1605, %v1054
      %v1639 = vsel %vm1626, %v1606, %v1056
      %v1640 = vsel %vm1626, %v1607, %v1058
      %v1641 = vsel %vm1626, %v1608, %v1060
      %v1642 = vsel %vm1626, %v1609, %v1062
      %v1643 = vsel %vm1626, %v1610, %v1064
      %v1644 = vsel %vm1626, %v1611, %v1066
      %v1645 = vsel %vm1626, %v1612, %v1068
      %v1646 = vsel %vm1626, %v1613, %v1070
      %v1647 = vsel %vm1626, %v1614, %v1072
      %v1648 = vsel %vm1626, %v1615, %v1074
      %v1649 = vsel %vm1626, %v1616, %v1076
      %v1650 = vsel %vm1626, %v1617, %v1078
      %v1651 = vsel %vm1626, %v1618, %v1080
      %v1652 = vsel %vm1626, %v1619, %v1082
      %v1653 = vsel %vm1626, %v1620, %v1084
      %v1654 = vsel %vm1626, %v1621, %v1086
      %v1655 = vsel %vm1626, %v1622, %v1088
      %v1656 = vsel %vm1626, %v1623, %v1090
      %v1657 = vsel %vm1626, %v1624, %v1092
      %v1658 = vsel %vm1626, %v1625, %v1094
      %vm1659 = vcmask 162816
      %v1660 = vsel %vm1659, %v1627, %v1133
      %v1661 = vsel %vm1659, %v1628, %v1135
      %v1662 = vsel %vm1659, %v1629, %v1137
      %v1663 = vsel %vm1659, %v1630, %v1139
      %v1664 = vsel %vm1659, %v1631, %v1141
      %v1665 = vsel %vm1659, %v1632, %v1143
      %v1666 = vsel %vm1659, %v1633, %v1145
      %v1667 = vsel %vm1659, %v1634, %v1147
      %v1668 = vsel %vm1659, %v1635, %v1149
      %v1669 = vsel %vm1659, %v1636, %v1151
      %v1670 = vsel %vm1659, %v1637, %v1153
      %v1671 = vsel %vm1659, %v1638, %v1155
      %v1672 = vsel %vm1659, %v1639, %v1157
      %v1673 = vsel %vm1659, %v1640, %v1159
      %v1674 = vsel %vm1659, %v1641, %v1161
      %v1675 = vsel %vm1659, %v1642, %v1163
      %v1676 = vsel %vm1659, %v1643, %v1165
      %v1677 = vsel %vm1659, %v1644, %v1167
      %v1678 = vsel %vm1659, %v1645, %v1169
      %v1679 = vsel %vm1659, %v1646, %v1171
      %v1680 = vsel %vm1659, %v1647, %v1173
      %v1681 = vsel %vm1659, %v1648, %v1175
      %v1682 = vsel %vm1659, %v1649, %v1177
      %v1683 = vsel %vm1659, %v1650, %v1179
      %v1684 = vsel %vm1659, %v1651, %v1181
      %v1685 = vsel %vm1659, %v1652, %v1183
      %v1686 = vsel %vm1659, %v1653, %v1185
      %v1687 = vsel %vm1659, %v1654, %v1187
      %v1688 = vsel %vm1659, %v1655, %v1189
      %v1689 = vsel %vm1659, %v1656, %v1191
      %v1690 = vsel %vm1659, %v1657, %v1193
      %v1691 = vsel %vm1659, %v1658, %v1195
      %vm1692 = vcmask 195584
      %v1693 = vsel %vm1692, %v1660, %v1231
      %v1694 = vsel %vm1692, %v1661, %v1233
      %v1695 = vsel %vm1692, %v1662, %v1235
      %v1696 = vsel %vm1692, %v1663, %v1237
      %v1697 = vsel %vm1692, %v1664, %v1239
      %v1698 = vsel %vm1692, %v1665, %v1241
      %v1699 = vsel %vm1692, %v1666, %v1243
      %v1700 = vsel %vm1692, %v1667, %v1245
      %v1701 = vsel %vm1692, %v1668, %v1247
      %v1702 = vsel %vm1692, %v1669, %v1249
      %v1703 = vsel %vm1692, %v1670, %v1251
      %v1704 = vsel %vm1692, %v1671, %v1253
      %v1705 = vsel %vm1692, %v1672, %v1255
      %v1706 = vsel %vm1692, %v1673, %v1257
      %v1707 = vsel %vm1692, %v1674, %v1259
      %v1708 = vsel %vm1692, %v1675, %v1261
      %v1709 = vsel %vm1692, %v1676, %v1263
      %v1710 = vsel %vm1692, %v1677, %v1265
      %v1711 = vsel %vm1692, %v1678, %v1267
      %v1712 = vsel %vm1692, %v1679, %v1269
      %v1713 = vsel %vm1692, %v1680, %v1271
      %v1714 = vsel %vm1692, %v1681, %v1273
      %v1715 = vsel %vm1692, %v1682, %v1275
      %v1716 = vsel %vm1692, %v1683, %v1277
      %v1717 = vsel %vm1692, %v1684, %v1279
      %v1718 = vsel %vm1692, %v1685, %v1281
      %v1719 = vsel %vm1692, %v1686, %v1283
      %v1720 = vsel %vm1692, %v1687, %v1285
      %v1721 = vsel %vm1692, %v1688, %v1287
      %v1722 = vsel %vm1692, %v1689, %v1289
      %v1723 = vsel %vm1692, %v1690, %v1291
      %v1724 = vsel %vm1692, %v1691, %v1293
      %vm1725 = vcmask 228352
      %v1726 = vsel %vm1725, %v1693, %v1333
      %v1727 = vsel %vm1725, %v1694, %v1335
      %v1728 = vsel %vm1725, %v1695, %v1337
      %v1729 = vsel %vm1725, %v1696, %v1339
      %v1730 = vsel %vm1725, %v1697, %v1341
      %v1731 = vsel %vm1725, %v1698, %v1343
      %v1732 = vsel %vm1725, %v1699, %v1345
      %v1733 = vsel %vm1725, %v1700, %v1347
      %v1734 = vsel %vm1725, %v1701, %v1349
      %v1735 = vsel %vm1725, %v1702, %v1351
      %v1736 = vsel %vm1725, %v1703, %v1353
      %v1737 = vsel %vm1725, %v1704, %v1355
      %v1738 = vsel %vm1725, %v1705, %v1357
      %v1739 = vsel %vm1725, %v1706, %v1359
      %v1740 = vsel %vm1725, %v1707, %v1361
      %v1741 = vsel %vm1725, %v1708, %v1363
      %v1742 = vsel %vm1725, %v1709, %v1365
      %v1743 = vsel %vm1725, %v1710, %v1367
      %v1744 = vsel %vm1725, %v1711, %v1369
      %v1745 = vsel %vm1725, %v1712, %v1371
      %v1746 = vsel %vm1725, %v1713, %v1373
      %v1747 = vsel %vm1725, %v1714, %v1375
      %v1748 = vsel %vm1725, %v1715, %v1377
      %v1749 = vsel %vm1725, %v1716, %v1379
      %v1750 = vsel %vm1725, %v1717, %v1381
      %v1751 = vsel %vm1725, %v1718, %v1383
      %v1752 = vsel %vm1725, %v1719, %v1385
      %v1753 = vsel %vm1725, %v1720, %v1387
      %v1754 = vsel %vm1725, %v1721, %v1389
      %v1755 = vsel %vm1725, %v1722, %v1391
      %v1756 = vsel %vm1725, %v1723, %v1393
      %v1757 = vsel %vm1725, %v1724, %v1395
      %vm1758 = vcmask 261120
      %v1759 = vsel %vm1758, %v1726, %v1434
      %v1760 = vsel %vm1758, %v1727, %v1436
      %v1761 = vsel %vm1758, %v1728, %v1438
      %v1762 = vsel %vm1758, %v1729, %v1440
      %v1763 = vsel %vm1758, %v1730, %v1442
      %v1764 = vsel %vm1758, %v1731, %v1444
      %v1765 = vsel %vm1758, %v1732, %v1446
      %v1766 = vsel %vm1758, %v1733, %v1448
      %v1767 = vsel %vm1758, %v1734, %v1450
      %v1768 = vsel %vm1758, %v1735, %v1452
      %v1769 = vsel %vm1758, %v1736, %v1454
      %v1770 = vsel %vm1758, %v1737, %v1456
      %v1771 = vsel %vm1758, %v1738, %v1458
      %v1772 = vsel %vm1758, %v1739, %v1460
      %v1773 = vsel %vm1758, %v1740, %v1462
      %v1774 = vsel %vm1758, %v1741, %v1464
      %v1775 = vsel %vm1758, %v1742, %v1466
      %v1776 = vsel %vm1758, %v1743, %v1468
      %v1777 = vsel %vm1758, %v1744, %v1470
      %v1778 = vsel %vm1758, %v1745, %v1472
      %v1779 = vsel %vm1758, %v1746, %v1474
      %v1780 = vsel %vm1758, %v1747, %v1476
      %v1781 = vsel %vm1758, %v1748, %v1478
      %v1782 = vsel %vm1758, %v1749, %v1480
      %v1783 = vsel %vm1758, %v1750, %v1482
      %v1784 = vsel %vm1758, %v1751, %v1484
      %v1785 = vsel %vm1758, %v1752, %v1486
      %v1786 = vsel %vm1758, %v1753, %v1488
      %v1787 = vsel %vm1758, %v1754, %v1490
      %v1788 = vsel %vm1758, %v1755, %v1492
      %v1789 = vsel %vm1758, %v1756, %v1494
      %v1790 = vsel %vm1758, %v1757, %v1496
      %v1791 = vpack.c.bf16 %v1759, %v1759
      %v1792 = vpack.c.bf16 %v1760, %v1760
      %v1793 = vpack.c.bf16 %v1761, %v1761
      %v1794 = vpack.c.bf16 %v1762, %v1762
      %v1795 = vpack.c.bf16 %v1763, %v1763
      %v1796 = vpack.c.bf16 %v1764, %v1764
      %v1797 = vpack.c.bf16 %v1765, %v1765
      %v1798 = vpack.c.bf16 %v1766, %v1766
      %v1799 = vpack.c.bf16 %v1767, %v1767
      %v1800 = vpack.c.bf16 %v1768, %v1768
      %v1801 = vpack.c.bf16 %v1769, %v1769
      %v1802 = vpack.c.bf16 %v1770, %v1770
      %v1803 = vpack.c.bf16 %v1771, %v1771
      %v1804 = vpack.c.bf16 %v1772, %v1772
      %v1805 = vpack.c.bf16 %v1773, %v1773
      %v1806 = vpack.c.bf16 %v1774, %v1774
      %v1807 = vpack.c.bf16 %v1775, %v1775
      %v1808 = vpack.c.bf16 %v1776, %v1776
      %v1809 = vpack.c.bf16 %v1777, %v1777
      %v1810 = vpack.c.bf16 %v1778, %v1778
      %v1811 = vpack.c.bf16 %v1779, %v1779
      %v1812 = vpack.c.bf16 %v1780, %v1780
      %v1813 = vpack.c.bf16 %v1781, %v1781
      %v1814 = vpack.c.bf16 %v1782, %v1782
      %v1815 = vpack.c.bf16 %v1783, %v1783
      %v1816 = vpack.c.bf16 %v1784, %v1784
      %v1817 = vpack.c.bf16 %v1785, %v1785
      %v1818 = vpack.c.bf16 %v1786, %v1786
      %v1819 = vpack.c.bf16 %v1787, %v1787
      %v1820 = vpack.c.bf16 %v1788, %v1788
      %v1821 = vpack.c.bf16 %v1789, %v1789
      %v1822 = vpack.c.bf16 %v1790, %v1790
      %v1823 = vld [vmem:[%s1] sm:$0xf]
      %v1824 = vld [vmem:[%s1 + $0x4] sm:$0xf]
      %v1825 = vld [vmem:[%s1 + $0x8] sm:$0xf]
      %v1826 = vld [vmem:[%s1 + $0xc] sm:$0xf]
      %v1827 = vld [vmem:[%s1 + $0x10] sm:$0x3]
      %v1860 = vunpack.c.l.b16 %v1791
      %v1861 = vunpack.c.l.b16 %v1792
      %v1862 = vunpack.c.l.b16 %v1793
      %v1863 = vunpack.c.l.b16 %v1794
      %v1864 = vunpack.c.l.b16 %v1795
      %v1865 = vunpack.c.l.b16 %v1796
      %v1866 = vunpack.c.l.b16 %v1797
      %v1867 = vunpack.c.l.b16 %v1798
      %v1868 = vunpack.c.l.b16 %v1799
      %v1869 = vunpack.c.l.b16 %v1800
      %v1870 = vunpack.c.l.b16 %v1801
      %v1871 = vunpack.c.l.b16 %v1802
      %v1872 = vunpack.c.l.b16 %v1803
      %v1873 = vunpack.c.l.b16 %v1804
      %v1874 = vunpack.c.l.b16 %v1805
      %v1875 = vunpack.c.l.b16 %v1806
      %v1876 = vunpack.c.l.b16 %v1807
      %v1877 = vunpack.c.l.b16 %v1808
      %v1878 = vunpack.c.l.b16 %v1809
      %v1879 = vunpack.c.l.b16 %v1810
      %v1880 = vunpack.c.l.b16 %v1811
      %v1881 = vunpack.c.l.b16 %v1812
      %v1882 = vunpack.c.l.b16 %v1813
      %v1883 = vunpack.c.l.b16 %v1814
      %v1884 = vunpack.c.l.b16 %v1815
      %v1885 = vunpack.c.l.b16 %v1816
      %v1886 = vunpack.c.l.b16 %v1817
      %v1887 = vunpack.c.l.b16 %v1818
      %v1888 = vunpack.c.l.b16 %v1819
      %v1889 = vunpack.c.l.b16 %v1820
      %v1890 = vunpack.c.l.b16 %v1821
      %v1891 = vunpack.c.l.b16 %v1822
      %v1892 = vpack.c.b16 %v1861, %v1860
      %v1893 = vpack.c.b16 %v1863, %v1862
      %v1894 = vpack.c.b16 %v1865, %v1864
      %v1895 = vpack.c.b16 %v1867, %v1866
      %v1896 = vpack.c.b16 %v1869, %v1868
      %v1897 = vpack.c.b16 %v1871, %v1870
      %v1898 = vpack.c.b16 %v1873, %v1872
      %v1899 = vpack.c.b16 %v1875, %v1874
      %v1900 = vpack.c.b16 %v1877, %v1876
      %v1901 = vpack.c.b16 %v1879, %v1878
      %v1902 = vpack.c.b16 %v1881, %v1880
      %v1903 = vpack.c.b16 %v1883, %v1882
      %v1904 = vpack.c.b16 %v1885, %v1884
      %v1905 = vpack.c.b16 %v1887, %v1886
      %v1906 = vpack.c.b16 %v1889, %v1888
      %v1907 = vpack.c.b16 %v1891, %v1890
      %v1913 = vunpack.c.l.b16 %v1823
      %v1914 = vunpack.c.l.b16 %v1824
      %v1915 = vunpack.c.l.b16 %v1825
      %v1916 = vunpack.c.l.b16 %v1826
      %v1917 = vunpack.c.l.b16 %v1827
      %v1918 = vpack.c.b16 %v1914, %v1913
      %v1919 = vpack.c.b16 %v1916, %v1915
      %v1920 = vpack.c.b16 %v1917, %v1917
      %vm1923 = vcmask 293888
      %v1925 = vsel %vm1923, %v1892, 0
      %v1928 = vsel %vm1923, %v1893, 0
      %v1931 = vsel %vm1923, %v1894, 0
      %v1934 = vsel %vm1923, %v1895, 0
      %v1937 = vsel %vm1923, %v1896, 0
      %v1940 = vsel %vm1923, %v1897, 0
      %v1943 = vsel %vm1923, %v1898, 0
      %v1946 = vsel %vm1923, %v1899, 0
      %v1949 = vsel %vm1923, %v1900, 0
      %v1952 = vsel %vm1923, %v1901, 0
      %v1955 = vsel %vm1923, %v1902, 0
      %v1958 = vsel %vm1923, %v1903, 0
      %v1961 = vsel %vm1923, %v1904, 0
      %v1964 = vsel %vm1923, %v1905, 0
      %v1967 = vsel %vm1923, %v1906, 0
      %v1970 = vsel %vm1923, %v1907, 0
      %vm1972 = vcmask 1041408
      %v1974 = vsel %vm1972, %v1920, 0
      %1976 = vmatpush.bf16.msra.mxu0 0
      %1977 = vmatpush.bf16.msra.mxu0 0
      %1978 = vmatpush.bf16.msra.mxu0 0
      %1979 = vmatpush.bf16.msra.mxu0 0
      %1980 = vmatpush.bf16.msra.mxu0 0
      %1981 = vmatpush.bf16.msra.mxu0 %v1974
      %1982 = vmatpush.bf16.msra.mxu0 %v1919
      %1983 = vmatpush.bf16.msra.mxu0 %v1918
      %1984 = vmatmul.bf16.gmra.mxu0 %v1925
      %v1985 = vpop.f32.mrf.mxu0
      %v1986 = vadd.f32 0.0, %v1985
      %v1987 = vpop.f32.mrf.mxu0
      %v1988 = vadd.f32 0.0, %v1987
      %1989 = vmatmul.bf16.gmra.mxu0 %v1928
      %v1990 = vpop.f32.mrf.mxu0
      %v1991 = vadd.f32 0.0, %v1990
      %v1992 = vpop.f32.mrf.mxu0
      %v1993 = vadd.f32 0.0, %v1992
      %1994 = vmatmul.bf16.gmra.mxu0 %v1931
      %v1995 = vpop.f32.mrf.mxu0
      %v1996 = vadd.f32 0.0, %v1995
      %v1997 = vpop.f32.mrf.mxu0
      %v1998 = vadd.f32 0.0, %v1997
      %1999 = vmatmul.bf16.gmra.mxu0 %v1934
      %v2000 = vpop.f32.mrf.mxu0
      %v2001 = vadd.f32 0.0, %v2000
      %v2002 = vpop.f32.mrf.mxu0
      %v2003 = vadd.f32 0.0, %v2002
      %2004 = vmatmul.bf16.gmra.mxu0 %v1937
      %v2005 = vpop.f32.mrf.mxu0
      %v2006 = vadd.f32 0.0, %v2005
      %v2007 = vpop.f32.mrf.mxu0
      %v2008 = vadd.f32 0.0, %v2007
      %2009 = vmatmul.bf16.gmra.mxu0 %v1940
      %v2010 = vpop.f32.mrf.mxu0
      %v2011 = vadd.f32 0.0, %v2010
      %v2012 = vpop.f32.mrf.mxu0
      %v2013 = vadd.f32 0.0, %v2012
      %2014 = vmatmul.bf16.gmra.mxu0 %v1943
      %v2015 = vpop.f32.mrf.mxu0
      %v2016 = vadd.f32 0.0, %v2015
      %v2017 = vpop.f32.mrf.mxu0
      %v2018 = vadd.f32 0.0, %v2017
      %2019 = vmatmul.bf16.gmra.mxu0 %v1946
      %v2020 = vpop.f32.mrf.mxu0
      %v2021 = vadd.f32 0.0, %v2020
      %v2022 = vpop.f32.mrf.mxu0
      %v2023 = vadd.f32 0.0, %v2022
      %2024 = vmatmul.bf16.gmra.mxu0 %v1949
      %v2025 = vpop.f32.mrf.mxu0
      %v2026 = vadd.f32 0.0, %v2025
      %v2027 = vpop.f32.mrf.mxu0
      %v2028 = vadd.f32 0.0, %v2027
      %2029 = vmatmul.bf16.gmra.mxu0 %v1952
      %v2030 = vpop.f32.mrf.mxu0
      %v2031 = vadd.f32 0.0, %v2030
      %v2032 = vpop.f32.mrf.mxu0
      %v2033 = vadd.f32 0.0, %v2032
      %2034 = vmatmul.bf16.gmra.mxu0 %v1955
      %v2035 = vpop.f32.mrf.mxu0
      %v2036 = vadd.f32 0.0, %v2035
      %v2037 = vpop.f32.mrf.mxu0
      %v2038 = vadd.f32 0.0, %v2037
      %2039 = vmatmul.bf16.gmra.mxu0 %v1958
      %v2040 = vpop.f32.mrf.mxu0
      %v2041 = vadd.f32 0.0, %v2040
      %v2042 = vpop.f32.mrf.mxu0
      %v2043 = vadd.f32 0.0, %v2042
      %2044 = vmatmul.bf16.gmra.mxu0 %v1961
      %v2045 = vpop.f32.mrf.mxu0
      %v2046 = vadd.f32 0.0, %v2045
      %v2047 = vpop.f32.mrf.mxu0
      %v2048 = vadd.f32 0.0, %v2047
      %2049 = vmatmul.bf16.gmra.mxu0 %v1964
      %v2050 = vpop.f32.mrf.mxu0
      %v2051 = vadd.f32 0.0, %v2050
      %v2052 = vpop.f32.mrf.mxu0
      %v2053 = vadd.f32 0.0, %v2052
      %2054 = vmatmul.bf16.gmra.mxu0 %v1967
      %v2055 = vpop.f32.mrf.mxu0
      %v2056 = vadd.f32 0.0, %v2055
      %v2057 = vpop.f32.mrf.mxu0
      %v2058 = vadd.f32 0.0, %v2057
      %2059 = vmatmul.bf16.gmra.mxu0 %v1970
      %v2060 = vpop.f32.mrf.mxu0
      %v2061 = vadd.f32 0.0, %v2060
      %v2062 = vpop.f32.mrf.mxu0
      %v2063 = vadd.f32 0.0, %v2062
      %2064 = vdwg.mxu0
      %v2066 = vperm.slane %v523, 0
      %v2068 = vmul.f32 %v1986, %v2066
      %v2069 = vmul.f32 %v1988, %v2066
      %v2070 = vmul.f32 %v1991, %v2066
      %v2071 = vmul.f32 %v1993, %v2066
      %v2072 = vmul.f32 %v1996, %v2066
      %v2073 = vmul.f32 %v1998, %v2066
      %v2074 = vmul.f32 %v2001, %v2066
      %v2075 = vmul.f32 %v2003, %v2066
      %v2076 = vmul.f32 %v2006, %v2066
      %v2077 = vmul.f32 %v2008, %v2066
      %v2078 = vmul.f32 %v2011, %v2066
      %v2079 = vmul.f32 %v2013, %v2066
      %v2080 = vmul.f32 %v2016, %v2066
      %v2081 = vmul.f32 %v2018, %v2066
      %v2082 = vmul.f32 %v2021, %v2066
      %v2083 = vmul.f32 %v2023, %v2066
      %v2084 = vmul.f32 %v2026, %v2066
      %v2085 = vmul.f32 %v2028, %v2066
      %v2086 = vmul.f32 %v2031, %v2066
      %v2087 = vmul.f32 %v2033, %v2066
      %v2088 = vmul.f32 %v2036, %v2066
      %v2089 = vmul.f32 %v2038, %v2066
      %v2090 = vmul.f32 %v2041, %v2066
      %v2091 = vmul.f32 %v2043, %v2066
      %v2092 = vmul.f32 %v2046, %v2066
      %v2093 = vmul.f32 %v2048, %v2066
      %v2094 = vmul.f32 %v2051, %v2066
      %v2095 = vmul.f32 %v2053, %v2066
      %v2096 = vmul.f32 %v2056, %v2066
      %v2097 = vmul.f32 %v2058, %v2066
      %v2098 = vmul.f32 %v2061, %v2066
      %v2099 = vmul.f32 %v2063, %v2066
      %v2101 = vperm.slane %v524, 0
      %v2103 = vadd.f32 %v2068, %v2101
      %v2104 = vadd.f32 %v2069, %v2101
      %v2105 = vadd.f32 %v2070, %v2101
      %v2106 = vadd.f32 %v2071, %v2101
      %v2107 = vadd.f32 %v2072, %v2101
      %v2108 = vadd.f32 %v2073, %v2101
      %v2109 = vadd.f32 %v2074, %v2101
      %v2110 = vadd.f32 %v2075, %v2101
      %v2111 = vadd.f32 %v2076, %v2101
      %v2112 = vadd.f32 %v2077, %v2101
      %v2113 = vadd.f32 %v2078, %v2101
      %v2114 = vadd.f32 %v2079, %v2101
      %v2115 = vadd.f32 %v2080, %v2101
      %v2116 = vadd.f32 %v2081, %v2101
      %v2117 = vadd.f32 %v2082, %v2101
      %v2118 = vadd.f32 %v2083, %v2101
      %v2119 = vadd.f32 %v2084, %v2101
      %v2120 = vadd.f32 %v2085, %v2101
      %v2121 = vadd.f32 %v2086, %v2101
      %v2122 = vadd.f32 %v2087, %v2101
      %v2123 = vadd.f32 %v2088, %v2101
      %v2124 = vadd.f32 %v2089, %v2101
      %v2125 = vadd.f32 %v2090, %v2101
      %v2126 = vadd.f32 %v2091, %v2101
      %v2127 = vadd.f32 %v2092, %v2101
      %v2128 = vadd.f32 %v2093, %v2101
      %v2129 = vadd.f32 %v2094, %v2101
      %v2130 = vadd.f32 %v2095, %v2101
      %v2131 = vadd.f32 %v2096, %v2101
      %v2132 = vadd.f32 %v2097, %v2101
      %v2133 = vadd.f32 %v2098, %v2101
      %v2134 = vadd.f32 %v2099, %v2101
      %v2135 = vmax.f32 %v2103, 0.0
      %v2136 = vmax.f32 %v2104, 0.0
      %v2137 = vmax.f32 %v2105, 0.0
      %v2138 = vmax.f32 %v2106, 0.0
      %v2139 = vmax.f32 %v2107, 0.0
      %v2140 = vmax.f32 %v2108, 0.0
      %v2141 = vmax.f32 %v2109, 0.0
      %v2142 = vmax.f32 %v2110, 0.0
      %v2143 = vmax.f32 %v2111, 0.0
      %v2144 = vmax.f32 %v2112, 0.0
      %v2145 = vmax.f32 %v2113, 0.0
      %v2146 = vmax.f32 %v2114, 0.0
      %v2147 = vmax.f32 %v2115, 0.0
      %v2148 = vmax.f32 %v2116, 0.0
      %v2149 = vmax.f32 %v2117, 0.0
      %v2150 = vmax.f32 %v2118, 0.0
      %v2151 = vmax.f32 %v2119, 0.0
      %v2152 = vmax.f32 %v2120, 0.0
      %v2153 = vmax.f32 %v2121, 0.0
      %v2154 = vmax.f32 %v2122, 0.0
      %v2155 = vmax.f32 %v2123, 0.0
      %v2156 = vmax.f32 %v2124, 0.0
      %v2157 = vmax.f32 %v2125, 0.0
      %v2158 = vmax.f32 %v2126, 0.0
      %v2159 = vmax.f32 %v2127, 0.0
      %v2160 = vmax.f32 %v2128, 0.0
      %v2161 = vmax.f32 %v2129, 0.0
      %v2162 = vmax.f32 %v2130, 0.0
      %v2163 = vmax.f32 %v2131, 0.0
      %v2164 = vmax.f32 %v2132, 0.0
      %v2165 = vmax.f32 %v2133, 0.0
      %v2166 = vmax.f32 %v2134, 0.0
      %s2167 = scalar_lea.vmem [#allocation3], 24
      %2168 = vst.msk [vmem:[%s2167 + $0x1] sm:$0xff] %vm326, %v2135
      %2169 = vst.msk [vmem:[%s2167 + $0x9] sm:$0xff] %vm326, %v2136
      %2170 = vst.msk [vmem:[%s2167 + $0x19] sm:$0xff] %vm326, %v2137
      %2171 = vst.msk [vmem:[%s2167 + $0x21] sm:$0xff] %vm326, %v2138
      %2172 = vst.msk [vmem:[%s2167 + $0x31] sm:$0xff] %vm326, %v2139
      %2173 = vst.msk [vmem:[%s2167 + $0x39] sm:$0xff] %vm326, %v2140
      %2174 = vst.msk [vmem:[%s2167 + $0x49] sm:$0xff] %vm326, %v2141
      %2175 = vst.msk [vmem:[%s2167 + $0x51] sm:$0xff] %vm326, %v2142
      %2176 = vst.msk [vmem:[%s2167 + $0x61] sm:$0xff] %vm326, %v2143
      %2177 = vst.msk [vmem:[%s2167 + $0x69] sm:$0xff] %vm326, %v2144
      %2178 = vst.msk [vmem:[%s2167 + $0x79] sm:$0xff] %vm326, %v2145
      %2179 = vst.msk [vmem:[%s2167 + $0x81] sm:$0xff] %vm326, %v2146
      %2180 = vst.msk [vmem:[%s2167 + $0x91] sm:$0xff] %vm326, %v2147
      %2181 = vst.msk [vmem:[%s2167 + $0x99] sm:$0xff] %vm326, %v2148
      %2182 = vst.msk [vmem:[%s2167 + $0xa9] sm:$0xff] %vm326, %v2149
      %2183 = vst.msk [vmem:[%s2167 + $0xb1] sm:$0xff] %vm326, %v2150
      %2184 = vst.msk [vmem:[%s2167 + $0xc1] sm:$0xff] %vm326, %v2151
      %2185 = vst.msk [vmem:[%s2167 + $0xc9] sm:$0xff] %vm326, %v2152
      %2186 = vst.msk [vmem:[%s2167 + $0xd9] sm:$0xff] %vm326, %v2153
      %2187 = vst.msk [vmem:[%s2167 + $0xe1] sm:$0xff] %vm326, %v2154
      %2188 = vst.msk [vmem:[%s2167 + $0xf1] sm:$0xff] %vm326, %v2155
      %2189 = vst.msk [vmem:[%s2167 + $0xf9] sm:$0xff] %vm326, %v2156
      %2190 = vst.msk [vmem:[%s2167 + $0x109] sm:$0xff] %vm326, %v2157
      %2191 = vst.msk [vmem:[%s2167 + $0x111] sm:$0xff] %vm326, %v2158
      %2192 = vst.msk [vmem:[%s2167 + $0x121] sm:$0xff] %vm326, %v2159
      %2193 = vst.msk [vmem:[%s2167 + $0x129] sm:$0xff] %vm326, %v2160
      %2194 = vst.msk [vmem:[%s2167 + $0x139] sm:$0xff] %vm326, %v2161
      %2195 = vst.msk [vmem:[%s2167 + $0x141] sm:$0xff] %vm326, %v2162
      %2196 = vst.msk [vmem:[%s2167 + $0x151] sm:$0xff] %vm326, %v2163
      %2197 = vst.msk [vmem:[%s2167 + $0x159] sm:$0xff] %vm326, %v2164
      %2198 = vst.msk [vmem:[%s2167 + $0x169] sm:$0xff] %vm326, %v2165
      %2199 = vst.msk [vmem:[%s2167 + $0x171] sm:$0xff] %vm326, %v2166
      %v2200 = vld [vmem:[#allocation3] sm:$0xff]
      %v2201 = vld [vmem:[#allocation3 + $0x8] sm:$0xff]
      %v2202 = vld [vmem:[#allocation3 + $0x10] sm:$0x3]
      %v2203 = vld [vmem:[#allocation3 + $0x18] sm:$0xff]
      %v2204 = vld [vmem:[#allocation3 + $0x20] sm:$0xff]
      %v2205 = vld [vmem:[#allocation3 + $0x28] sm:$0x3]
      %v2206 = vld [vmem:[#allocation3 + $0x30] sm:$0xff]
      %v2207 = vld [vmem:[#allocation3 + $0x38] sm:$0xff]
      %v2208 = vld [vmem:[#allocation3 + $0x40] sm:$0x3]
      %v2209 = vld [vmem:[#allocation3 + $0x48] sm:$0xff]
      %v2210 = vld [vmem:[#allocation3 + $0x50] sm:$0xff]
      %v2211 = vld [vmem:[#allocation3 + $0x58] sm:$0x3]
      %v2212 = vld [vmem:[#allocation3 + $0x60] sm:$0xff]
      %v2213 = vld [vmem:[#allocation3 + $0x68] sm:$0xff]
      %v2214 = vld [vmem:[#allocation3 + $0x70] sm:$0x3]
      %v2215 = vld [vmem:[#allocation3 + $0x78] sm:$0xff]
      %v2216 = vld [vmem:[#allocation3 + $0x80] sm:$0xff]
      %v2217 = vld [vmem:[#allocation3 + $0x88] sm:$0x3]
      %v2218 = vld [vmem:[#allocation3 + $0x90] sm:$0xff]
      %v2219 = vld [vmem:[#allocation3 + $0x98] sm:$0xff]
      %v2220 = vld [vmem:[#allocation3 + $0xa0] sm:$0x3]
      %v2221 = vld [vmem:[#allocation3 + $0xa8] sm:$0xff]
      %v2222 = vld [vmem:[#allocation3 + $0xb0] sm:$0xff]
      %v2223 = vld [vmem:[#allocation3 + $0xb8] sm:$0x3]
      %v2224 = vld [vmem:[#allocation3 + $0xc0] sm:$0xff]
      %v2225 = vld [vmem:[#allocation3 + $0xc8] sm:$0xff]
      %v2226 = vld [vmem:[#allocation3 + $0xd0] sm:$0x3]
      %v2227 = vld [vmem:[#allocation3 + $0xd8] sm:$0xff]
      %v2228 = vld [vmem:[#allocation3 + $0xe0] sm:$0xff]
      %v2229 = vld [vmem:[#allocation3 + $0xe8] sm:$0x3]
      %v2230 = vld [vmem:[#allocation3 + $0xf0] sm:$0xff]
      %v2231 = vld [vmem:[#allocation3 + $0xf8] sm:$0xff]
      %v2232 = vld [vmem:[#allocation3 + $0x100] sm:$0x3]
      %v2233 = vld [vmem:[#allocation3 + $0x108] sm:$0xff]
      %v2234 = vld [vmem:[#allocation3 + $0x110] sm:$0xff]
      %v2235 = vld [vmem:[#allocation3 + $0x118] sm:$0x3]
      %v2236 = vld [vmem:[#allocation3 + $0x120] sm:$0xff]
      %v2237 = vld [vmem:[#allocation3 + $0x128] sm:$0xff]
      %v2238 = vld [vmem:[#allocation3 + $0x130] sm:$0x3]
      %v2239 = vld [vmem:[#allocation3 + $0x138] sm:$0xff]
      %v2240 = vld [vmem:[#allocation3 + $0x140] sm:$0xff]
      %v2241 = vld [vmem:[#allocation3 + $0x148] sm:$0x3]
      %v2242 = vld [vmem:[#allocation3 + $0x150] sm:$0xff]
      %v2243 = vld [vmem:[#allocation3 + $0x158] sm:$0xff]
      %v2244 = vld [vmem:[#allocation3 + $0x160] sm:$0x3]
      %v2245 = vld [vmem:[#allocation3 + $0x168] sm:$0xff]
      %v2246 = vld [vmem:[#allocation3 + $0x170] sm:$0xff]
      %v2247 = vld [vmem:[#allocation3 + $0x178] sm:$0x3]
      %v2248 = vld [vmem:[#allocation3 + $0x180] sm:$0xff]
      %v2249 = vld [vmem:[#allocation3 + $0x188] sm:$0xff]
      %v2250 = vld [vmem:[#allocation3 + $0x190] sm:$0x3]
      %v2251 = vld [vmem:[#allocation3 + $0x198] sm:$0xff]
      %v2252 = vld [vmem:[#allocation3 + $0x1a0] sm:$0xff]
      %v2253 = vld [vmem:[#allocation3 + $0x1a8] sm:$0x3]
      %v2254 = vld [vmem:[%s5] sm:$0x1]
      %v2255 = vld [vmem:[%s6] sm:$0x1]
      %v2304 = vrot.slane %v2200, 1
      %v2305 = vrot.slane %v2201, 1
      %v2306 = vsel %vm573, %v2304, %v2305
      %v2307 = vrot.slane %v2202, 1
      %v2308 = vsel %vm573, %v2305, %v2307
      %v2309 = vrot.slane %v2203, 1
      %v2310 = vrot.slane %v2204, 1
      %v2311 = vsel %vm573, %v2309, %v2310
      %v2312 = vrot.slane %v2205, 1
      %v2313 = vsel %vm573, %v2310, %v2312
      %v2314 = vrot.slane %v2206, 1
      %v2315 = vrot.slane %v2207, 1
      %v2316 = vsel %vm573, %v2314, %v2315
      %v2317 = vrot.slane %v2208, 1
      %v2318 = vsel %vm573, %v2315, %v2317
      %v2319 = vrot.slane %v2209, 1
      %v2320 = vrot.slane %v2210, 1
      %v2321 = vsel %vm573, %v2319, %v2320
      %v2322 = vrot.slane %v2211, 1
      %v2323 = vsel %vm573, %v2320, %v2322
      %v2324 = vrot.slane %v2212, 1
      %v2325 = vrot.slane %v2213, 1
      %v2326 = vsel %vm573, %v2324, %v2325
      %v2327 = vrot.slane %v2214, 1
      %v2328 = vsel %vm573, %v2325, %v2327
      %v2329 = vrot.slane %v2215, 1
      %v2330 = vrot.slane %v2216, 1
      %v2331 = vsel %vm573, %v2329, %v2330
      %v2332 = vrot.slane %v2217, 1
      %v2333 = vsel %vm573, %v2330, %v2332
      %v2334 = vrot.slane %v2218, 1
      %v2335 = vrot.slane %v2219, 1
      %v2336 = vsel %vm573, %v2334, %v2335
      %v2337 = vrot.slane %v2220, 1
      %v2338 = vsel %vm573, %v2335, %v2337
      %v2339 = vrot.slane %v2221, 1
      %v2340 = vrot.slane %v2222, 1
      %v2341 = vsel %vm573, %v2339, %v2340
      %v2342 = vrot.slane %v2223, 1
      %v2343 = vsel %vm573, %v2340, %v2342
      %v2344 = vrot.slane %v2224, 1
      %v2345 = vrot.slane %v2225, 1
      %v2346 = vsel %vm573, %v2344, %v2345
      %v2347 = vrot.slane %v2226, 1
      %v2348 = vsel %vm573, %v2345, %v2347
      %v2349 = vrot.slane %v2227, 1
      %v2350 = vrot.slane %v2228, 1
      %v2351 = vsel %vm573, %v2349, %v2350
      %v2352 = vrot.slane %v2229, 1
      %v2353 = vsel %vm573, %v2350, %v2352
      %v2354 = vrot.slane %v2230, 1
      %v2355 = vrot.slane %v2231, 1
      %v2356 = vsel %vm573, %v2354, %v2355
      %v2357 = vrot.slane %v2232, 1
      %v2358 = vsel %vm573, %v2355, %v2357
      %v2359 = vrot.slane %v2233, 1
      %v2360 = vrot.slane %v2234, 1
      %v2361 = vsel %vm573, %v2359, %v2360
      %v2362 = vrot.slane %v2235, 1
      %v2363 = vsel %vm573, %v2360, %v2362
      %v2364 = vrot.slane %v2236, 1
      %v2365 = vrot.slane %v2237, 1
      %v2366 = vsel %vm573, %v2364, %v2365
      %v2367 = vrot.slane %v2238, 1
      %v2368 = vsel %vm573, %v2365, %v2367
      %v2369 = vrot.slane %v2239, 1
      %v2370 = vrot.slane %v2240, 1
      %v2371 = vsel %vm573, %v2369, %v2370
      %v2372 = vrot.slane %v2241, 1
      %v2373 = vsel %vm573, %v2370, %v2372
      %v2374 = vrot.slane %v2242, 1
      %v2375 = vrot.slane %v2243, 1
      %v2376 = vsel %vm573, %v2374, %v2375
      %v2377 = vrot.slane %v2244, 1
      %v2378 = vsel %vm573, %v2375, %v2377
      %v2379 = vrot.slane %v2245, 1
      %v2380 = vrot.slane %v2246, 1
      %v2381 = vsel %vm573, %v2379, %v2380
      %v2382 = vrot.slane %v2247, 1
      %v2383 = vsel %vm573, %v2380, %v2382
      %2384 = vrot.lane.b32.xlu0 %v2306, 8
      %v2385 = vpop.permute.xlu0 %2384
      %2386 = vrot.lane.b32.xlu0 %v2308, 8
      %v2387 = vpop.permute.xlu0 %2386
      %2388 = vrot.lane.b32.xlu0 %v2311, 8
      %v2389 = vpop.permute.xlu0 %2388
      %2390 = vrot.lane.b32.xlu0 %v2313, 8
      %v2391 = vpop.permute.xlu0 %2390
      %2392 = vrot.lane.b32.xlu0 %v2316, 8
      %v2393 = vpop.permute.xlu0 %2392
      %2394 = vrot.lane.b32.xlu0 %v2318, 8
      %v2395 = vpop.permute.xlu0 %2394
      %2396 = vrot.lane.b32.xlu0 %v2321, 8
      %v2397 = vpop.permute.xlu0 %2396
      %2398 = vrot.lane.b32.xlu0 %v2323, 8
      %v2399 = vpop.permute.xlu0 %2398
      %2400 = vrot.lane.b32.xlu0 %v2326, 8
      %v2401 = vpop.permute.xlu0 %2400
      %2402 = vrot.lane.b32.xlu0 %v2328, 8
      %v2403 = vpop.permute.xlu0 %2402
      %2404 = vrot.lane.b32.xlu0 %v2331, 8
      %v2405 = vpop.permute.xlu0 %2404
      %2406 = vrot.lane.b32.xlu0 %v2333, 8
      %v2407 = vpop.permute.xlu0 %2406
      %2408 = vrot.lane.b32.xlu0 %v2336, 8
      %v2409 = vpop.permute.xlu0 %2408
      %2410 = vrot.lane.b32.xlu0 %v2338, 8
      %v2411 = vpop.permute.xlu0 %2410
      %2412 = vrot.lane.b32.xlu0 %v2341, 8
      %v2413 = vpop.permute.xlu0 %2412
      %2414 = vrot.lane.b32.xlu0 %v2343, 8
      %v2415 = vpop.permute.xlu0 %2414
      %2416 = vrot.lane.b32.xlu0 %v2346, 8
      %v2417 = vpop.permute.xlu0 %2416
      %2418 = vrot.lane.b32.xlu0 %v2348, 8
      %v2419 = vpop.permute.xlu0 %2418
      %2420 = vrot.lane.b32.xlu0 %v2351, 8
      %v2421 = vpop.permute.xlu0 %2420
      %2422 = vrot.lane.b32.xlu0 %v2353, 8
      %v2423 = vpop.permute.xlu0 %2422
      %2424 = vrot.lane.b32.xlu0 %v2356, 8
      %v2425 = vpop.permute.xlu0 %2424
      %2426 = vrot.lane.b32.xlu0 %v2358, 8
      %v2427 = vpop.permute.xlu0 %2426
      %2428 = vrot.lane.b32.xlu0 %v2361, 8
      %v2429 = vpop.permute.xlu0 %2428
      %2430 = vrot.lane.b32.xlu0 %v2363, 8
      %v2431 = vpop.permute.xlu0 %2430
      %2432 = vrot.lane.b32.xlu0 %v2366, 8
      %v2433 = vpop.permute.xlu0 %2432
      %2434 = vrot.lane.b32.xlu0 %v2368, 8
      %v2435 = vpop.permute.xlu0 %2434
      %2436 = vrot.lane.b32.xlu0 %v2371, 8
      %v2437 = vpop.permute.xlu0 %2436
      %2438 = vrot.lane.b32.xlu0 %v2373, 8
      %v2439 = vpop.permute.xlu0 %2438
      %2440 = vrot.lane.b32.xlu0 %v2376, 8
      %v2441 = vpop.permute.xlu0 %2440
      %2442 = vrot.lane.b32.xlu0 %v2378, 8
      %v2443 = vpop.permute.xlu0 %2442
      %2444 = vrot.lane.b32.xlu0 %v2381, 8
      %v2445 = vpop.permute.xlu0 %2444
      %2446 = vrot.lane.b32.xlu0 %v2383, 8
      %v2447 = vpop.permute.xlu0 %2446
      %v2480 = vrot.slane %v2200, 2
      %v2481 = vrot.slane %v2201, 2
      %v2482 = vsel %vm750, %v2480, %v2481
      %v2483 = vrot.slane %v2202, 2
      %v2484 = vsel %vm750, %v2481, %v2483
      %v2485 = vrot.slane %v2203, 2
      %v2486 = vrot.slane %v2204, 2
      %v2487 = vsel %vm750, %v2485, %v2486
      %v2488 = vrot.slane %v2205, 2
      %v2489 = vsel %vm750, %v2486, %v2488
      %v2490 = vrot.slane %v2206, 2
      %v2491 = vrot.slane %v2207, 2
      %v2492 = vsel %vm750, %v2490, %v2491
      %v2493 = vrot.slane %v2208, 2
      %v2494 = vsel %vm750, %v2491, %v2493
      %v2495 = vrot.slane %v2209, 2
      %v2496 = vrot.slane %v2210, 2
      %v2497 = vsel %vm750, %v2495, %v2496
      %v2498 = vrot.slane %v2211, 2
      %v2499 = vsel %vm750, %v2496, %v2498
      %v2500 = vrot.slane %v2212, 2
      %v2501 = vrot.slane %v2213, 2
      %v2502 = vsel %vm750, %v2500, %v2501
      %v2503 = vrot.slane %v2214, 2
      %v2504 = vsel %vm750, %v2501, %v2503
      %v2505 = vrot.slane %v2215, 2
      %v2506 = vrot.slane %v2216, 2
      %v2507 = vsel %vm750, %v2505, %v2506
      %v2508 = vrot.slane %v2217, 2
      %v2509 = vsel %vm750, %v2506, %v2508
      %v2510 = vrot.slane %v2218, 2
      %v2511 = vrot.slane %v2219, 2
      %v2512 = vsel %vm750, %v2510, %v2511
      %v2513 = vrot.slane %v2220, 2
      %v2514 = vsel %vm750, %v2511, %v2513
      %v2515 = vrot.slane %v2221, 2
      %v2516 = vrot.slane %v2222, 2
      %v2517 = vsel %vm750, %v2515, %v2516
      %v2518 = vrot.slane %v2223, 2
      %v2519 = vsel %vm750, %v2516, %v2518
      %v2520 = vrot.slane %v2224, 2
      %v2521 = vrot.slane %v2225, 2
      %v2522 = vsel %vm750, %v2520, %v2521
      %v2523 = vrot.slane %v2226, 2
      %v2524 = vsel %vm750, %v2521, %v2523
      %v2525 = vrot.slane %v2227, 2
      %v2526 = vrot.slane %v2228, 2
      %v2527 = vsel %vm750, %v2525, %v2526
      %v2528 = vrot.slane %v2229, 2
      %v2529 = vsel %vm750, %v2526, %v2528
      %v2530 = vrot.slane %v2230, 2
      %v2531 = vrot.slane %v2231, 2
      %v2532 = vsel %vm750, %v2530, %v2531
      %v2533 = vrot.slane %v2232, 2
      %v2534 = vsel %vm750, %v2531, %v2533
      %v2535 = vrot.slane %v2233, 2
      %v2536 = vrot.slane %v2234, 2
      %v2537 = vsel %vm750, %v2535, %v2536
      %v2538 = vrot.slane %v2235, 2
      %v2539 = vsel %vm750, %v2536, %v2538
      %v2540 = vrot.slane %v2236, 2
      %v2541 = vrot.slane %v2237, 2
      %v2542 = vsel %vm750, %v2540, %v2541
      %v2543 = vrot.slane %v2238, 2
      %v2544 = vsel %vm750, %v2541, %v2543
      %v2545 = vrot.slane %v2239, 2
      %v2546 = vrot.slane %v2240, 2
      %v2547 = vsel %vm750, %v2545, %v2546
      %v2548 = vrot.slane %v2241, 2
      %v2549 = vsel %vm750, %v2546, %v2548
      %v2550 = vrot.slane %v2242, 2
      %v2551 = vrot.slane %v2243, 2
      %v2552 = vsel %vm750, %v2550, %v2551
      %v2553 = vrot.slane %v2244, 2
      %v2554 = vsel %vm750, %v2551, %v2553
      %v2555 = vrot.slane %v2245, 2
      %v2556 = vrot.slane %v2246, 2
      %v2557 = vsel %vm750, %v2555, %v2556
      %v2558 = vrot.slane %v2247, 2
      %v2559 = vsel %vm750, %v2556, %v2558
      %2560 = vrot.lane.b32.xlu0 %v2482, 16
      %v2561 = vpop.permute.xlu0 %2560
      %2562 = vrot.lane.b32.xlu0 %v2484, 16
      %v2563 = vpop.permute.xlu0 %2562
      %2564 = vrot.lane.b32.xlu0 %v2487, 16
      %v2565 = vpop.permute.xlu0 %2564
      %2566 = vrot.lane.b32.xlu0 %v2489, 16
      %v2567 = vpop.permute.xlu0 %2566
      %2568 = vrot.lane.b32.xlu0 %v2492, 16
      %v2569 = vpop.permute.xlu0 %2568
      %2570 = vrot.lane.b32.xlu0 %v2494, 16
      %v2571 = vpop.permute.xlu0 %2570
      %2572 = vrot.lane.b32.xlu0 %v2497, 16
      %v2573 = vpop.permute.xlu0 %2572
      %2574 = vrot.lane.b32.xlu0 %v2499, 16
      %v2575 = vpop.permute.xlu0 %2574
      %2576 = vrot.lane.b32.xlu0 %v2502, 16
      %v2577 = vpop.permute.xlu0 %2576
      %2578 = vrot.lane.b32.xlu0 %v2504, 16
      %v2579 = vpop.permute.xlu0 %2578
      %2580 = vrot.lane.b32.xlu0 %v2507, 16
      %v2581 = vpop.permute.xlu0 %2580
      %2582 = vrot.lane.b32.xlu0 %v2509, 16
      %v2583 = vpop.permute.xlu0 %2582
      %2584 = vrot.lane.b32.xlu0 %v2512, 16
      %v2585 = vpop.permute.xlu0 %2584
      %2586 = vrot.lane.b32.xlu0 %v2514, 16
      %v2587 = vpop.permute.xlu0 %2586
      %2588 = vrot.lane.b32.xlu0 %v2517, 16
      %v2589 = vpop.permute.xlu0 %2588
      %2590 = vrot.lane.b32.xlu0 %v2519, 16
      %v2591 = vpop.permute.xlu0 %2590
      %2592 = vrot.lane.b32.xlu0 %v2522, 16
      %v2593 = vpop.permute.xlu0 %2592
      %2594 = vrot.lane.b32.xlu0 %v2524, 16
      %v2595 = vpop.permute.xlu0 %2594
      %2596 = vrot.lane.b32.xlu0 %v2527, 16
      %v2597 = vpop.permute.xlu0 %2596
      %2598 = vrot.lane.b32.xlu0 %v2529, 16
      %v2599 = vpop.permute.xlu0 %2598
      %2600 = vrot.lane.b32.xlu0 %v2532, 16
      %v2601 = vpop.permute.xlu0 %2600
      %2602 = vrot.lane.b32.xlu0 %v2534, 16
      %v2603 = vpop.permute.xlu0 %2602
      %2604 = vrot.lane.b32.xlu0 %v2537, 16
      %v2605 = vpop.permute.xlu0 %2604
      %2606 = vrot.lane.b32.xlu0 %v2539, 16
      %v2607 = vpop.permute.xlu0 %2606
      %2608 = vrot.lane.b32.xlu0 %v2542, 16
      %v2609 = vpop.permute.xlu0 %2608
      %2610 = vrot.lane.b32.xlu0 %v2544, 16
      %v2611 = vpop.permute.xlu0 %2610
      %2612 = vrot.lane.b32.xlu0 %v2547, 16
      %v2613 = vpop.permute.xlu0 %2612
      %2614 = vrot.lane.b32.xlu0 %v2549, 16
      %v2615 = vpop.permute.xlu0 %2614
      %2616 = vrot.lane.b32.xlu0 %v2552, 16
      %v2617 = vpop.permute.xlu0 %2616
      %2618 = vrot.lane.b32.xlu0 %v2554, 16
      %v2619 = vpop.permute.xlu0 %2618
      %2620 = vrot.lane.b32.xlu0 %v2557, 16
      %v2621 = vpop.permute.xlu0 %2620
      %2622 = vrot.lane.b32.xlu0 %v2559, 16
      %v2623 = vpop.permute.xlu0 %2622
      %2658 = vrot.lane.b32.xlu0 %v2203, 24
      %v2659 = vpop.permute.xlu0 %2658
      %2660 = vrot.lane.b32.xlu0 %v2204, 24
      %v2661 = vpop.permute.xlu0 %2660
      %2662 = vrot.lane.b32.xlu0 %v2206, 24
      %v2663 = vpop.permute.xlu0 %2662
      %2664 = vrot.lane.b32.xlu0 %v2207, 24
      %v2665 = vpop.permute.xlu0 %2664
      %2666 = vrot.lane.b32.xlu0 %v2209, 24
      %v2667 = vpop.permute.xlu0 %2666
      %2668 = vrot.lane.b32.xlu0 %v2210, 24
      %v2669 = vpop.permute.xlu0 %2668
      %2670 = vrot.lane.b32.xlu0 %v2212, 24
      %v2671 = vpop.permute.xlu0 %2670
      %2672 = vrot.lane.b32.xlu0 %v2213, 24
      %v2673 = vpop.permute.xlu0 %2672
      %2674 = vrot.lane.b32.xlu0 %v2215, 24
      %v2675 = vpop.permute.xlu0 %2674
      %2676 = vrot.lane.b32.xlu0 %v2216, 24
      %v2677 = vpop.permute.xlu0 %2676
      %2678 = vrot.lane.b32.xlu0 %v2218, 24
      %v2679 = vpop.permute.xlu0 %2678
      %2680 = vrot.lane.b32.xlu0 %v2219, 24
      %v2681 = vpop.permute.xlu0 %2680
      %2682 = vrot.lane.b32.xlu0 %v2221, 24
      %v2683 = vpop.permute.xlu0 %2682
      %2684 = vrot.lane.b32.xlu0 %v2222, 24
      %v2685 = vpop.permute.xlu0 %2684
      %2686 = vrot.lane.b32.xlu0 %v2224, 24
      %v2687 = vpop.permute.xlu0 %2686
      %2688 = vrot.lane.b32.xlu0 %v2225, 24
      %v2689 = vpop.permute.xlu0 %2688
      %2690 = vrot.lane.b32.xlu0 %v2227, 24
      %v2691 = vpop.permute.xlu0 %2690
      %2692 = vrot.lane.b32.xlu0 %v2228, 24
      %v2693 = vpop.permute.xlu0 %2692
      %2694 = vrot.lane.b32.xlu0 %v2230, 24
      %v2695 = vpop.permute.xlu0 %2694
      %2696 = vrot.lane.b32.xlu0 %v2231, 24
      %v2697 = vpop.permute.xlu0 %2696
      %2698 = vrot.lane.b32.xlu0 %v2233, 24
      %v2699 = vpop.permute.xlu0 %2698
      %2700 = vrot.lane.b32.xlu0 %v2234, 24
      %v2701 = vpop.permute.xlu0 %2700
      %2702 = vrot.lane.b32.xlu0 %v2236, 24
      %v2703 = vpop.permute.xlu0 %2702
      %2704 = vrot.lane.b32.xlu0 %v2237, 24
      %v2705 = vpop.permute.xlu0 %2704
      %2706 = vrot.lane.b32.xlu0 %v2239, 24
      %v2707 = vpop.permute.xlu0 %2706
      %2708 = vrot.lane.b32.xlu0 %v2240, 24
      %v2709 = vpop.permute.xlu0 %2708
      %2710 = vrot.lane.b32.xlu0 %v2242, 24
      %v2711 = vpop.permute.xlu0 %2710
      %2712 = vrot.lane.b32.xlu0 %v2243, 24
      %v2713 = vpop.permute.xlu0 %2712
      %2714 = vrot.lane.b32.xlu0 %v2245, 24
      %v2715 = vpop.permute.xlu0 %2714
      %2716 = vrot.lane.b32.xlu0 %v2246, 24
      %v2717 = vpop.permute.xlu0 %2716
      %2718 = vrot.lane.b32.xlu0 %v2248, 24
      %v2719 = vpop.permute.xlu0 %2718
      %2720 = vrot.lane.b32.xlu0 %v2249, 24
      %v2721 = vpop.permute.xlu0 %2720
      %v2755 = vrot.slane %v2248, 1
      %v2756 = vrot.slane %v2249, 1
      %v2757 = vsel %vm573, %v2755, %v2756
      %v2758 = vrot.slane %v2250, 1
      %v2759 = vsel %vm573, %v2756, %v2758
      %2760 = vrot.lane.b32.xlu0 %v2311, 32
      %v2761 = vpop.permute.xlu0 %2760
      %2762 = vrot.lane.b32.xlu0 %v2313, 32
      %v2763 = vpop.permute.xlu0 %2762
      %2764 = vrot.lane.b32.xlu0 %v2316, 32
      %v2765 = vpop.permute.xlu0 %2764
      %2766 = vrot.lane.b32.xlu0 %v2318, 32
      %v2767 = vpop.permute.xlu0 %2766
      %2768 = vrot.lane.b32.xlu0 %v2321, 32
      %v2769 = vpop.permute.xlu0 %2768
      %2770 = vrot.lane.b32.xlu0 %v2323, 32
      %v2771 = vpop.permute.xlu0 %2770
      %2772 = vrot.lane.b32.xlu0 %v2326, 32
      %v2773 = vpop.permute.xlu0 %2772
      %2774 = vrot.lane.b32.xlu0 %v2328, 32
      %v2775 = vpop.permute.xlu0 %2774
      %2776 = vrot.lane.b32.xlu0 %v2331, 32
      %v2777 = vpop.permute.xlu0 %2776
      %2778 = vrot.lane.b32.xlu0 %v2333, 32
      %v2779 = vpop.permute.xlu0 %2778
      %2780 = vrot.lane.b32.xlu0 %v2336, 32
      %v2781 = vpop.permute.xlu0 %2780
      %2782 = vrot.lane.b32.xlu0 %v2338, 32
      %v2783 = vpop.permute.xlu0 %2782
      %2784 = vrot.lane.b32.xlu0 %v2341, 32
      %v2785 = vpop.permute.xlu0 %2784
      %2786 = vrot.lane.b32.xlu0 %v2343, 32
      %v2787 = vpop.permute.xlu0 %2786
      %2788 = vrot.lane.b32.xlu0 %v2346, 32
      %v2789 = vpop.permute.xlu0 %2788
      %2790 = vrot.lane.b32.xlu0 %v2348, 32
      %v2791 = vpop.permute.xlu0 %2790
      %2792 = vrot.lane.b32.xlu0 %v2351, 32
      %v2793 = vpop.permute.xlu0 %2792
      %2794 = vrot.lane.b32.xlu0 %v2353, 32
      %v2795 = vpop.permute.xlu0 %2794
      %2796 = vrot.lane.b32.xlu0 %v2356, 32
      %v2797 = vpop.permute.xlu0 %2796
      %2798 = vrot.lane.b32.xlu0 %v2358, 32
      %v2799 = vpop.permute.xlu0 %2798
      %2800 = vrot.lane.b32.xlu0 %v2361, 32
      %v2801 = vpop.permute.xlu0 %2800
      %2802 = vrot.lane.b32.xlu0 %v2363, 32
      %v2803 = vpop.permute.xlu0 %2802
      %2804 = vrot.lane.b32.xlu0 %v2366, 32
      %v2805 = vpop.permute.xlu0 %2804
      %2806 = vrot.lane.b32.xlu0 %v2368, 32
      %v2807 = vpop.permute.xlu0 %2806
      %2808 = vrot.lane.b32.xlu0 %v2371, 32
      %v2809 = vpop.permute.xlu0 %2808
      %2810 = vrot.lane.b32.xlu0 %v2373, 32
      %v2811 = vpop.permute.xlu0 %2810
      %2812 = vrot.lane.b32.xlu0 %v2376, 32
      %v2813 = vpop.permute.xlu0 %2812
      %2814 = vrot.lane.b32.xlu0 %v2378, 32
      %v2815 = vpop.permute.xlu0 %2814
      %2816 = vrot.lane.b32.xlu0 %v2381, 32
      %v2817 = vpop.permute.xlu0 %2816
      %2818 = vrot.lane.b32.xlu0 %v2383, 32
      %v2819 = vpop.permute.xlu0 %2818
      %2820 = vrot.lane.b32.xlu0 %v2757, 32
      %v2821 = vpop.permute.xlu0 %2820
      %2822 = vrot.lane.b32.xlu0 %v2759, 32
      %v2823 = vpop.permute.xlu0 %2822
      %v2856 = vrot.slane %v2248, 2
      %v2857 = vrot.slane %v2249, 2
      %v2858 = vsel %vm750, %v2856, %v2857
      %v2859 = vrot.slane %v2250, 2
      %v2860 = vsel %vm750, %v2857, %v2859
      %2861 = vrot.lane.b32.xlu0 %v2487, 40
      %v2862 = vpop.permute.xlu0 %2861
      %2863 = vrot.lane.b32.xlu0 %v2489, 40
      %v2864 = vpop.permute.xlu0 %2863
      %2865 = vrot.lane.b32.xlu0 %v2492, 40
      %v2866 = vpop.permute.xlu0 %2865
      %2867 = vrot.lane.b32.xlu0 %v2494, 40
      %v2868 = vpop.permute.xlu0 %2867
      %2869 = vrot.lane.b32.xlu0 %v2497, 40
      %v2870 = vpop.permute.xlu0 %2869
      %2871 = vrot.lane.b32.xlu0 %v2499, 40
      %v2872 = vpop.permute.xlu0 %2871
      %2873 = vrot.lane.b32.xlu0 %v2502, 40
      %v2874 = vpop.permute.xlu0 %2873
      %2875 = vrot.lane.b32.xlu0 %v2504, 40
      %v2876 = vpop.permute.xlu0 %2875
      %2877 = vrot.lane.b32.xlu0 %v2507, 40
      %v2878 = vpop.permute.xlu0 %2877
      %2879 = vrot.lane.b32.xlu0 %v2509, 40
      %v2880 = vpop.permute.xlu0 %2879
      %2881 = vrot.lane.b32.xlu0 %v2512, 40
      %v2882 = vpop.permute.xlu0 %2881
      %2883 = vrot.lane.b32.xlu0 %v2514, 40
      %v2884 = vpop.permute.xlu0 %2883
      %2885 = vrot.lane.b32.xlu0 %v2517, 40
      %v2886 = vpop.permute.xlu0 %2885
      %2887 = vrot.lane.b32.xlu0 %v2519, 40
      %v2888 = vpop.permute.xlu0 %2887
      %2889 = vrot.lane.b32.xlu0 %v2522, 40
      %v2890 = vpop.permute.xlu0 %2889
      %2891 = vrot.lane.b32.xlu0 %v2524, 40
      %v2892 = vpop.permute.xlu0 %2891
      %2893 = vrot.lane.b32.xlu0 %v2527, 40
      %v2894 = vpop.permute.xlu0 %2893
      %2895 = vrot.lane.b32.xlu0 %v2529, 40
      %v2896 = vpop.permute.xlu0 %2895
      %2897 = vrot.lane.b32.xlu0 %v2532, 40
      %v2898 = vpop.permute.xlu0 %2897
      %2899 = vrot.lane.b32.xlu0 %v2534, 40
      %v2900 = vpop.permute.xlu0 %2899
      %2901 = vrot.lane.b32.xlu0 %v2537, 40
      %v2902 = vpop.permute.xlu0 %2901
      %2903 = vrot.lane.b32.xlu0 %v2539, 40
      %v2904 = vpop.permute.xlu0 %2903
      %2905 = vrot.lane.b32.xlu0 %v2542, 40
      %v2906 = vpop.permute.xlu0 %2905
      %2907 = vrot.lane.b32.xlu0 %v2544, 40
      %v2908 = vpop.permute.xlu0 %2907
      %2909 = vrot.lane.b32.xlu0 %v2547, 40
      %v2910 = vpop.permute.xlu0 %2909
      %2911 = vrot.lane.b32.xlu0 %v2549, 40
      %v2912 = vpop.permute.xlu0 %2911
      %2913 = vrot.lane.b32.xlu0 %v2552, 40
      %v2914 = vpop.permute.xlu0 %2913
      %2915 = vrot.lane.b32.xlu0 %v2554, 40
      %v2916 = vpop.permute.xlu0 %2915
      %2917 = vrot.lane.b32.xlu0 %v2557, 40
      %v2918 = vpop.permute.xlu0 %2917
      %2919 = vrot.lane.b32.xlu0 %v2559, 40
      %v2920 = vpop.permute.xlu0 %2919
      %2921 = vrot.lane.b32.xlu0 %v2858, 40
      %v2922 = vpop.permute.xlu0 %2921
      %2923 = vrot.lane.b32.xlu0 %v2860, 40
      %v2924 = vpop.permute.xlu0 %2923
      %2959 = vrot.lane.b32.xlu0 %v2206, 48
      %v2960 = vpop.permute.xlu0 %2959
      %2961 = vrot.lane.b32.xlu0 %v2207, 48
      %v2962 = vpop.permute.xlu0 %2961
      %2963 = vrot.lane.b32.xlu0 %v2209, 48
      %v2964 = vpop.permute.xlu0 %2963
      %2965 = vrot.lane.b32.xlu0 %v2210, 48
      %v2966 = vpop.permute.xlu0 %2965
      %2967 = vrot.lane.b32.xlu0 %v2212, 48
      %v2968 = vpop.permute.xlu0 %2967
      %2969 = vrot.lane.b32.xlu0 %v2213, 48
      %v2970 = vpop.permute.xlu0 %2969
      %2971 = vrot.lane.b32.xlu0 %v2215, 48
      %v2972 = vpop.permute.xlu0 %2971
      %2973 = vrot.lane.b32.xlu0 %v2216, 48
      %v2974 = vpop.permute.xlu0 %2973
      %2975 = vrot.lane.b32.xlu0 %v2218, 48
      %v2976 = vpop.permute.xlu0 %2975
      %2977 = vrot.lane.b32.xlu0 %v2219, 48
      %v2978 = vpop.permute.xlu0 %2977
      %2979 = vrot.lane.b32.xlu0 %v2221, 48
      %v2980 = vpop.permute.xlu0 %2979
      %2981 = vrot.lane.b32.xlu0 %v2222, 48
      %v2982 = vpop.permute.xlu0 %2981
      %2983 = vrot.lane.b32.xlu0 %v2224, 48
      %v2984 = vpop.permute.xlu0 %2983
      %2985 = vrot.lane.b32.xlu0 %v2225, 48
      %v2986 = vpop.permute.xlu0 %2985
      %2987 = vrot.lane.b32.xlu0 %v2227, 48
      %v2988 = vpop.permute.xlu0 %2987
      %2989 = vrot.lane.b32.xlu0 %v2228, 48
      %v2990 = vpop.permute.xlu0 %2989
      %2991 = vrot.lane.b32.xlu0 %v2230, 48
      %v2992 = vpop.permute.xlu0 %2991
      %2993 = vrot.lane.b32.xlu0 %v2231, 48
      %v2994 = vpop.permute.xlu0 %2993
      %2995 = vrot.lane.b32.xlu0 %v2233, 48
      %v2996 = vpop.permute.xlu0 %2995
      %2997 = vrot.lane.b32.xlu0 %v2234, 48
      %v2998 = vpop.permute.xlu0 %2997
      %2999 = vrot.lane.b32.xlu0 %v2236, 48
      %v3000 = vpop.permute.xlu0 %2999
      %3001 = vrot.lane.b32.xlu0 %v2237, 48
      %v3002 = vpop.permute.xlu0 %3001
      %3003 = vrot.lane.b32.xlu0 %v2239, 48
      %v3004 = vpop.permute.xlu0 %3003
      %3005 = vrot.lane.b32.xlu0 %v2240, 48
      %v3006 = vpop.permute.xlu0 %3005
      %3007 = vrot.lane.b32.xlu0 %v2242, 48
      %v3008 = vpop.permute.xlu0 %3007
      %3009 = vrot.lane.b32.xlu0 %v2243, 48
      %v3010 = vpop.permute.xlu0 %3009
      %3011 = vrot.lane.b32.xlu0 %v2245, 48
      %v3012 = vpop.permute.xlu0 %3011
      %3013 = vrot.lane.b32.xlu0 %v2246, 48
      %v3014 = vpop.permute.xlu0 %3013
      %3015 = vrot.lane.b32.xlu0 %v2248, 48
      %v3016 = vpop.permute.xlu0 %3015
      %3017 = vrot.lane.b32.xlu0 %v2249, 48
      %v3018 = vpop.permute.xlu0 %3017
      %3019 = vrot.lane.b32.xlu0 %v2251, 48
      %v3020 = vpop.permute.xlu0 %3019
      %3021 = vrot.lane.b32.xlu0 %v2252, 48
      %v3022 = vpop.permute.xlu0 %3021
      %v3056 = vrot.slane %v2251, 1
      %v3057 = vrot.slane %v2252, 1
      %v3058 = vsel %vm573, %v3056, %v3057
      %v3059 = vrot.slane %v2253, 1
      %v3060 = vsel %vm573, %v3057, %v3059
      %3061 = vrot.lane.b32.xlu0 %v2316, 56
      %v3062 = vpop.permute.xlu0 %3061
      %3063 = vrot.lane.b32.xlu0 %v2318, 56
      %v3064 = vpop.permute.xlu0 %3063
      %3065 = vrot.lane.b32.xlu0 %v2321, 56
      %v3066 = vpop.permute.xlu0 %3065
      %3067 = vrot.lane.b32.xlu0 %v2323, 56
      %v3068 = vpop.permute.xlu0 %3067
      %3069 = vrot.lane.b32.xlu0 %v2326, 56
      %v3070 = vpop.permute.xlu0 %3069
      %3071 = vrot.lane.b32.xlu0 %v2328, 56
      %v3072 = vpop.permute.xlu0 %3071
      %3073 = vrot.lane.b32.xlu0 %v2331, 56
      %v3074 = vpop.permute.xlu0 %3073
      %3075 = vrot.lane.b32.xlu0 %v2333, 56
      %v3076 = vpop.permute.xlu0 %3075
      %3077 = vrot.lane.b32.xlu0 %v2336, 56
      %v3078 = vpop.permute.xlu0 %3077
      %3079 = vrot.lane.b32.xlu0 %v2338, 56
      %v3080 = vpop.permute.xlu0 %3079
      %3081 = vrot.lane.b32.xlu0 %v2341, 56
      %v3082 = vpop.permute.xlu0 %3081
      %3083 = vrot.lane.b32.xlu0 %v2343, 56
      %v3084 = vpop.permute.xlu0 %3083
      %3085 = vrot.lane.b32.xlu0 %v2346, 56
      %v3086 = vpop.permute.xlu0 %3085
      %3087 = vrot.lane.b32.xlu0 %v2348, 56
      %v3088 = vpop.permute.xlu0 %3087
      %3089 = vrot.lane.b32.xlu0 %v2351, 56
      %v3090 = vpop.permute.xlu0 %3089
      %3091 = vrot.lane.b32.xlu0 %v2353, 56
      %v3092 = vpop.permute.xlu0 %3091
      %3093 = vrot.lane.b32.xlu0 %v2356, 56
      %v3094 = vpop.permute.xlu0 %3093
      %3095 = vrot.lane.b32.xlu0 %v2358, 56
      %v3096 = vpop.permute.xlu0 %3095
      %3097 = vrot.lane.b32.xlu0 %v2361, 56
      %v3098 = vpop.permute.xlu0 %3097
      %3099 = vrot.lane.b32.xlu0 %v2363, 56
      %v3100 = vpop.permute.xlu0 %3099
      %3101 = vrot.lane.b32.xlu0 %v2366, 56
      %v3102 = vpop.permute.xlu0 %3101
      %3103 = vrot.lane.b32.xlu0 %v2368, 56
      %v3104 = vpop.permute.xlu0 %3103
      %3105 = vrot.lane.b32.xlu0 %v2371, 56
      %v3106 = vpop.permute.xlu0 %3105
      %3107 = vrot.lane.b32.xlu0 %v2373, 56
      %v3108 = vpop.permute.xlu0 %3107
      %3109 = vrot.lane.b32.xlu0 %v2376, 56
      %v3110 = vpop.permute.xlu0 %3109
      %3111 = vrot.lane.b32.xlu0 %v2378, 56
      %v3112 = vpop.permute.xlu0 %3111
      %3113 = vrot.lane.b32.xlu0 %v2381, 56
      %v3114 = vpop.permute.xlu0 %3113
      %3115 = vrot.lane.b32.xlu0 %v2383, 56
      %v3116 = vpop.permute.xlu0 %3115
      %3117 = vrot.lane.b32.xlu0 %v2757, 56
      %v3118 = vpop.permute.xlu0 %3117
      %3119 = vrot.lane.b32.xlu0 %v2759, 56
      %v3120 = vpop.permute.xlu0 %3119
      %3121 = vrot.lane.b32.xlu0 %v3058, 56
      %v3122 = vpop.permute.xlu0 %3121
      %3123 = vrot.lane.b32.xlu0 %v3060, 56
      %v3124 = vpop.permute.xlu0 %3123
      %v3157 = vrot.slane %v2251, 2
      %v3158 = vrot.slane %v2252, 2
      %v3159 = vsel %vm750, %v3157, %v3158
      %v3160 = vrot.slane %v2253, 2
      %v3161 = vsel %vm750, %v3158, %v3160
      %3162 = vrot.lane.b32.xlu0 %v2492, 64
      %v3163 = vpop.permute.xlu0 %3162
      %3164 = vrot.lane.b32.xlu0 %v2494, 64
      %v3165 = vpop.permute.xlu0 %3164
      %3166 = vrot.lane.b32.xlu0 %v2497, 64
      %v3167 = vpop.permute.xlu0 %3166
      %3168 = vrot.lane.b32.xlu0 %v2499, 64
      %v3169 = vpop.permute.xlu0 %3168
      %3170 = vrot.lane.b32.xlu0 %v2502, 64
      %v3171 = vpop.permute.xlu0 %3170
      %3172 = vrot.lane.b32.xlu0 %v2504, 64
      %v3173 = vpop.permute.xlu0 %3172
      %3174 = vrot.lane.b32.xlu0 %v2507, 64
      %v3175 = vpop.permute.xlu0 %3174
      %3176 = vrot.lane.b32.xlu0 %v2509, 64
      %v3177 = vpop.permute.xlu0 %3176
      %3178 = vrot.lane.b32.xlu0 %v2512, 64
      %v3179 = vpop.permute.xlu0 %3178
      %3180 = vrot.lane.b32.xlu0 %v2514, 64
      %v3181 = vpop.permute.xlu0 %3180
      %3182 = vrot.lane.b32.xlu0 %v2517, 64
      %v3183 = vpop.permute.xlu0 %3182
      %3184 = vrot.lane.b32.xlu0 %v2519, 64
      %v3185 = vpop.permute.xlu0 %3184
      %3186 = vrot.lane.b32.xlu0 %v2522, 64
      %v3187 = vpop.permute.xlu0 %3186
      %3188 = vrot.lane.b32.xlu0 %v2524, 64
      %v3189 = vpop.permute.xlu0 %3188
      %3190 = vrot.lane.b32.xlu0 %v2527, 64
      %v3191 = vpop.permute.xlu0 %3190
      %3192 = vrot.lane.b32.xlu0 %v2529, 64
      %v3193 = vpop.permute.xlu0 %3192
      %3194 = vrot.lane.b32.xlu0 %v2532, 64
      %v3195 = vpop.permute.xlu0 %3194
      %3196 = vrot.lane.b32.xlu0 %v2534, 64
      %v3197 = vpop.permute.xlu0 %3196
      %3198 = vrot.lane.b32.xlu0 %v2537, 64
      %v3199 = vpop.permute.xlu0 %3198
      %3200 = vrot.lane.b32.xlu0 %v2539, 64
      %v3201 = vpop.permute.xlu0 %3200
      %3202 = vrot.lane.b32.xlu0 %v2542, 64
      %v3203 = vpop.permute.xlu0 %3202
      %3204 = vrot.lane.b32.xlu0 %v2544, 64
      %v3205 = vpop.permute.xlu0 %3204
      %3206 = vrot.lane.b32.xlu0 %v2547, 64
      %v3207 = vpop.permute.xlu0 %3206
      %3208 = vrot.lane.b32.xlu0 %v2549, 64
      %v3209 = vpop.permute.xlu0 %3208
      %3210 = vrot.lane.b32.xlu0 %v2552, 64
      %v3211 = vpop.permute.xlu0 %3210
      %3212 = vrot.lane.b32.xlu0 %v2554, 64
      %v3213 = vpop.permute.xlu0 %3212
      %3214 = vrot.lane.b32.xlu0 %v2557, 64
      %v3215 = vpop.permute.xlu0 %3214
      %3216 = vrot.lane.b32.xlu0 %v2559, 64
      %v3217 = vpop.permute.xlu0 %3216
      %3218 = vrot.lane.b32.xlu0 %v2858, 64
      %v3219 = vpop.permute.xlu0 %3218
      %3220 = vrot.lane.b32.xlu0 %v2860, 64
      %v3221 = vpop.permute.xlu0 %3220
      %3222 = vrot.lane.b32.xlu0 %v3159, 64
      %v3223 = vpop.permute.xlu0 %3222
      %3224 = vrot.lane.b32.xlu0 %v3161, 64
      %v3225 = vpop.permute.xlu0 %3224
      %v3258 = vsel %vm326, %v2200, %v2385
      %v3259 = vsel %vm326, %v2201, %v2387
      %v3260 = vsel %vm326, %v2203, %v2389
      %v3261 = vsel %vm326, %v2204, %v2391
      %v3262 = vsel %vm326, %v2206, %v2393
      %v3263 = vsel %vm326, %v2207, %v2395
      %v3264 = vsel %vm326, %v2209, %v2397
      %v3265 = vsel %vm326, %v2210, %v2399
      %v3266 = vsel %vm326, %v2212, %v2401
      %v3267 = vsel %vm326, %v2213, %v2403
      %v3268 = vsel %vm326, %v2215, %v2405
      %v3269 = vsel %vm326, %v2216, %v2407
      %v3270 = vsel %vm326, %v2218, %v2409
      %v3271 = vsel %vm326, %v2219, %v2411
      %v3272 = vsel %vm326, %v2221, %v2413
      %v3273 = vsel %vm326, %v2222, %v2415
      %v3274 = vsel %vm326, %v2224, %v2417
      %v3275 = vsel %vm326, %v2225, %v2419
      %v3276 = vsel %vm326, %v2227, %v2421
      %v3277 = vsel %vm326, %v2228, %v2423
      %v3278 = vsel %vm326, %v2230, %v2425
      %v3279 = vsel %vm326, %v2231, %v2427
      %v3280 = vsel %vm326, %v2233, %v2429
      %v3281 = vsel %vm326, %v2234, %v2431
      %v3282 = vsel %vm326, %v2236, %v2433
      %v3283 = vsel %vm326, %v2237, %v2435
      %v3284 = vsel %vm326, %v2239, %v2437
      %v3285 = vsel %vm326, %v2240, %v2439
      %v3286 = vsel %vm326, %v2242, %v2441
      %v3287 = vsel %vm326, %v2243, %v2443
      %v3288 = vsel %vm326, %v2245, %v2445
      %v3289 = vsel %vm326, %v2246, %v2447
      %v3290 = vsel %vm1626, %v3258, %v2561
      %v3291 = vsel %vm1626, %v3259, %v2563
      %v3292 = vsel %vm1626, %v3260, %v2565
      %v3293 = vsel %vm1626, %v3261, %v2567
      %v3294 = vsel %vm1626, %v3262, %v2569
      %v3295 = vsel %vm1626, %v3263, %v2571
      %v3296 = vsel %vm1626, %v3264, %v2573
      %v3297 = vsel %vm1626, %v3265, %v2575
      %v3298 = vsel %vm1626, %v3266, %v2577
      %v3299 = vsel %vm1626, %v3267, %v2579
      %v3300 = vsel %vm1626, %v3268, %v2581
      %v3301 = vsel %vm1626, %v3269, %v2583
      %v3302 = vsel %vm1626, %v3270, %v2585
      %v3303 = vsel %vm1626, %v3271, %v2587
      %v3304 = vsel %vm1626, %v3272, %v2589
      %v3305 = vsel %vm1626, %v3273, %v2591
      %v3306 = vsel %vm1626, %v3274, %v2593
      %v3307 = vsel %vm1626, %v3275, %v2595
      %v3308 = vsel %vm1626, %v3276, %v2597
      %v3309 = vsel %vm1626, %v3277, %v2599
      %v3310 = vsel %vm1626, %v3278, %v2601
      %v3311 = vsel %vm1626, %v3279, %v2603
      %v3312 = vsel %vm1626, %v3280, %v2605
      %v3313 = vsel %vm1626, %v3281, %v2607
      %v3314 = vsel %vm1626, %v3282, %v2609
      %v3315 = vsel %vm1626, %v3283, %v2611
      %v3316 = vsel %vm1626, %v3284, %v2613
      %v3317 = vsel %vm1626, %v3285, %v2615
      %v3318 = vsel %vm1626, %v3286, %v2617
      %v3319 = vsel %vm1626, %v3287, %v2619
      %v3320 = vsel %vm1626, %v3288, %v2621
      %v3321 = vsel %vm1626, %v3289, %v2623
      %v3322 = vsel %vm1692, %v3290, %v2659
      %v3323 = vsel %vm1692, %v3291, %v2661
      %v3324 = vsel %vm1692, %v3292, %v2663
      %v3325 = vsel %vm1692, %v3293, %v2665
      %v3326 = vsel %vm1692, %v3294, %v2667
      %v3327 = vsel %vm1692, %v3295, %v2669
      %v3328 = vsel %vm1692, %v3296, %v2671
      %v3329 = vsel %vm1692, %v3297, %v2673
      %v3330 = vsel %vm1692, %v3298, %v2675
      %v3331 = vsel %vm1692, %v3299, %v2677
      %v3332 = vsel %vm1692, %v3300, %v2679
      %v3333 = vsel %vm1692, %v3301, %v2681
      %v3334 = vsel %vm1692, %v3302, %v2683
      %v3335 = vsel %vm1692, %v3303, %v2685
      %v3336 = vsel %vm1692, %v3304, %v2687
      %v3337 = vsel %vm1692, %v3305, %v2689
      %v3338 = vsel %vm1692, %v3306, %v2691
      %v3339 = vsel %vm1692, %v3307, %v2693
      %v3340 = vsel %vm1692, %v3308, %v2695
      %v3341 = vsel %vm1692, %v3309, %v2697
      %v3342 = vsel %vm1692, %v3310, %v2699
      %v3343 = vsel %vm1692, %v3311, %v2701
      %v3344 = vsel %vm1692, %v3312, %v2703
      %v3345 = vsel %vm1692, %v3313, %v2705
      %v3346 = vsel %vm1692, %v3314, %v2707
      %v3347 = vsel %vm1692, %v3315, %v2709
      %v3348 = vsel %vm1692, %v3316, %v2711
      %v3349 = vsel %vm1692, %v3317, %v2713
      %v3350 = vsel %vm1692, %v3318, %v2715
      %v3351 = vsel %vm1692, %v3319, %v2717
      %v3352 = vsel %vm1692, %v3320, %v2719
      %v3353 = vsel %vm1692, %v3321, %v2721
      %v3354 = vsel %vm1758, %v3322, %v2761
      %v3355 = vsel %vm1758, %v3323, %v2763
      %v3356 = vsel %vm1758, %v3324, %v2765
      %v3357 = vsel %vm1758, %v3325, %v2767
      %v3358 = vsel %vm1758, %v3326, %v2769
      %v3359 = vsel %vm1758, %v3327, %v2771
      %v3360 = vsel %vm1758, %v3328, %v2773
      %v3361 = vsel %vm1758, %v3329, %v2775
      %v3362 = vsel %vm1758, %v3330, %v2777
      %v3363 = vsel %vm1758, %v3331, %v2779
      %v3364 = vsel %vm1758, %v3332, %v2781
      %v3365 = vsel %vm1758, %v3333, %v2783
      %v3366 = vsel %vm1758, %v3334, %v2785
      %v3367 = vsel %vm1758, %v3335, %v2787
      %v3368 = vsel %vm1758, %v3336, %v2789
      %v3369 = vsel %vm1758, %v3337, %v2791
      %v3370 = vsel %vm1758, %v3338, %v2793
      %v3371 = vsel %vm1758, %v3339, %v2795
      %v3372 = vsel %vm1758, %v3340, %v2797
      %v3373 = vsel %vm1758, %v3341, %v2799
      %v3374 = vsel %vm1758, %v3342, %v2801
      %v3375 = vsel %vm1758, %v3343, %v2803
      %v3376 = vsel %vm1758, %v3344, %v2805
      %v3377 = vsel %vm1758, %v3345, %v2807
      %v3378 = vsel %vm1758, %v3346, %v2809
      %v3379 = vsel %vm1758, %v3347, %v2811
      %v3380 = vsel %vm1758, %v3348, %v2813
      %v3381 = vsel %vm1758, %v3349, %v2815
      %v3382 = vsel %vm1758, %v3350, %v2817
      %v3383 = vsel %vm1758, %v3351, %v2819
      %v3384 = vsel %vm1758, %v3352, %v2821
      %v3385 = vsel %vm1758, %v3353, %v2823
      %vm3386 = vcmask 326656
      %v3387 = vsel %vm3386, %v3354, %v2862
      %v3388 = vsel %vm3386, %v3355, %v2864
      %v3389 = vsel %vm3386, %v3356, %v2866
      %v3390 = vsel %vm3386, %v3357, %v2868
      %v3391 = vsel %vm3386, %v3358, %v2870
      %v3392 = vsel %vm3386, %v3359, %v2872
      %v3393 = vsel %vm3386, %v3360, %v2874
      %v3394 = vsel %vm3386, %v3361, %v2876
      %v3395 = vsel %vm3386, %v3362, %v2878
      %v3396 = vsel %vm3386, %v3363, %v2880
      %v3397 = vsel %vm3386, %v3364, %v2882
      %v3398 = vsel %vm3386, %v3365, %v2884
      %v3399 = vsel %vm3386, %v3366, %v2886
      %v3400 = vsel %vm3386, %v3367, %v2888
      %v3401 = vsel %vm3386, %v3368, %v2890
      %v3402 = vsel %vm3386, %v3369, %v2892
      %v3403 = vsel %vm3386, %v3370, %v2894
      %v3404 = vsel %vm3386, %v3371, %v2896
      %v3405 = vsel %vm3386, %v3372, %v2898
      %v3406 = vsel %vm3386, %v3373, %v2900
      %v3407 = vsel %vm3386, %v3374, %v2902
      %v3408 = vsel %vm3386, %v3375, %v2904
      %v3409 = vsel %vm3386, %v3376, %v2906
      %v3410 = vsel %vm3386, %v3377, %v2908
      %v3411 = vsel %vm3386, %v3378, %v2910
      %v3412 = vsel %vm3386, %v3379, %v2912
      %v3413 = vsel %vm3386, %v3380, %v2914
      %v3414 = vsel %vm3386, %v3381, %v2916
      %v3415 = vsel %vm3386, %v3382, %v2918
      %v3416 = vsel %vm3386, %v3383, %v2920
      %v3417 = vsel %vm3386, %v3384, %v2922
      %v3418 = vsel %vm3386, %v3385, %v2924
      %vm3419 = vcmask 392192
      %v3420 = vsel %vm3419, %v3387, %v2960
      %v3421 = vsel %vm3419, %v3388, %v2962
      %v3422 = vsel %vm3419, %v3389, %v2964
      %v3423 = vsel %vm3419, %v3390, %v2966
      %v3424 = vsel %vm3419, %v3391, %v2968
      %v3425 = vsel %vm3419, %v3392, %v2970
      %v3426 = vsel %vm3419, %v3393, %v2972
      %v3427 = vsel %vm3419, %v3394, %v2974
      %v3428 = vsel %vm3419, %v3395, %v2976
      %v3429 = vsel %vm3419, %v3396, %v2978
      %v3430 = vsel %vm3419, %v3397, %v2980
      %v3431 = vsel %vm3419, %v3398, %v2982
      %v3432 = vsel %vm3419, %v3399, %v2984
      %v3433 = vsel %vm3419, %v3400, %v2986
      %v3434 = vsel %vm3419, %v3401, %v2988
      %v3435 = vsel %vm3419, %v3402, %v2990
      %v3436 = vsel %vm3419, %v3403, %v2992
      %v3437 = vsel %vm3419, %v3404, %v2994
      %v3438 = vsel %vm3419, %v3405, %v2996
      %v3439 = vsel %vm3419, %v3406, %v2998
      %v3440 = vsel %vm3419, %v3407, %v3000
      %v3441 = vsel %vm3419, %v3408, %v3002
      %v3442 = vsel %vm3419, %v3409, %v3004
      %v3443 = vsel %vm3419, %v3410, %v3006
      %v3444 = vsel %vm3419, %v3411, %v3008
      %v3445 = vsel %vm3419, %v3412, %v3010
      %v3446 = vsel %vm3419, %v3413, %v3012
      %v3447 = vsel %vm3419, %v3414, %v3014
      %v3448 = vsel %vm3419, %v3415, %v3016
      %v3449 = vsel %vm3419, %v3416, %v3018
      %v3450 = vsel %vm3419, %v3417, %v3020
      %v3451 = vsel %vm3419, %v3418, %v3022
      %vm3452 = vcmask 457728
      %v3453 = vsel %vm3452, %v3420, %v3062
      %v3454 = vsel %vm3452, %v3421, %v3064
      %v3455 = vsel %vm3452, %v3422, %v3066
      %v3456 = vsel %vm3452, %v3423, %v3068
      %v3457 = vsel %vm3452, %v3424, %v3070
      %v3458 = vsel %vm3452, %v3425, %v3072
      %v3459 = vsel %vm3452, %v3426, %v3074
      %v3460 = vsel %vm3452, %v3427, %v3076
      %v3461 = vsel %vm3452, %v3428, %v3078
      %v3462 = vsel %vm3452, %v3429, %v3080
      %v3463 = vsel %vm3452, %v3430, %v3082
      %v3464 = vsel %vm3452, %v3431, %v3084
      %v3465 = vsel %vm3452, %v3432, %v3086
      %v3466 = vsel %vm3452, %v3433, %v3088
      %v3467 = vsel %vm3452, %v3434, %v3090
      %v3468 = vsel %vm3452, %v3435, %v3092
      %v3469 = vsel %vm3452, %v3436, %v3094
      %v3470 = vsel %vm3452, %v3437, %v3096
      %v3471 = vsel %vm3452, %v3438, %v3098
      %v3472 = vsel %vm3452, %v3439, %v3100
      %v3473 = vsel %vm3452, %v3440, %v3102
      %v3474 = vsel %vm3452, %v3441, %v3104
      %v3475 = vsel %vm3452, %v3442, %v3106
      %v3476 = vsel %vm3452, %v3443, %v3108
      %v3477 = vsel %vm3452, %v3444, %v3110
      %v3478 = vsel %vm3452, %v3445, %v3112
      %v3479 = vsel %vm3452, %v3446, %v3114
      %v3480 = vsel %vm3452, %v3447, %v3116
      %v3481 = vsel %vm3452, %v3448, %v3118
      %v3482 = vsel %vm3452, %v3449, %v3120
      %v3483 = vsel %vm3452, %v3450, %v3122
      %v3484 = vsel %vm3452, %v3451, %v3124
      %vm3485 = vcmask 523264
      %v3486 = vsel %vm3485, %v3453, %v3163
      %v3487 = vsel %vm3485, %v3454, %v3165
      %v3488 = vsel %vm3485, %v3455, %v3167
      %v3489 = vsel %vm3485, %v3456, %v3169
      %v3490 = vsel %vm3485, %v3457, %v3171
      %v3491 = vsel %vm3485, %v3458, %v3173
      %v3492 = vsel %vm3485, %v3459, %v3175
      %v3493 = vsel %vm3485, %v3460, %v3177
      %v3494 = vsel %vm3485, %v3461, %v3179
      %v3495 = vsel %vm3485, %v3462, %v3181
      %v3496 = vsel %vm3485, %v3463, %v3183
      %v3497 = vsel %vm3485, %v3464, %v3185
      %v3498 = vsel %vm3485, %v3465, %v3187
      %v3499 = vsel %vm3485, %v3466, %v3189
      %v3500 = vsel %vm3485, %v3467, %v3191
      %v3501 = vsel %vm3485, %v3468, %v3193
      %v3502 = vsel %vm3485, %v3469, %v3195
      %v3503 = vsel %vm3485, %v3470, %v3197
      %v3504 = vsel %vm3485, %v3471, %v3199
      %v3505 = vsel %vm3485, %v3472, %v3201
      %v3506 = vsel %vm3485, %v3473, %v3203
      %v3507 = vsel %vm3485, %v3474, %v3205
      %v3508 = vsel %vm3485, %v3475, %v3207
      %v3509 = vsel %vm3485, %v3476, %v3209
      %v3510 = vsel %vm3485, %v3477, %v3211
      %v3511 = vsel %vm3485, %v3478, %v3213
      %v3512 = vsel %vm3485, %v3479, %v3215
      %v3513 = vsel %vm3485, %v3480, %v3217
      %v3514 = vsel %vm3485, %v3481, %v3219
      %v3515 = vsel %vm3485, %v3482, %v3221
      %v3516 = vsel %vm3485, %v3483, %v3223
      %v3517 = vsel %vm3485, %v3484, %v3225
      %v3518 = vpack.c.bf16 %v3486, %v3486
      %v3519 = vpack.c.bf16 %v3487, %v3487
      %v3520 = vpack.c.bf16 %v3488, %v3488
      %v3521 = vpack.c.bf16 %v3489, %v3489
      %v3522 = vpack.c.bf16 %v3490, %v3490
      %v3523 = vpack.c.bf16 %v3491, %v3491
      %v3524 = vpack.c.bf16 %v3492, %v3492
      %v3525 = vpack.c.bf16 %v3493, %v3493
      %v3526 = vpack.c.bf16 %v3494, %v3494
      %v3527 = vpack.c.bf16 %v3495, %v3495
      %v3528 = vpack.c.bf16 %v3496, %v3496
      %v3529 = vpack.c.bf16 %v3497, %v3497
      %v3530 = vpack.c.bf16 %v3498, %v3498
      %v3531 = vpack.c.bf16 %v3499, %v3499
      %v3532 = vpack.c.bf16 %v3500, %v3500
      %v3533 = vpack.c.bf16 %v3501, %v3501
      %v3534 = vpack.c.bf16 %v3502, %v3502
      %v3535 = vpack.c.bf16 %v3503, %v3503
      %v3536 = vpack.c.bf16 %v3504, %v3504
      %v3537 = vpack.c.bf16 %v3505, %v3505
      %v3538 = vpack.c.bf16 %v3506, %v3506
      %v3539 = vpack.c.bf16 %v3507, %v3507
      %v3540 = vpack.c.bf16 %v3508, %v3508
      %v3541 = vpack.c.bf16 %v3509, %v3509
      %v3542 = vpack.c.bf16 %v3510, %v3510
      %v3543 = vpack.c.bf16 %v3511, %v3511
      %v3544 = vpack.c.bf16 %v3512, %v3512
      %v3545 = vpack.c.bf16 %v3513, %v3513
      %v3546 = vpack.c.bf16 %v3514, %v3514
      %v3547 = vpack.c.bf16 %v3515, %v3515
      %v3548 = vpack.c.bf16 %v3516, %v3516
      %v3549 = vpack.c.bf16 %v3517, %v3517
      %v3550 = vld [vmem:[%s4] sm:$0xf]
      %v3551 = vld [vmem:[%s4 + $0x4] sm:$0xf]
      %v3552 = vld [vmem:[%s4 + $0x8] sm:$0xf]
      %v3553 = vld [vmem:[%s4 + $0xc] sm:$0xf]
      %v3554 = vld [vmem:[%s4 + $0x10] sm:$0xf]
      %v3555 = vld [vmem:[%s4 + $0x14] sm:$0xf]
      %v3556 = vld [vmem:[%s4 + $0x18] sm:$0xf]
      %v3557 = vld [vmem:[%s4 + $0x1c] sm:$0xf]
      %v3558 = vld [vmem:[%s4 + $0x20] sm:$0xf]
      %v3591 = vunpack.c.l.b16 %v3518
      %v3592 = vunpack.c.l.b16 %v3519
      %v3593 = vunpack.c.l.b16 %v3520
      %v3594 = vunpack.c.l.b16 %v3521
      %v3595 = vunpack.c.l.b16 %v3522
      %v3596 = vunpack.c.l.b16 %v3523
      %v3597 = vunpack.c.l.b16 %v3524
      %v3598 = vunpack.c.l.b16 %v3525
      %v3599 = vunpack.c.l.b16 %v3526
      %v3600 = vunpack.c.l.b16 %v3527
      %v3601 = vunpack.c.l.b16 %v3528
      %v3602 = vunpack.c.l.b16 %v3529
      %v3603 = vunpack.c.l.b16 %v3530
      %v3604 = vunpack.c.l.b16 %v3531
      %v3605 = vunpack.c.l.b16 %v3532
      %v3606 = vunpack.c.l.b16 %v3533
      %v3607 = vunpack.c.l.b16 %v3534
      %v3608 = vunpack.c.l.b16 %v3535
      %v3609 = vunpack.c.l.b16 %v3536
      %v3610 = vunpack.c.l.b16 %v3537
      %v3611 = vunpack.c.l.b16 %v3538
      %v3612 = vunpack.c.l.b16 %v3539
      %v3613 = vunpack.c.l.b16 %v3540
      %v3614 = vunpack.c.l.b16 %v3541
      %v3615 = vunpack.c.l.b16 %v3542
      %v3616 = vunpack.c.l.b16 %v3543
      %v3617 = vunpack.c.l.b16 %v3544
      %v3618 = vunpack.c.l.b16 %v3545
      %v3619 = vunpack.c.l.b16 %v3546
      %v3620 = vunpack.c.l.b16 %v3547
      %v3621 = vunpack.c.l.b16 %v3548
      %v3622 = vunpack.c.l.b16 %v3549
      %v3623 = vpack.c.b16 %v3592, %v3591
      %v3624 = vpack.c.b16 %v3594, %v3593
      %v3625 = vpack.c.b16 %v3596, %v3595
      %v3626 = vpack.c.b16 %v3598, %v3597
      %v3627 = vpack.c.b16 %v3600, %v3599
      %v3628 = vpack.c.b16 %v3602, %v3601
      %v3629 = vpack.c.b16 %v3604, %v3603
      %v3630 = vpack.c.b16 %v3606, %v3605
      %v3631 = vpack.c.b16 %v3608, %v3607
      %v3632 = vpack.c.b16 %v3610, %v3609
      %v3633 = vpack.c.b16 %v3612, %v3611
      %v3634 = vpack.c.b16 %v3614, %v3613
      %v3635 = vpack.c.b16 %v3616, %v3615
      %v3636 = vpack.c.b16 %v3618, %v3617
      %v3637 = vpack.c.b16 %v3620, %v3619
      %v3638 = vpack.c.b16 %v3622, %v3621
      %v3648 = vunpack.c.l.b16 %v3550
      %v3649 = vunpack.c.l.b16 %v3551
      %v3650 = vunpack.c.l.b16 %v3552
      %v3651 = vunpack.c.l.b16 %v3553
      %v3652 = vunpack.c.l.b16 %v3554
      %v3653 = vunpack.c.l.b16 %v3555
      %v3654 = vunpack.c.l.b16 %v3556
      %v3655 = vunpack.c.l.b16 %v3557
      %v3656 = vunpack.c.l.b16 %v3558
      %v3657 = vpack.c.b16 %v3649, %v3648
      %v3658 = vpack.c.b16 %v3651, %v3650
      %v3659 = vpack.c.b16 %v3653, %v3652
      %v3660 = vpack.c.b16 %v3655, %v3654
      %v3661 = vpack.c.b16 %v3656, %v3656
      %vm3666 = vcmask 588800
      %v3668 = vsel %vm3666, %v3623, 0
      %v3671 = vsel %vm3666, %v3624, 0
      %v3674 = vsel %vm3666, %v3625, 0
      %v3677 = vsel %vm3666, %v3626, 0
      %v3680 = vsel %vm3666, %v3627, 0
      %v3683 = vsel %vm3666, %v3628, 0
      %v3686 = vsel %vm3666, %v3629, 0
      %v3689 = vsel %vm3666, %v3630, 0
      %v3692 = vsel %vm3666, %v3631, 0
      %v3695 = vsel %vm3666, %v3632, 0
      %v3698 = vsel %vm3666, %v3633, 0
      %v3701 = vsel %vm3666, %v3634, 0
      %v3704 = vsel %vm3666, %v3635, 0
      %v3707 = vsel %vm3666, %v3636, 0
      %v3710 = vsel %vm3666, %v3637, 0
      %v3713 = vsel %vm3666, %v3638, 0
      %vm3715 = vcmask 1043456
      %v3717 = vsel %vm3715, %v3661, 0
      %3719 = vmatpush.bf16.msra.mxu0 0
      %3720 = vmatpush.bf16.msra.mxu0 0
      %3721 = vmatpush.bf16.msra.mxu0 0
      %3722 = vmatpush.bf16.msra.mxu0 %v3717
      %3723 = vmatpush.bf16.msra.mxu0 %v3660
      %3724 = vmatpush.bf16.msra.mxu0 %v3659
      %3725 = vmatpush.bf16.msra.mxu0 %v3658
      %3726 = vmatpush.bf16.msra.mxu0 %v3657
      %3727 = vmatmul.bf16.gmra.mxu0 %v3668
      %v3728 = vpop.f32.mrf.mxu0
      %v3729 = vadd.f32 0.0, %v3728
      %v3730 = vpop.f32.mrf.mxu0
      %v3731 = vadd.f32 0.0, %v3730
      %3732 = vmatmul.bf16.gmra.mxu0 %v3671
      %v3733 = vpop.f32.mrf.mxu0
      %v3734 = vadd.f32 0.0, %v3733
      %v3735 = vpop.f32.mrf.mxu0
      %v3736 = vadd.f32 0.0, %v3735
      %3737 = vmatmul.bf16.gmra.mxu0 %v3674
      %v3738 = vpop.f32.mrf.mxu0
      %v3739 = vadd.f32 0.0, %v3738
      %v3740 = vpop.f32.mrf.mxu0
      %v3741 = vadd.f32 0.0, %v3740
      %3742 = vmatmul.bf16.gmra.mxu0 %v3677
      %v3743 = vpop.f32.mrf.mxu0
      %v3744 = vadd.f32 0.0, %v3743
      %v3745 = vpop.f32.mrf.mxu0
      %v3746 = vadd.f32 0.0, %v3745
      %3747 = vmatmul.bf16.gmra.mxu0 %v3680
      %v3748 = vpop.f32.mrf.mxu0
      %v3749 = vadd.f32 0.0, %v3748
      %v3750 = vpop.f32.mrf.mxu0
      %v3751 = vadd.f32 0.0, %v3750
      %3752 = vmatmul.bf16.gmra.mxu0 %v3683
      %v3753 = vpop.f32.mrf.mxu0
      %v3754 = vadd.f32 0.0, %v3753
      %v3755 = vpop.f32.mrf.mxu0
      %v3756 = vadd.f32 0.0, %v3755
      %3757 = vmatmul.bf16.gmra.mxu0 %v3686
      %v3758 = vpop.f32.mrf.mxu0
      %v3759 = vadd.f32 0.0, %v3758
      %v3760 = vpop.f32.mrf.mxu0
      %v3761 = vadd.f32 0.0, %v3760
      %3762 = vmatmul.bf16.gmra.mxu0 %v3689
      %v3763 = vpop.f32.mrf.mxu0
      %v3764 = vadd.f32 0.0, %v3763
      %v3765 = vpop.f32.mrf.mxu0
      %v3766 = vadd.f32 0.0, %v3765
      %3767 = vmatmul.bf16.gmra.mxu0 %v3692
      %v3768 = vpop.f32.mrf.mxu0
      %v3769 = vadd.f32 0.0, %v3768
      %v3770 = vpop.f32.mrf.mxu0
      %v3771 = vadd.f32 0.0, %v3770
      %3772 = vmatmul.bf16.gmra.mxu0 %v3695
      %v3773 = vpop.f32.mrf.mxu0
      %v3774 = vadd.f32 0.0, %v3773
      %v3775 = vpop.f32.mrf.mxu0
      %v3776 = vadd.f32 0.0, %v3775
      %3777 = vmatmul.bf16.gmra.mxu0 %v3698
      %v3778 = vpop.f32.mrf.mxu0
      %v3779 = vadd.f32 0.0, %v3778
      %v3780 = vpop.f32.mrf.mxu0
      %v3781 = vadd.f32 0.0, %v3780
      %3782 = vmatmul.bf16.gmra.mxu0 %v3701
      %v3783 = vpop.f32.mrf.mxu0
      %v3784 = vadd.f32 0.0, %v3783
      %v3785 = vpop.f32.mrf.mxu0
      %v3786 = vadd.f32 0.0, %v3785
      %3787 = vmatmul.bf16.gmra.mxu0 %v3704
      %v3788 = vpop.f32.mrf.mxu0
      %v3789 = vadd.f32 0.0, %v3788
      %v3790 = vpop.f32.mrf.mxu0
      %v3791 = vadd.f32 0.0, %v3790
      %3792 = vmatmul.bf16.gmra.mxu0 %v3707
      %v3793 = vpop.f32.mrf.mxu0
      %v3794 = vadd.f32 0.0, %v3793
      %v3795 = vpop.f32.mrf.mxu0
      %v3796 = vadd.f32 0.0, %v3795
      %3797 = vmatmul.bf16.gmra.mxu0 %v3710
      %v3798 = vpop.f32.mrf.mxu0
      %v3799 = vadd.f32 0.0, %v3798
      %v3800 = vpop.f32.mrf.mxu0
      %v3801 = vadd.f32 0.0, %v3800
      %3802 = vmatmul.bf16.gmra.mxu0 %v3713
      %v3803 = vpop.f32.mrf.mxu0
      %v3804 = vadd.f32 0.0, %v3803
      %v3805 = vpop.f32.mrf.mxu0
      %v3806 = vadd.f32 0.0, %v3805
      %3807 = vdwg.mxu0
      %v3809 = vperm.slane %v2254, 0
      %v3811 = vmul.f32 %v3729, %v3809
      %v3812 = vmul.f32 %v3731, %v3809
      %v3813 = vmul.f32 %v3734, %v3809
      %v3814 = vmul.f32 %v3736, %v3809
      %v3815 = vmul.f32 %v3739, %v3809
      %v3816 = vmul.f32 %v3741, %v3809
      %v3817 = vmul.f32 %v3744, %v3809
      %v3818 = vmul.f32 %v3746, %v3809
      %v3819 = vmul.f32 %v3749, %v3809
      %v3820 = vmul.f32 %v3751, %v3809
      %v3821 = vmul.f32 %v3754, %v3809
      %v3822 = vmul.f32 %v3756, %v3809
      %v3823 = vmul.f32 %v3759, %v3809
      %v3824 = vmul.f32 %v3761, %v3809
      %v3825 = vmul.f32 %v3764, %v3809
      %v3826 = vmul.f32 %v3766, %v3809
      %v3827 = vmul.f32 %v3769, %v3809
      %v3828 = vmul.f32 %v3771, %v3809
      %v3829 = vmul.f32 %v3774, %v3809
      %v3830 = vmul.f32 %v3776, %v3809
      %v3831 = vmul.f32 %v3779, %v3809
      %v3832 = vmul.f32 %v3781, %v3809
      %v3833 = vmul.f32 %v3784, %v3809
      %v3834 = vmul.f32 %v3786, %v3809
      %v3835 = vmul.f32 %v3789, %v3809
      %v3836 = vmul.f32 %v3791, %v3809
      %v3837 = vmul.f32 %v3794, %v3809
      %v3838 = vmul.f32 %v3796, %v3809
      %v3839 = vmul.f32 %v3799, %v3809
      %v3840 = vmul.f32 %v3801, %v3809
      %v3841 = vmul.f32 %v3804, %v3809
      %v3842 = vmul.f32 %v3806, %v3809
      %v3844 = vperm.slane %v2255, 0
      %v3846 = vadd.f32 %v3811, %v3844
      %v3847 = vadd.f32 %v3812, %v3844
      %v3848 = vadd.f32 %v3813, %v3844
      %v3849 = vadd.f32 %v3814, %v3844
      %v3850 = vadd.f32 %v3815, %v3844
      %v3851 = vadd.f32 %v3816, %v3844
      %v3852 = vadd.f32 %v3817, %v3844
      %v3853 = vadd.f32 %v3818, %v3844
      %v3854 = vadd.f32 %v3819, %v3844
      %v3855 = vadd.f32 %v3820, %v3844
      %v3856 = vadd.f32 %v3821, %v3844
      %v3857 = vadd.f32 %v3822, %v3844
      %v3858 = vadd.f32 %v3823, %v3844
      %v3859 = vadd.f32 %v3824, %v3844
      %v3860 = vadd.f32 %v3825, %v3844
      %v3861 = vadd.f32 %v3826, %v3844
      %v3862 = vadd.f32 %v3827, %v3844
      %v3863 = vadd.f32 %v3828, %v3844
      %v3864 = vadd.f32 %v3829, %v3844
      %v3865 = vadd.f32 %v3830, %v3844
      %v3866 = vadd.f32 %v3831, %v3844
      %v3867 = vadd.f32 %v3832, %v3844
      %v3868 = vadd.f32 %v3833, %v3844
      %v3869 = vadd.f32 %v3834, %v3844
      %v3870 = vadd.f32 %v3835, %v3844
      %v3871 = vadd.f32 %v3836, %v3844
      %v3872 = vadd.f32 %v3837, %v3844
      %v3873 = vadd.f32 %v3838, %v3844
      %v3874 = vadd.f32 %v3839, %v3844
      %v3875 = vadd.f32 %v3840, %v3844
      %v3876 = vadd.f32 %v3841, %v3844
      %v3877 = vadd.f32 %v3842, %v3844
      %v3878 = vmax.f32 %v3846, 0.0
      %v3879 = vmax.f32 %v3847, 0.0
      %v3880 = vmax.f32 %v3848, 0.0
      %v3881 = vmax.f32 %v3849, 0.0
      %v3882 = vmax.f32 %v3850, 0.0
      %v3883 = vmax.f32 %v3851, 0.0
      %v3884 = vmax.f32 %v3852, 0.0
      %v3885 = vmax.f32 %v3853, 0.0
      %v3886 = vmax.f32 %v3854, 0.0
      %v3887 = vmax.f32 %v3855, 0.0
      %v3888 = vmax.f32 %v3856, 0.0
      %v3889 = vmax.f32 %v3857, 0.0
      %v3890 = vmax.f32 %v3858, 0.0
      %v3891 = vmax.f32 %v3859, 0.0
      %v3892 = vmax.f32 %v3860, 0.0
      %v3893 = vmax.f32 %v3861, 0.0
      %v3894 = vmax.f32 %v3862, 0.0
      %v3895 = vmax.f32 %v3863, 0.0
      %v3896 = vmax.f32 %v3864, 0.0
      %v3897 = vmax.f32 %v3865, 0.0
      %v3898 = vmax.f32 %v3866, 0.0
      %v3899 = vmax.f32 %v3867, 0.0
      %v3900 = vmax.f32 %v3868, 0.0
      %v3901 = vmax.f32 %v3869, 0.0
      %v3902 = vmax.f32 %v3870, 0.0
      %v3903 = vmax.f32 %v3871, 0.0
      %v3904 = vmax.f32 %v3872, 0.0
      %v3905 = vmax.f32 %v3873, 0.0
      %v3906 = vmax.f32 %v3874, 0.0
      %v3907 = vmax.f32 %v3875, 0.0
      %v3908 = vmax.f32 %v3876, 0.0
      %v3909 = vmax.f32 %v3877, 0.0
      %3910 = vst.msk [vmem:[%s278] sm:$0xff] %vm326, %v3878
      %3911 = vst.msk [vmem:[%s278 + $0x8] sm:$0xff] %vm326, %v3879
      %3912 = vst.msk [vmem:[%s278 + $0x10] sm:$0xff] %vm326, %v3880
      %3913 = vst.msk [vmem:[%s278 + $0x18] sm:$0xff] %vm326, %v3881
      %3914 = vst.msk [vmem:[%s278 + $0x20] sm:$0xff] %vm326, %v3882
      %3915 = vst.msk [vmem:[%s278 + $0x28] sm:$0xff] %vm326, %v3883
      %3916 = vst.msk [vmem:[%s278 + $0x30] sm:$0xff] %vm326, %v3884
      %3917 = vst.msk [vmem:[%s278 + $0x38] sm:$0xff] %vm326, %v3885
      %3918 = vst.msk [vmem:[%s278 + $0x40] sm:$0xff] %vm326, %v3886
      %3919 = vst.msk [vmem:[%s278 + $0x48] sm:$0xff] %vm326, %v3887
      %3920 = vst.msk [vmem:[%s278 + $0x50] sm:$0xff] %vm326, %v3888
      %3921 = vst.msk [vmem:[%s278 + $0x58] sm:$0xff] %vm326, %v3889
      %3922 = vst.msk [vmem:[%s278 + $0x60] sm:$0xff] %vm326, %v3890
      %3923 = vst.msk [vmem:[%s278 + $0x68] sm:$0xff] %vm326, %v3891
      %3924 = vst.msk [vmem:[%s278 + $0x70] sm:$0xff] %vm326, %v3892
      %3925 = vst.msk [vmem:[%s278 + $0x78] sm:$0xff] %vm326, %v3893
      %3926 = vst.msk [vmem:[%s278 + $0x80] sm:$0xff] %vm326, %v3894
      %3927 = vst.msk [vmem:[%s278 + $0x88] sm:$0xff] %vm326, %v3895
      %3928 = vst.msk [vmem:[%s278 + $0x90] sm:$0xff] %vm326, %v3896
      %3929 = vst.msk [vmem:[%s278 + $0x98] sm:$0xff] %vm326, %v3897
      %3930 = vst.msk [vmem:[%s278 + $0xa0] sm:$0xff] %vm326, %v3898
      %3931 = vst.msk [vmem:[%s278 + $0xa8] sm:$0xff] %vm326, %v3899
      %3932 = vst.msk [vmem:[%s278 + $0xb0] sm:$0xff] %vm326, %v3900
      %3933 = vst.msk [vmem:[%s278 + $0xb8] sm:$0xff] %vm326, %v3901
      %3934 = vst.msk [vmem:[%s278 + $0xc0] sm:$0xff] %vm326, %v3902
      %3935 = vst.msk [vmem:[%s278 + $0xc8] sm:$0xff] %vm326, %v3903
      %3936 = vst.msk [vmem:[%s278 + $0xd0] sm:$0xff] %vm326, %v3904
      %3937 = vst.msk [vmem:[%s278 + $0xd8] sm:$0xff] %vm326, %v3905
      %3938 = vst.msk [vmem:[%s278 + $0xe0] sm:$0xff] %vm326, %v3906
      %3939 = vst.msk [vmem:[%s278 + $0xe8] sm:$0xff] %vm326, %v3907
      %3940 = vst.msk [vmem:[%s278 + $0xf0] sm:$0xff] %vm326, %v3908
      %3941 = vst.msk [vmem:[%s278 + $0xf8] sm:$0xff] %vm326, %v3909
      %p3942 = scmp.lt.s32.totalorder %s18, 1
      %s3943 = scalar_select %p3942, %s18, 1
      %s3944 = smul.addr %s3943, 32
      %s3945 = smul.addr %s3944, 8
      %s3946 = scalar_lea.vmem %s7, %s3945
      // Predicated region
      $region49: #{double_conv.1} parent=47 // pred_check
        %p3947 = pneg %p188
      $region50: #{double_conv.1} parent=47 // pred_check_branch
        %3949 = sbr.rel (%p3947) target = $region52
      $region51: #{double_conv.1} parent=47 // pred_region
        _
      $region52: #{double_conv.1} parent=47 // pred_fallthru
        _
    $region48: #{double_conv.1} parent=5 // pred_fallthru
      _
    %p3950 = scmp.le.s32.totalorder 2, %s13
    // Predicated region
    $region53: #{double_conv.1} parent=5 // pred_check
      %p3951 = pneg %p3950
    $region54: #{double_conv.1} parent=5 // pred_check_branch
      %3953 = sbr.rel (%p3951) target = $region56
    $region55: #{double_conv.1} parent=5 // pred_region
      %s3954 = ssub.s32 %s13, 2
      // Predicated region
      $region57: #{double_conv.1} parent=55 // pred_check
        %p3955 = pneg %p194
      $region58: #{double_conv.1} parent=55 // pred_check_branch
        %3957 = sbr.rel (%p3955) target = $region60
      $region59: #{double_conv.1} parent=55 // pred_region
        %p3958 = scmp.lt.s32.totalorder %s19, 1
        %s3959 = scalar_select %p3958, %s19, 1
        %s3960 = smul.addr %s3959, 32
        %s3961 = smul.addr %s3960, 8
        %s3962 = scalar_lea.vmem %s7, %s3961
      $region60: #{double_conv.1} parent=55 // pred_fallthru
        _
    $region56: #{double_conv.1} parent=5 // pred_fallthru
      _
  $region6: #{double_conv.1} parent=0 // loop_footer
    %s17 = sadd.s32 1, %s13
  $region7: #{double_conv.1} parent=0 // loop_footer_branch
    %12 = sbr.rel target = $region3
  $region8: #{double_conv.1} parent=0 // loop_exit
    _

</llo_original>
